<compile_context>
chip_gen: v7x
topology: tpu7x:2x2x1
jax: 0.10.0
libtpu: 0.0.40
codegen_flags: <defaults>
</compile_context>

<pallas_src>
import functools

import jax
import jax.numpy as jnp
from jax import lax
from jax.experimental import pallas as pl
from jax.experimental.pallas import tpu as pltpu


# ----------------------------------------------------------------------------
# Generation-dependent VMEM budget (review: do not cap v5e/v6e at the v7x size)
# ----------------------------------------------------------------------------
@functools.lru_cache(maxsize=None)
def _vmem_limit_bytes():
    cap = None
    try:
        info = pltpu.get_tpu_info()
        cap = getattr(info, "vmem_capacity_bytes", None)
    except Exception:
        cap = None
    if cap is None:
        try:
            kind = jax.devices()[0].device_kind.lower()
        except Exception:
            kind = ""
        cap = (64 if "v7" in kind else 128) * 1024 * 1024
    # leave ~25% headroom for Mosaic internal scratch / double-buffered tokens
    return int(min(100 * 1024 * 1024, cap * 3 // 4))


def _round_up(x, m):
    return pl.cdiv(x, m) * m


# ----------------------------------------------------------------------------
# In-kernel helpers
# ----------------------------------------------------------------------------
def _ln(x, g, b, eps=1e-6):
    """Row-wise LayerNorm in f32.  x:(T,D), g/b:(1,D)."""
    mean = jnp.mean(x, axis=-1, keepdims=True)
    xc = x - mean
    var = jnp.mean(xc * xc, axis=-1, keepdims=True)
    return (xc * lax.rsqrt(var + eps)) * g + b


def _attention(x_ln, qkvw_ref, qkvb_ref, projw_ref, projb_ref, heads):
    """Multi-head self-attention on one batch element.  x_ln: (T, dim) f32."""
    T, dim = x_ln.shape
    dh = dim // heads
    scale = float(dh) ** -0.5

    qkv = jnp.dot(x_ln.astype(jnp.bfloat16), qkvw_ref[...],
                  preferred_element_type=jnp.float32) + qkvb_ref[...]  # (T, 3*dim)

    # Query chunking bounds the per-head score matrix to (tq, T) f32 instead of
    # (T, T); chunks are static Python slices (uneven tail chunk allowed).
    tq = T if T <= 1024 else 512
    chunk_starts = list(range(0, T, tq))

    o_chunks = []
    for c0 in chunk_starts:
        c1 = min(c0 + tq, T)
        head_outs = []
        for hh in range(heads):
            q = (qkv[c0:c1, hh * dh:(hh + 1) * dh] * scale).astype(jnp.bfloat16)
            k = qkv[:, dim + hh * dh:dim + (hh + 1) * dh].astype(jnp.bfloat16)
            v = qkv[:, 2 * dim + hh * dh:2 * dim + (hh + 1) * dh].astype(jnp.bfloat16)
            # q @ k^T without materializing a transpose
            s = lax.dot_general(q, k, (((1,), (1,)), ((), ())),
                                preferred_element_type=jnp.float32)    # (tq, T)
            m = jnp.max(s, axis=-1, keepdims=True)
            p = jnp.exp(s - m)                                          # unnormalized
            row_sum = jnp.sum(p, axis=-1, keepdims=True)
            o_h = jnp.dot(p.astype(jnp.bfloat16), v,
                          preferred_element_type=jnp.float32)           # (tq, dh)
            # softmax 1/sum applied on the small (tq, dh) output (review item)
            o_h = o_h * pl.reciprocal(row_sum, approx=True)
            head_outs.append(o_h.astype(jnp.bfloat16))
        o_chunks.append(jnp.concatenate(head_outs, axis=-1))            # (tq, dim)

    o = o_chunks[0] if len(o_chunks) == 1 else jnp.concatenate(o_chunks, axis=0)
    # single full-depth output projection (review item: un-folded per-head proj)
    attn = jnp.dot(o, projw_ref[...],
                   preferred_element_type=jnp.float32) + projb_ref[...]
    return attn


def _block_body(x, n1g, n1b, qkvw, qkvb, projw, projb, n2g, n2b,
                fc1w, fc1b, fc2w, fc2b, heads):
    """Pre-norm ViT block (DINO style) on one batch element.  x: (T, dim) f32."""
    h = _ln(x, n1g[...], n1b[...])
    x = x + _attention(h, qkvw, qkvb, projw, projb, heads)

    h2 = _ln(x, n2g[...], n2b[...])
    h2 = jnp.dot(h2.astype(jnp.bfloat16), fc1w[...],
                 preferred_element_type=jnp.float32) + fc1b[...]
    h2 = jax.nn.gelu(h2)          # tanh approx (see TODO at top of file)
    h2 = jnp.dot(h2.astype(jnp.bfloat16), fc2w[...],
                 preferred_element_type=jnp.float32) + fc2b[...]
    return x + h2


# ----------------------------------------------------------------------------
# Fused transformer-block kernel (one grid step = one batch element)
# ----------------------------------------------------------------------------
def _block_kernel(x_ref, n1g, n1b, qkvw, qkvb, projw, projb, n2g, n2b,
                  fc1w, fc1b, fc2w, fc2b, o_ref, *, heads):
    x = x_ref[0].astype(jnp.float32)                      # (T, dim)
    y = _block_body(x, n1g, n1b, qkvw, qkvb, projw, projb, n2g, n2b,
                    fc1w, fc1b, fc2w, fc2b, heads)
    o_ref[0] = y.astype(o_ref.dtype)                      # bf16 to HBM


def _block_cost_estimate(B, T, dim, hidden, heads, weights, tok_bytes):
    flops = B * (2 * T * dim * (4 * dim + 2 * hidden) + 4 * T * T * dim)
    transcendentals = B * (heads * T * T + T * hidden)
    w_bytes = sum(int(w.size) * w.dtype.itemsize for w in weights)
    bytes_accessed = B * T * dim * tok_bytes + w_bytes
    return pl.CostEstimate(flops=int(flops),
                           transcendentals=int(transcendentals),
                           bytes_accessed=int(bytes_accessed))


def block_forward(x, p, heads):
    """Pre-norm ViT block, fully fused in one pallas_call. Output is bf16."""
    B, T, dim = x.shape
    hidden = p["fc1_w"].shape[1]
    tok_spec = pl.BlockSpec((1, T, dim), lambda b: (b, 0, 0))

    def wspec(arr):
        # constant index_map -> weight stays VMEM-resident across the grid
        return pl.BlockSpec(arr.shape, lambda b: (0, 0))

    weights = (p["norm1_g"], p["norm1_b"], p["qkv_w"], p["qkv_b"],
               p["proj_w"], p["proj_b"], p["norm2_g"], p["norm2_b"],
               p["fc1_w"], p["fc1_b"], p["fc2_w"], p["fc2_b"])

    return pl.pallas_call(
        functools.partial(_block_kernel, heads=heads),
        out_shape=jax.ShapeDtypeStruct((B, T, dim), jnp.bfloat16),
        grid=(B,),
        in_specs=[tok_spec] + [wspec(w) for w in weights],
        out_specs=tok_spec,
        cost_estimate=_block_cost_estimate(
            B, T, dim, hidden, heads, weights,
            tok_bytes=x.dtype.itemsize + 2),
        compiler_params=pltpu.CompilerParams(
            dimension_semantics=("parallel",),
            vmem_limit_bytes=_vmem_limit_bytes()),
    )(x, *weights)


# ----------------------------------------------------------------------------
# Fused decoder + tail kernel:
#   decoder block on midfeat -> final LN (image_feat)
#   final LN on last backbone output (crit_feat)
#   projection head + L2 normalize (z)
# dec_out never touches HBM.
# ----------------------------------------------------------------------------
def _decoder_tail_kernel(mid_ref, last_ref,
                         n1g, n1b, qkvw, qkvb, projw, projb, n2g, n2b,
                         fc1w, fc1b, fc2w, fc2b,
                         ng, nb, phw, phb,
                         crit_ref, feat_ref, z_ref, *, heads):
    mid = mid_ref[0].astype(jnp.float32)
    dec = _block_body(mid, n1g, n1b, qkvw, qkvb, projw, projb, n2g, n2b,
                      fc1w, fc1b, fc2w, fc2b, heads)
    g = ng[...]
    b = nb[...]
    feat = _ln(dec, g, b)
    crit = _ln(last_ref[0].astype(jnp.float32), g, b)
    feat_ref[0] = feat.astype(feat_ref.dtype)
    crit_ref[0] = crit.astype(crit_ref.dtype)

    z = jnp.dot(feat.astype(jnp.bfloat16), phw[...],
                preferred_element_type=jnp.float32) + phb[...]
    n2 = jnp.sum(z * z, axis=-1, keepdims=True)
    z_ref[0] = (z * lax.rsqrt(jnp.maximum(n2, 1e-24))).astype(z_ref.dtype)


def decoder_tail_forward(midfeat, x_last, dec_p, norm_g, norm_b, ph_w, ph_b,
                         heads):
    B, T, dim = midfeat.shape
    tok_in = pl.BlockSpec((1, T, dim), lambda b: (b, 0, 0))
    tok_out = pl.BlockSpec((1, T, dim), lambda b: (b, 0, 0))

    def wspec(arr):
        return pl.BlockSpec(arr.shape, lambda b: (0, 0))

    weights = (dec_p["norm1_g"], dec_p["norm1_b"], dec_p["qkv_w"],
               dec_p["qkv_b"], dec_p["proj_w"], dec_p["proj_b"],
               dec_p["norm2_g"], dec_p["norm2_b"], dec_p["fc1_w"],
               dec_p["fc1_b"], dec_p["fc2_w"], dec_p["fc2_b"],
               norm_g, norm_b, ph_w, ph_b)

    return pl.pallas_call(
        functools.partial(_decoder_tail_kernel, heads=heads),
        out_shape=(jax.ShapeDtypeStruct((B, T, dim), jnp.float32),   # crit
                   jax.ShapeDtypeStruct((B, T, dim), jnp.float32),   # image_feat
                   jax.ShapeDtypeStruct((B, T, dim), jnp.float32)),  # z (pre-slice)
        grid=(B,),
        in_specs=[tok_in, tok_in] + [wspec(w) for w in weights],
        out_specs=(tok_out, tok_out, tok_out),
        compiler_params=pltpu.CompilerParams(
            dimension_semantics=("parallel",),
            vmem_limit_bytes=_vmem_limit_bytes()),
    )(midfeat, x_last, *weights)


# ----------------------------------------------------------------------------
# Tiled linear (patch embedding = Conv2d with kernel == stride == patch)
# ----------------------------------------------------------------------------
def _linear_kernel(x_ref, w_ref, b_ref, o_ref):
    y = jnp.dot(x_ref[...].astype(jnp.bfloat16), w_ref[...],
                preferred_element_type=jnp.float32) + b_ref[...]
    o_ref[...] = y.astype(o_ref.dtype)


def linear(x, w_bf16, b2d, tm=256):
    """y = x @ w + b.  Rows padded to a tile multiple and tiled (review item:
    never collapse to a single huge block that blows VMEM)."""
    M, K = x.shape
    N = w_bf16.shape[1]
    tm = tm if M >= tm else int(_round_up(M, 8))
    M_pad = int(_round_up(M, tm))
    if M_pad != M:
        x = jnp.pad(x, ((0, M_pad - M), (0, 0)))
    out = pl.pallas_call(
        _linear_kernel,
        out_shape=jax.ShapeDtypeStruct((M_pad, N), jnp.float32),
        grid=(M_pad // tm,),
        in_specs=[pl.BlockSpec((tm, K), lambda i: (i, 0)),
                  pl.BlockSpec((K, N), lambda i: (0, 0)),
                  pl.BlockSpec((1, N), lambda i: (0, 0))],
        out_specs=pl.BlockSpec((tm, N), lambda i: (i, 0)),
        compiler_params=pltpu.CompilerParams(
            dimension_semantics=("parallel",),
            vmem_limit_bytes=_vmem_limit_bytes()),
    )(x, w_bf16, b2d)
    return out[:M]


def patch_embed(img, w_bf16, b2d, patch_size):
    B, C, H, W = img.shape
    fh, fw = H // patch_size, W // patch_size
    x = img.reshape(B, C, fh, patch_size, fw, patch_size)
    x = jnp.transpose(x, (0, 2, 4, 1, 3, 5))             # (B, fh, fw, C, p, p)
    x = x.reshape(B * fh * fw, C * patch_size * patch_size)
    x = linear(x, w_bf16, b2d)                           # (B*N, dim)
    return x.reshape(B, fh * fw, -1)


# ----------------------------------------------------------------------------
# Full forward
# ----------------------------------------------------------------------------
def dino_featurizer_forward(params, img, *, patch_size, dim, heads):
    B, C, H, W = img.shape
    assert H % patch_size == 0 and W % patch_size == 0
    assert dim % heads == 0
    fh, fw = H // patch_size, W // patch_size

    # ---- backbone (torch: under no_grad) ------------------------------------
    x = patch_embed(img, params["patch_w"], params["patch_b"], patch_size)
    cls = jnp.broadcast_to(params["cls_token"], (B, 1, dim))
    x = jnp.concatenate([cls, x], axis=1) + params["pos_embed"]   # (B, 1+N, dim)
    # residual stream lives in HBM as bf16 between blocks (review item);
    # each kernel upcasts to f32 internally.
    x = x.astype(jnp.bfloat16)

    feats = []
    for bp in params["blocks"]:
        x = block_forward(x, bp, heads)
        feats.append(x)

    midfeat = feats[-2]                                  # mid_n = 2
    # ---- trainable decoder + final norms + projection head (single kernel) --
    crit_feat, image_feat, z_full = decoder_tail_forward(
        midfeat, feats[-1], params["decoder"], params["norm_g"],
        params["norm_b"], params["ph_w"], params["ph_b"], heads)

    # ---- drop CLS token, reshape to NCHW feature maps -----------------------
    image_feat_sp = jnp.transpose(
        image_feat[:, 1:, :].reshape(B, fh, fw, dim), (0, 3, 1, 2))
    crit_sp = jnp.transpose(
        crit_feat[:, 1:, :].reshape(B, fh, fw, dim), (0, 3, 1, 2))
    code = image_feat_sp
    z = z_full[:, 1:, :].reshape(B * fh * fw, dim)

    # Dropout2d(p=0.1): identity (eval mode); see TODO at top of file.
    return image_feat_sp, code, z, crit_sp


# ----------------------------------------------------------------------------
# Deterministic synthetic parameter init (weights bf16, biases/LN f32)
# ----------------------------------------------------------------------------
def _wmat(key, fan_in, fan_out):
    return (0.02 * jax.random.normal(key, (fan_in, fan_out),
                                     jnp.float32)).astype(jnp.bfloat16)


def init_block(key, dim, hidden):
    ks = jax.random.split(key, 4)
    return {
        "norm1_g": jnp.ones((1, dim), jnp.float32),
        "norm1_b": jnp.zeros((1, dim), jnp.float32),
        "qkv_w": _wmat(ks[0], dim, 3 * dim),
        "qkv_b": jnp.zeros((1, 3 * dim), jnp.float32),
        "proj_w": _wmat(ks[1], dim, dim),
        "proj_b": jnp.zeros((1, dim), jnp.float32),
        "norm2_g": jnp.ones((1, dim), jnp.float32),
        "norm2_b": jnp.zeros((1, dim), jnp.float32),
        "fc1_w": _wmat(ks[2], dim, hidden),
        "fc1_b": jnp.zeros((1, hidden), jnp.float32),
        "fc2_w": _wmat(ks[3], hidden, dim),
        "fc2_b": jnp.zeros((1, dim), jnp.float32),
    }


def init_params(key, *, dim, depth, mlp_ratio, in_chans, patch_size, n_patches):
    hidden = dim * mlp_ratio
    ks = jax.random.split(key, 4 + depth)
    blocks = [init_block(ks[4 + i], dim, hidden) for i in range(depth)]
    return {
        "patch_w": _wmat(ks[0], in_chans * patch_size * patch_size, dim),
        "patch_b": jnp.zeros((1, dim), jnp.float32),
        "cls_token": 0.02 * jax.random.normal(ks[1], (1, 1, dim), jnp.float32),
        "pos_embed": 0.02 * jax.random.normal(ks[2], (1, 1 + n_patches, dim),
                                              jnp.float32),
        "blocks": blocks,
        "decoder": dict(blocks[-1]),   # deepcopy at init -> identical values
        "norm_g": jnp.ones((1, dim), jnp.float32),
        "norm_b": jnp.zeros((1, dim), jnp.float32),
        "ph_w": _wmat(ks[3], dim, dim),
        "ph_b": jnp.zeros((1, dim), jnp.float32),
    }


# ----------------------------------------------------------------------------
if __name__ == "__main__":
    key = jax.random.PRNGKey(0)
    k_img, k_par = jax.random.split(key)

    # small, module-consistent demo shapes (production tuning should use
    # dim >= 384 / T >= 785 -- see review; kept small per harness contract)
    B, C, H, W = 2, 3, 16, 16
    patch_size = 8
    dim = 32          # self.dim == cfg['dim'] == ViT embed dim (synthetic)
    heads = 2
    depth = 2         # >= mid_n
    mlp_ratio = 4
    n_patches = (H // patch_size) * (W // patch_size)

    img = jax.random.normal(k_img, (B, C, H, W), jnp.float32)
    params = init_params(k_par, dim=dim, depth=depth, mlp_ratio=mlp_ratio,
                         in_chans=C, patch_size=patch_size, n_patches=n_patches)

    fwd = jax.jit(functools.partial(dino_featurizer_forward,
                                    patch_size=patch_size, dim=dim, heads=heads))
    image_feat, code, z, crit_feat = fwd(params, img)
    jax.block_until_ready((image_feat, code, z, crit_feat))

    fh, fw = H // patch_size, W // patch_size
    assert image_feat.shape == (B, dim, fh, fw)
    assert code.shape == (B, dim, fh, fw)
    assert z.shape == (B * fh * fw, dim)
    assert crit_feat.shape == (B, dim, fh, fw)
    assert bool(jnp.all(jnp.isfinite(image_feat)))
    assert bool(jnp.all(jnp.isfinite(z)))
    assert bool(jnp.all(jnp.isfinite(crit_feat)))

    print("KERNEL_OK")
</pallas_src>

<mosaic_0001>
module attributes {stable_mosaic.version = 11 : i64} {
  func.func @_linear_kernel(%arg0: i32, %arg1: memref<8x192xf32, #tpu.memory_space<vmem>>, %arg2: memref<192x32xbf16, #tpu.memory_space<vmem>>, %arg3: memref<1x32xf32, #tpu.memory_space<vmem>>, %arg4: memref<8x32xf32, #tpu.memory_space<vmem>>) attributes {dimension_semantics = [#tpu.dimension_semantics<parallel>], iteration_bounds = array<i64: 1>, scalar_prefetch = 0 : i64, scratch_operands = 0 : i64, tpu.core_type = #tpu.core_type<tc>, window_params = [{transform_indices = @transform_0, window_bounds = array<i64: 8, 192>}, {pipeline_mode = #tpu.pipeline_mode<synchronous>, transform_indices = @transform_1, window_bounds = array<i64: 192, 32>}, {pipeline_mode = #tpu.pipeline_mode<synchronous>, transform_indices = @transform_2, window_bounds = array<i64: 1, 32>}, {transform_indices = @transform_3, window_bounds = array<i64: 8, 32>}]} {
    %c0 = arith.constant 0 : index
    %c0_0 = arith.constant 0 : index
    %0 = vector.load %arg1[%c0, %c0_0] : memref<8x192xf32, #tpu.memory_space<vmem>>, vector<8x192xf32>
    %1 = arith.truncf %0 : vector<8x192xf32> to vector<8x192xbf16>
    %c0_1 = arith.constant 0 : index
    %c0_2 = arith.constant 0 : index
    %2 = vector.load %arg2[%c0_1, %c0_2] : memref<192x32xbf16, #tpu.memory_space<vmem>>, vector<192x32xbf16>
    %cst = arith.constant dense<0.000000e+00> : vector<8x32xf32>
    %3 = tpu.matmul %1, %2, %cst {dimension_numbers = #tpu.dot_dimension_numbers<[1], [0], [0], [1], [0, 0, 1, 1], [], []>} : vector<8x192xbf16>, vector<192x32xbf16>, vector<8x32xf32> -> vector<8x32xf32>
    %c0_3 = arith.constant 0 : index
    %c0_4 = arith.constant 0 : index
    %4 = vector.load %arg3[%c0_3, %c0_4] : memref<1x32xf32, #tpu.memory_space<vmem>>, vector<1x32xf32>
    %5 = vector.broadcast %4 : vector<1x32xf32> to vector<8x32xf32>
    %6 = arith.addf %3, %5 : vector<8x32xf32>
    %c0_5 = arith.constant 0 : index
    %c0_6 = arith.constant 0 : index
    %7 = vector.load %arg4[%c0_5, %c0_6] : memref<8x32xf32, #tpu.memory_space<vmem>>, vector<8x32xf32>
    tpu.vector_store %arg4[%c0_5, %c0_6], %6 {strides = array<i32>} : memref<8x32xf32, #tpu.memory_space<vmem>>, vector<8x32xf32>,
    return
  }
  func.func @transform_0(%arg0: i32) -> (i32, i32) {
    %c0_i32 = arith.constant 0 : i32
    %c0_i32_0 = arith.constant 0 : i32
    return %arg0, %c0_i32 : i32, i32
  }
  func.func @transform_1(%arg0: i32) -> (i32, i32) {
    %c0_i32 = arith.constant 0 : i32
    %c0_i32_0 = arith.constant 0 : i32
    %c0_i32_1 = arith.constant 0 : i32
    return %c0_i32, %c0_i32_0 : i32, i32
  }
  func.func @transform_2(%arg0: i32) -> (i32, i32) {
    %c0_i32 = arith.constant 0 : i32
    %c0_i32_0 = arith.constant 0 : i32
    %c0_i32_1 = arith.constant 0 : i32
    return %c0_i32, %c0_i32_0 : i32, i32
  }
  func.func @transform_3(%arg0: i32) -> (i32, i32) {
    %c0_i32 = arith.constant 0 : i32
    %c0_i32_0 = arith.constant 0 : i32
    return %arg0, %c0_i32 : i32, i32
  }
}

module attributes {stable_mosaic.version = 11 : i64} {
  func.func @_block_kernel(%arg0: i32, %arg1: memref<1x5x32xbf16, #tpu.memory_space<vmem>>, %arg2: memref<1x32xf32, #tpu.memory_space<vmem>>, %arg3: memref<1x32xf32, #tpu.memory_space<vmem>>, %arg4: memref<32x96xbf16, #tpu.memory_space<vmem>>, %arg5: memref<1x96xf32, #tpu.memory_space<vmem>>, %arg6: memref<32x32xbf16, #tpu.memory_space<vmem>>, %arg7: memref<1x32xf32, #tpu.memory_space<vmem>>, %arg8: memref<1x32xf32, #tpu.memory_space<vmem>>, %arg9: memref<1x32xf32, #tpu.memory_space<vmem>>, %arg10: memref<32x128xbf16, #tpu.memory_space<vmem>>, %arg11: memref<1x128xf32, #tpu.memory_space<vmem>>, %arg12: memref<128x32xbf16, #tpu.memory_space<vmem>>, %arg13: memref<1x32xf32, #tpu.memory_space<vmem>>, %arg14: memref<1x5x32xbf16, #tpu.memory_space<vmem>>) attributes {dimension_semantics = [#tpu.dimension_semantics<parallel>], iteration_bounds = array<i64: 2>, scalar_prefetch = 0 : i64, scratch_operands = 0 : i64, tpu.core_type = #tpu.core_type<tc>, window_params = [{transform_indices = @transform_0, window_bounds = array<i64: 1, 5, 32>}, {pipeline_mode = #tpu.pipeline_mode<synchronous>, transform_indices = @transform_1, window_bounds = array<i64: 1, 32>}, {pipeline_mode = #tpu.pipeline_mode<synchronous>, transform_indices = @transform_2, window_bounds = array<i64: 1, 32>}, {pipeline_mode = #tpu.pipeline_mode<synchronous>, transform_indices = @transform_3, window_bounds = array<i64: 32, 96>}, {pipeline_mode = #tpu.pipeline_mode<synchronous>, transform_indices = @transform_4, window_bounds = array<i64: 1, 96>}, {pipeline_mode = #tpu.pipeline_mode<synchronous>, transform_indices = @transform_5, window_bounds = array<i64: 32, 32>}, {pipeline_mode = #tpu.pipeline_mode<synchronous>, transform_indices = @transform_6, window_bounds = array<i64: 1, 32>}, {pipeline_mode = #tpu.pipeline_mode<synchronous>, transform_indices = @transform_7, window_bounds = array<i64: 1, 32>}, {pipeline_mode = #tpu.pipeline_mode<synchronous>, transform_indices = @transform_8, window_bounds = array<i64: 1, 32>}, {pipeline_mode = #tpu.pipeline_mode<synchronous>, transform_indices = @transform_9, window_bounds = array<i64: 32, 128>}, {pipeline_mode = #tpu.pipeline_mode<synchronous>, transform_indices = @transform_10, window_bounds = array<i64: 1, 128>}, {pipeline_mode = #tpu.pipeline_mode<synchronous>, transform_indices = @transform_11, window_bounds = array<i64: 128, 32>}, {pipeline_mode = #tpu.pipeline_mode<synchronous>, transform_indices = @transform_12, window_bounds = array<i64: 1, 32>}, {transform_indices = @transform_13, window_bounds = array<i64: 1, 5, 32>}]} {
    %c0 = arith.constant 0 : index
    %c0_0 = arith.constant 0 : index
    %c0_1 = arith.constant 0 : index
    %0 = vector.load %arg1[%c0, %c0_0, %c0_1] : memref<1x5x32xbf16, #tpu.memory_space<vmem>>, vector<1x5x32xbf16>
    %1 = vector.shape_cast %0 : vector<1x5x32xbf16> to vector<5x32xbf16>
    %2 = arith.extf %1 : vector<5x32xbf16> to vector<5x32xf32>
    %c0_2 = arith.constant 0 : index
    %c0_3 = arith.constant 0 : index
    %3 = vector.load %arg2[%c0_2, %c0_3] : memref<1x32xf32, #tpu.memory_space<vmem>>, vector<1x32xf32>
    %c0_4 = arith.constant 0 : index
    %c0_5 = arith.constant 0 : index
    %4 = vector.load %arg3[%c0_4, %c0_5] : memref<1x32xf32, #tpu.memory_space<vmem>>, vector<1x32xf32>
    %cst = arith.constant dense<0.000000e+00> : vector<5xf32>
    %5 = vector.multi_reduction <add>, %2, %cst [1] : vector<5x32xf32> to vector<5xf32>
    %6 = vector.shape_cast %5 : vector<5xf32> to vector<5x1xf32>
    %cst_6 = arith.constant 3.200000e+01 : f32
    %7 = vector.broadcast %cst_6 : f32 to vector<5x1xf32>
    %8 = arith.divf %6, %7 : vector<5x1xf32>
    %9 = vector.broadcast %8 : vector<5x1xf32> to vector<5x32xf32>
    %10 = arith.subf %2, %9 : vector<5x32xf32>
    %11 = arith.mulf %10, %10 : vector<5x32xf32>
    %cst_7 = arith.constant dense<0.000000e+00> : vector<5xf32>
    %12 = vector.multi_reduction <add>, %11, %cst_7 [1] : vector<5x32xf32> to vector<5xf32>
    %13 = vector.shape_cast %12 : vector<5xf32> to vector<5x1xf32>
    %cst_8 = arith.constant 3.200000e+01 : f32
    %14 = vector.broadcast %cst_8 : f32 to vector<5x1xf32>
    %15 = arith.divf %13, %14 : vector<5x1xf32>
    %cst_9 = arith.constant 9.99999997E-7 : f32
    %16 = vector.broadcast %cst_9 : f32 to vector<5x1xf32>
    %17 = arith.addf %15, %16 : vector<5x1xf32>
    %18 = math.rsqrt %17 : vector<5x1xf32>
    %19 = vector.broadcast %18 : vector<5x1xf32> to vector<5x32xf32>
    %20 = arith.mulf %10, %19 : vector<5x32xf32>
    %21 = vector.broadcast %3 : vector<1x32xf32> to vector<5x32xf32>
    %22 = arith.mulf %20, %21 : vector<5x32xf32>
    %23 = vector.broadcast %4 : vector<1x32xf32> to vector<5x32xf32>
    %24 = arith.addf %22, %23 : vector<5x32xf32>
    %25 = arith.truncf %24 : vector<5x32xf32> to vector<5x32xbf16>
    %c0_10 = arith.constant 0 : index
    %c0_11 = arith.constant 0 : index
    %26 = vector.load %arg4[%c0_10, %c0_11] : memref<32x96xbf16, #tpu.memory_space<vmem>>, vector<32x96xbf16>
    %cst_12 = arith.constant dense<0.000000e+00> : vector<5x96xf32>
    %27 = tpu.matmul %25, %26, %cst_12 {dimension_numbers = #tpu.dot_dimension_numbers<[1], [0], [0], [1], [0, 0, 1, 1], [], []>} : vector<5x32xbf16>, vector<32x96xbf16>, vector<5x96xf32> -> vector<5x96xf32>
    %c0_13 = arith.constant 0 : index
    %c0_14 = arith.constant 0 : index
    %28 = vector.load %arg5[%c0_13, %c0_14] : memref<1x96xf32, #tpu.memory_space<vmem>>, vector<1x96xf32>
    %29 = vector.broadcast %28 : vector<1x96xf32> to vector<5x96xf32>
    %30 = arith.addf %27, %29 : vector<5x96xf32>
    %31 = vector.extract_strided_slice %30 {offsets = [0, 0], sizes = [5, 16], strides = [1, 1]} : vector<5x96xf32> to vector<5x16xf32>
    %cst_15 = arith.constant 2.500000e-01 : f32
    %32 = vector.broadcast %cst_15 : f32 to vector<5x16xf32>
    %33 = arith.mulf %31, %32 : vector<5x16xf32>
    %34 = arith.truncf %33 : vector<5x16xf32> to vector<5x16xbf16>
    %35 = vector.extract_strided_slice %30 {offsets = [0, 32], sizes = [5, 16], strides = [1, 1]} : vector<5x96xf32> to vector<5x16xf32>
    %36 = arith.truncf %35 : vector<5x16xf32> to vector<5x16xbf16>
    %37 = vector.extract_strided_slice %30 {offsets = [0, 64], sizes = [5, 16], strides = [1, 1]} : vector<5x96xf32> to vector<5x16xf32>
    %38 = arith.truncf %37 : vector<5x16xf32> to vector<5x16xbf16>
    %cst_16 = arith.constant dense<0.000000e+00> : vector<5x5xf32>
    %39 = tpu.matmul %34, %36, %cst_16 {dimension_numbers = #tpu.dot_dimension_numbers<[1], [1], [0], [0], [0, 0, 1, 0], [], []>} : vector<5x16xbf16>, vector<5x16xbf16>, vector<5x5xf32> -> vector<5x5xf32>
    %cst_17 = arith.constant dense<0xFF800000> : vector<5xf32>
    %40 = vector.multi_reduction <maximumf>, %39, %cst_17 [1] : vector<5x5xf32> to vector<5xf32>
    %41 = vector.shape_cast %40 : vector<5xf32> to vector<5x1xf32>
    %42 = vector.broadcast %41 : vector<5x1xf32> to vector<5x5xf32>
    %43 = arith.subf %39, %42 : vector<5x5xf32>
    %44 = math.exp %43 : vector<5x5xf32>
    %cst_18 = arith.constant dense<0.000000e+00> : vector<5xf32>
    %45 = vector.multi_reduction <add>, %44, %cst_18 [1] : vector<5x5xf32> to vector<5xf32>
    %46 = vector.shape_cast %45 : vector<5xf32> to vector<5x1xf32>
    %47 = arith.truncf %44 : vector<5x5xf32> to vector<5x5xbf16>
    %cst_19 = arith.constant dense<0.000000e+00> : vector<5x16xf32>
    %48 = tpu.matmul %47, %38, %cst_19 {dimension_numbers = #tpu.dot_dimension_numbers<[1], [0], [0], [1], [0, 0, 1, 1], [], []>} : vector<5x5xbf16>, vector<5x16xbf16>, vector<5x16xf32> -> vector<5x16xf32>
    %49 = tpu.reciprocal %46 {approx = true} : vector<5x1xf32> -> vector<5x1xf32>
    %50 = vector.broadcast %49 : vector<5x1xf32> to vector<5x16xf32>
    %51 = arith.mulf %48, %50 : vector<5x16xf32>
    %52 = arith.truncf %51 : vector<5x16xf32> to vector<5x16xbf16>
    %53 = vector.extract_strided_slice %30 {offsets = [0, 16], sizes = [5, 16], strides = [1, 1]} : vector<5x96xf32> to vector<5x16xf32>
    %cst_20 = arith.constant 2.500000e-01 : f32
    %54 = vector.broadcast %cst_20 : f32 to vector<5x16xf32>
    %55 = arith.mulf %53, %54 : vector<5x16xf32>
    %56 = arith.truncf %55 : vector<5x16xf32> to vector<5x16xbf16>
    %57 = vector.extract_strided_slice %30 {offsets = [0, 48], sizes = [5, 16], strides = [1, 1]} : vector<5x96xf32> to vector<5x16xf32>
    %58 = arith.truncf %57 : vector<5x16xf32> to vector<5x16xbf16>
    %59 = vector.extract_strided_slice %30 {offsets = [0, 80], sizes = [5, 16], strides = [1, 1]} : vector<5x96xf32> to vector<5x16xf32>
    %60 = arith.truncf %59 : vector<5x16xf32> to vector<5x16xbf16>
    %cst_21 = arith.constant dense<0.000000e+00> : vector<5x5xf32>
    %61 = tpu.matmul %56, %58, %cst_21 {dimension_numbers = #tpu.dot_dimension_numbers<[1], [1], [0], [0], [0, 0, 1, 0], [], []>} : vector<5x16xbf16>, vector<5x16xbf16>, vector<5x5xf32> -> vector<5x5xf32>
    %cst_22 = arith.constant dense<0xFF800000> : vector<5xf32>
    %62 = vector.multi_reduction <maximumf>, %61, %cst_22 [1] : vector<5x5xf32> to vector<5xf32>
    %63 = vector.shape_cast %62 : vector<5xf32> to vector<5x1xf32>
    %64 = vector.broadcast %63 : vector<5x1xf32> to vector<5x5xf32>
    %65 = arith.subf %61, %64 : vector<5x5xf32>
    %66 = math.exp %65 : vector<5x5xf32>
    %cst_23 = arith.constant dense<0.000000e+00> : vector<5xf32>
    %67 = vector.multi_reduction <add>, %66, %cst_23 [1] : vector<5x5xf32> to vector<5xf32>
    %68 = vector.shape_cast %67 : vector<5xf32> to vector<5x1xf32>
    %69 = arith.truncf %66 : vector<5x5xf32> to vector<5x5xbf16>
    %cst_24 = arith.constant dense<0.000000e+00> : vector<5x16xf32>
    %70 = tpu.matmul %69, %60, %cst_24 {dimension_numbers = #tpu.dot_dimension_numbers<[1], [0], [0], [1], [0, 0, 1, 1], [], []>} : vector<5x5xbf16>, vector<5x16xbf16>, vector<5x16xf32> -> vector<5x16xf32>
    %71 = tpu.reciprocal %68 {approx = true} : vector<5x1xf32> -> vector<5x1xf32>
    %72 = vector.broadcast %71 : vector<5x1xf32> to vector<5x16xf32>
    %73 = arith.mulf %70, %72 : vector<5x16xf32>
    %74 = arith.truncf %73 : vector<5x16xf32> to vector<5x16xbf16>
    %75 = tpu.concatenate %52, %74 in 1 : vector<5x16xbf16>, vector<5x16xbf16> -> vector<5x32xbf16>
    %c0_25 = arith.constant 0 : index
    %c0_26 = arith.constant 0 : index
    %76 = vector.load %arg6[%c0_25, %c0_26] : memref<32x32xbf16, #tpu.memory_space<vmem>>, vector<32x32xbf16>
    %cst_27 = arith.constant dense<0.000000e+00> : vector<5x32xf32>
    %77 = tpu.matmul %75, %76, %cst_27 {dimension_numbers = #tpu.dot_dimension_numbers<[1], [0], [0], [1], [0, 0, 1, 1], [], []>} : vector<5x32xbf16>, vector<32x32xbf16>, vector<5x32xf32> -> vector<5x32xf32>
    %c0_28 = arith.constant 0 : index
    %c0_29 = arith.constant 0 : index
    %78 = vector.load %arg7[%c0_28, %c0_29] : memref<1x32xf32, #tpu.memory_space<vmem>>, vector<1x32xf32>
    %79 = vector.broadcast %78 : vector<1x32xf32> to vector<5x32xf32>
    %80 = arith.addf %77, %79 : vector<5x32xf32>
    %81 = arith.addf %2, %80 : vector<5x32xf32>
    %c0_30 = arith.constant 0 : index
    %c0_31 = arith.constant 0 : index
    %82 = vector.load %arg8[%c0_30, %c0_31] : memref<1x32xf32, #tpu.memory_space<vmem>>, vector<1x32xf32>
    %c0_32 = arith.constant 0 : index
    %c0_33 = arith.constant 0 : index
    %83 = vector.load %arg9[%c0_32, %c0_33] : memref<1x32xf32, #tpu.memory_space<vmem>>, vector<1x32xf32>
    %cst_34 = arith.constant dense<0.000000e+00> : vector<5xf32>
    %84 = vector.multi_reduction <add>, %81, %cst_34 [1] : vector<5x32xf32> to vector<5xf32>
    %85 = vector.shape_cast %84 : vector<5xf32> to vector<5x1xf32>
    %cst_35 = arith.constant 3.200000e+01 : f32
    %86 = vector.broadcast %cst_35 : f32 to vector<5x1xf32>
    %87 = arith.divf %85, %86 : vector<5x1xf32>
    %88 = vector.broadcast %87 : vector<5x1xf32> to vector<5x32xf32>
    %89 = arith.subf %81, %88 : vector<5x32xf32>
    %90 = arith.mulf %89, %89 : vector<5x32xf32>
    %cst_36 = arith.constant dense<0.000000e+00> : vector<5xf32>
    %91 = vector.multi_reduction <add>, %90, %cst_36 [1] : vector<5x32xf32> to vector<5xf32>
    %92 = vector.shape_cast %91 : vector<5xf32> to vector<5x1xf32>
    %cst_37 = arith.constant 3.200000e+01 : f32
    %93 = vector.broadcast %cst_37 : f32 to vector<5x1xf32>
    %94 = arith.divf %92, %93 : vector<5x1xf32>
    %cst_38 = arith.constant 9.99999997E-7 : f32
    %95 = vector.broadcast %cst_38 : f32 to vector<5x1xf32>
    %96 = arith.addf %94, %95 : vector<5x1xf32>
    %97 = math.rsqrt %96 : vector<5x1xf32>
    %98 = vector.broadcast %97 : vector<5x1xf32> to vector<5x32xf32>
    %99 = arith.mulf %89, %98 : vector<5x32xf32>
    %100 = vector.broadcast %82 : vector<1x32xf32> to vector<5x32xf32>
    %101 = arith.mulf %99, %100 : vector<5x32xf32>
    %102 = vector.broadcast %83 : vector<1x32xf32> to vector<5x32xf32>
    %103 = arith.addf %101, %102 : vector<5x32xf32>
    %104 = arith.truncf %103 : vector<5x32xf32> to vector<5x32xbf16>
    %c0_39 = arith.constant 0 : index
    %c0_40 = arith.constant 0 : index
    %105 = vector.load %arg10[%c0_39, %c0_40] : memref<32x128xbf16, #tpu.memory_space<vmem>>, vector<32x128xbf16>
    %cst_41 = arith.constant dense<0.000000e+00> : vector<5x128xf32>
    %106 = tpu.matmul %104, %105, %cst_41 {dimension_numbers = #tpu.dot_dimension_numbers<[1], [0], [0], [1], [0, 0, 1, 1], [], []>} : vector<5x32xbf16>, vector<32x128xbf16>, vector<5x128xf32> -> vector<5x128xf32>
    %c0_42 = arith.constant 0 : index
    %c0_43 = arith.constant 0 : index
    %107 = vector.load %arg11[%c0_42, %c0_43] : memref<1x128xf32, #tpu.memory_space<vmem>>, vector<1x128xf32>
    %108 = vector.broadcast %107 : vector<1x128xf32> to vector<5x128xf32>
    %109 = arith.addf %106, %108 : vector<5x128xf32>
    %110 = arith.mulf %109, %109 : vector<5x128xf32>
    %111 = arith.mulf %109, %110 : vector<5x128xf32>
    %cst_44 = arith.constant 4.471500e-02 : f32
    %112 = vector.broadcast %cst_44 : f32 to vector<5x128xf32>
    %113 = arith.mulf %112, %111 : vector<5x128xf32>
    %114 = arith.addf %109, %113 : vector<5x128xf32>
    %cst_45 = arith.constant 0.797884583 : f32
    %115 = vector.broadcast %cst_45 : f32 to vector<5x128xf32>
    %116 = arith.mulf %115, %114 : vector<5x128xf32>
    %117 = math.tanh %116 : vector<5x128xf32>
    %cst_46 = arith.constant 1.000000e+00 : f32
    %118 = vector.broadcast %cst_46 : f32 to vector<5x128xf32>
    %119 = arith.addf %118, %117 : vector<5x128xf32>
    %cst_47 = arith.constant 5.000000e-01 : f32
    %120 = vector.broadcast %cst_47 : f32 to vector<5x128xf32>
    %121 = arith.mulf %120, %119 : vector<5x128xf32>
    %122 = arith.mulf %109, %121 : vector<5x128xf32>
    %123 = arith.truncf %122 : vector<5x128xf32> to vector<5x128xbf16>
    %c0_48 = arith.constant 0 : index
    %c0_49 = arith.constant 0 : index
    %124 = vector.load %arg12[%c0_48, %c0_49] : memref<128x32xbf16, #tpu.memory_space<vmem>>, vector<128x32xbf16>
    %cst_50 = arith.constant dense<0.000000e+00> : vector<5x32xf32>
    %125 = tpu.matmul %123, %124, %cst_50 {dimension_numbers = #tpu.dot_dimension_numbers<[1], [0], [0], [1], [0, 0, 1, 1], [], []>} : vector<5x128xbf16>, vector<128x32xbf16>, vector<5x32xf32> -> vector<5x32xf32>
    %c0_51 = arith.constant 0 : index
    %c0_52 = arith.constant 0 : index
    %126 = vector.load %arg13[%c0_51, %c0_52] : memref<1x32xf32, #tpu.memory_space<vmem>>, vector<1x32xf32>
    %127 = vector.broadcast %126 : vector<1x32xf32> to vector<5x32xf32>
    %128 = arith.addf %125, %127 : vector<5x32xf32>
    %129 = arith.addf %81, %128 : vector<5x32xf32>
    %130 = arith.truncf %129 : vector<5x32xf32> to vector<5x32xbf16>
    %c0_53 = arith.constant 0 : index
    %c0_54 = arith.constant 0 : index
    %c0_55 = arith.constant 0 : index
    %131 = vector.load %arg14[%c0_53, %c0_54, %c0_55] : memref<1x5x32xbf16, #tpu.memory_space<vmem>>, vector<1x5x32xbf16>
    %132 = vector.shape_cast %131 : vector<1x5x32xbf16> to vector<5x32xbf16>
    %133 = vector.shape_cast %130 : vector<5x32xbf16> to vector<1x5x32xbf16>
    tpu.vector_store %arg14[%c0_53, %c0_54, %c0_55], %133 {strides = array<i32>} : memref<1x5x32xbf16, #tpu.memory_space<vmem>>, vector<1x5x32xbf16>,
    return
  }
  func.func @transform_0(%arg0: i32) -> (i32, i32, i32) {
    %c0_i32 = arith.constant 0 : i32
    %c0_i32_0 = arith.constant 0 : i32
    %c0_i32_1 = arith.constant 0 : i32
    return %arg0, %c0_i32, %c0_i32_0 : i32, i32, i32
  }
  func.func @transform_1(%arg0: i32) -> (i32, i32) {
    %c0_i32 = arith.constant 0 : i32
    %c0_i32_0 = arith.constant 0 : i32
    %c0_i32_1 = arith.constant 0 : i32
    return %c0_i32, %c0_i32_0 : i32, i32
  }
  func.func @transform_2(%arg0: i32) -> (i32, i32) {
    %c0_i32 = arith.constant 0 : i32
    %c0_i32_0 = arith.constant 0 : i32
    %c0_i32_1 = arith.constant 0 : i32
    return %c0_i32, %c0_i32_0 : i32, i32
  }
  func.func @transform_3(%arg0: i32) -> (i32, i32) {
    %c0_i32 = arith.constant 0 : i32
    %c0_i32_0 = arith.constant 0 : i32
    %c0_i32_1 = arith.constant 0 : i32
    return %c0_i32, %c0_i32_0 : i32, i32
  }
  func.func @transform_4(%arg0: i32) -> (i32, i32) {
    %c0_i32 = arith.constant 0 : i32
    %c0_i32_0 = arith.constant 0 : i32
    %c0_i32_1 = arith.constant 0 : i32
    return %c0_i32, %c0_i32_0 : i32, i32
  }
  func.func @transform_5(%arg0: i32) -> (i32, i32) {
    %c0_i32 = arith.constant 0 : i32
    %c0_i32_0 = arith.constant 0 : i32
    %c0_i32_1 = arith.constant 0 : i32
    return %c0_i32, %c0_i32_0 : i32, i32
  }
  func.func @transform_6(%arg0: i32) -> (i32, i32) {
    %c0_i32 = arith.constant 0 : i32
    %c0_i32_0 = arith.constant 0 : i32
    %c0_i32_1 = arith.constant 0 : i32
    return %c0_i32, %c0_i32_0 : i32, i32
  }
  func.func @transform_7(%arg0: i32) -> (i32, i32) {
    %c0_i32 = arith.constant 0 : i32
    %c0_i32_0 = arith.constant 0 : i32
    %c0_i32_1 = arith.constant 0 : i32
    return %c0_i32, %c0_i32_0 : i32, i32
  }
  func.func @transform_8(%arg0: i32) -> (i32, i32) {
    %c0_i32 = arith.constant 0 : i32
    %c0_i32_0 = arith.constant 0 : i32
    %c0_i32_1 = arith.constant 0 : i32
    return %c0_i32, %c0_i32_0 : i32, i32
  }
  func.func @transform_9(%arg0: i32) -> (i32, i32) {
    %c0_i32 = arith.constant 0 : i32
    %c0_i32_0 = arith.constant 0 : i32
    %c0_i32_1 = arith.constant 0 : i32
    return %c0_i32, %c0_i32_0 : i32, i32
  }
  func.func @transform_10(%arg0: i32) -> (i32, i32) {
    %c0_i32 = arith.constant 0 : i32
    %c0_i32_0 = arith.constant 0 : i32
    %c0_i32_1 = arith.constant 0 : i32
    return %c0_i32, %c0_i32_0 : i32, i32
  }
  func.func @transform_11(%arg0: i32) -> (i32, i32) {
    %c0_i32 = arith.constant 0 : i32
    %c0_i32_0 = arith.constant 0 : i32
    %c0_i32_1 = arith.constant 0 : i32
    return %c0_i32, %c0_i32_0 : i32, i32
  }
  func.func @transform_12(%arg0: i32) -> (i32, i32) {
    %c0_i32 = arith.constant 0 : i32
    %c0_i32_0 = arith.constant 0 : i32
    %c0_i32_1 = arith.constant 0 : i32
    return %c0_i32, %c0_i32_0 : i32, i32
  }
  func.func @transform_13(%arg0: i32) -> (i32, i32, i32) {
    %c0_i32 = arith.constant 0 : i32
    %c0_i32_0 = arith.constant 0 : i32
    %c0_i32_1 = arith.constant 0 : i32
    return %arg0, %c0_i32, %c0_i32_0 : i32, i32, i32
  }
}

module attributes {stable_mosaic.version = 11 : i64} {
  func.func @_decoder_tail_kernel(%arg0: i32, %arg1: memref<1x5x32xbf16, #tpu.memory_space<vmem>>, %arg2: memref<1x5x32xbf16, #tpu.memory_space<vmem>>, %arg3: memref<1x32xf32, #tpu.memory_space<vmem>>, %arg4: memref<1x32xf32, #tpu.memory_space<vmem>>, %arg5: memref<32x96xbf16, #tpu.memory_space<vmem>>, %arg6: memref<1x96xf32, #tpu.memory_space<vmem>>, %arg7: memref<32x32xbf16, #tpu.memory_space<vmem>>, %arg8: memref<1x32xf32, #tpu.memory_space<vmem>>, %arg9: memref<1x32xf32, #tpu.memory_space<vmem>>, %arg10: memref<1x32xf32, #tpu.memory_space<vmem>>, %arg11: memref<32x128xbf16, #tpu.memory_space<vmem>>, %arg12: memref<1x128xf32, #tpu.memory_space<vmem>>, %arg13: memref<128x32xbf16, #tpu.memory_space<vmem>>, %arg14: memref<1x32xf32, #tpu.memory_space<vmem>>, %arg15: memref<1x32xf32, #tpu.memory_space<vmem>>, %arg16: memref<1x32xf32, #tpu.memory_space<vmem>>, %arg17: memref<32x32xbf16, #tpu.memory_space<vmem>>, %arg18: memref<1x32xf32, #tpu.memory_space<vmem>>, %arg19: memref<1x5x32xf32, #tpu.memory_space<vmem>>, %arg20: memref<1x5x32xf32, #tpu.memory_space<vmem>>, %arg21: memref<1x5x32xf32, #tpu.memory_space<vmem>>) attributes {dimension_semantics = [#tpu.dimension_semantics<parallel>], iteration_bounds = array<i64: 2>, scalar_prefetch = 0 : i64, scratch_operands = 0 : i64, tpu.core_type = #tpu.core_type<tc>, window_params = [{transform_indices = @transform_0, window_bounds = array<i64: 1, 5, 32>}, {transform_indices = @transform_1, window_bounds = array<i64: 1, 5, 32>}, {pipeline_mode = #tpu.pipeline_mode<synchronous>, transform_indices = @transform_2, window_bounds = array<i64: 1, 32>}, {pipeline_mode = #tpu.pipeline_mode<synchronous>, transform_indices = @transform_3, window_bounds = array<i64: 1, 32>}, {pipeline_mode = #tpu.pipeline_mode<synchronous>, transform_indices = @transform_4, window_bounds = array<i64: 32, 96>}, {pipeline_mode = #tpu.pipeline_mode<synchronous>, transform_indices = @transform_5, window_bounds = array<i64: 1, 96>}, {pipeline_mode = #tpu.pipeline_mode<synchronous>, transform_indices = @transform_6, window_bounds = array<i64: 32, 32>}, {pipeline_mode = #tpu.pipeline_mode<synchronous>, transform_indices = @transform_7, window_bounds = array<i64: 1, 32>}, {pipeline_mode = #tpu.pipeline_mode<synchronous>, transform_indices = @transform_8, window_bounds = array<i64: 1, 32>}, {pipeline_mode = #tpu.pipeline_mode<synchronous>, transform_indices = @transform_9, window_bounds = array<i64: 1, 32>}, {pipeline_mode = #tpu.pipeline_mode<synchronous>, transform_indices = @transform_10, window_bounds = array<i64: 32, 128>}, {pipeline_mode = #tpu.pipeline_mode<synchronous>, transform_indices = @transform_11, window_bounds = array<i64: 1, 128>}, {pipeline_mode = #tpu.pipeline_mode<synchronous>, transform_indices = @transform_12, window_bounds = array<i64: 128, 32>}, {pipeline_mode = #tpu.pipeline_mode<synchronous>, transform_indices = @transform_13, window_bounds = array<i64: 1, 32>}, {pipeline_mode = #tpu.pipeline_mode<synchronous>, transform_indices = @transform_14, window_bounds = array<i64: 1, 32>}, {pipeline_mode = #tpu.pipeline_mode<synchronous>, transform_indices = @transform_15, window_bounds = array<i64: 1, 32>}, {pipeline_mode = #tpu.pipeline_mode<synchronous>, transform_indices = @transform_16, window_bounds = array<i64: 32, 32>}, {pipeline_mode = #tpu.pipeline_mode<synchronous>, transform_indices = @transform_17, window_bounds = array<i64: 1, 32>}, {transform_indices = @transform_18, window_bounds = array<i64: 1, 5, 32>}, {transform_indices = @transform_19, window_bounds = array<i64: 1, 5, 32>}, {transform_indices = @transform_20, window_bounds = array<i64: 1, 5, 32>}]} {
    %c0 = arith.constant 0 : index
    %c0_0 = arith.constant 0 : index
    %c0_1 = arith.constant 0 : index
    %0 = vector.load %arg1[%c0, %c0_0, %c0_1] : memref<1x5x32xbf16, #tpu.memory_space<vmem>>, vector<1x5x32xbf16>
    %1 = vector.shape_cast %0 : vector<1x5x32xbf16> to vector<5x32xbf16>
    %2 = arith.extf %1 : vector<5x32xbf16> to vector<5x32xf32>
    %c0_2 = arith.constant 0 : index
    %c0_3 = arith.constant 0 : index
    %3 = vector.load %arg3[%c0_2, %c0_3] : memref<1x32xf32, #tpu.memory_space<vmem>>, vector<1x32xf32>
    %c0_4 = arith.constant 0 : index
    %c0_5 = arith.constant 0 : index
    %4 = vector.load %arg4[%c0_4, %c0_5] : memref<1x32xf32, #tpu.memory_space<vmem>>, vector<1x32xf32>
    %cst = arith.constant dense<0.000000e+00> : vector<5xf32>
    %5 = vector.multi_reduction <add>, %2, %cst [1] : vector<5x32xf32> to vector<5xf32>
    %6 = vector.shape_cast %5 : vector<5xf32> to vector<5x1xf32>
    %cst_6 = arith.constant 3.200000e+01 : f32
    %7 = vector.broadcast %cst_6 : f32 to vector<5x1xf32>
    %8 = arith.divf %6, %7 : vector<5x1xf32>
    %9 = vector.broadcast %8 : vector<5x1xf32> to vector<5x32xf32>
    %10 = arith.subf %2, %9 : vector<5x32xf32>
    %11 = arith.mulf %10, %10 : vector<5x32xf32>
    %cst_7 = arith.constant dense<0.000000e+00> : vector<5xf32>
    %12 = vector.multi_reduction <add>, %11, %cst_7 [1] : vector<5x32xf32> to vector<5xf32>
    %13 = vector.shape_cast %12 : vector<5xf32> to vector<5x1xf32>
    %cst_8 = arith.constant 3.200000e+01 : f32
    %14 = vector.broadcast %cst_8 : f32 to vector<5x1xf32>
    %15 = arith.divf %13, %14 : vector<5x1xf32>
    %cst_9 = arith.constant 9.99999997E-7 : f32
    %16 = vector.broadcast %cst_9 : f32 to vector<5x1xf32>
    %17 = arith.addf %15, %16 : vector<5x1xf32>
    %18 = math.rsqrt %17 : vector<5x1xf32>
    %19 = vector.broadcast %18 : vector<5x1xf32> to vector<5x32xf32>
    %20 = arith.mulf %10, %19 : vector<5x32xf32>
    %21 = vector.broadcast %3 : vector<1x32xf32> to vector<5x32xf32>
    %22 = arith.mulf %20, %21 : vector<5x32xf32>
    %23 = vector.broadcast %4 : vector<1x32xf32> to vector<5x32xf32>
    %24 = arith.addf %22, %23 : vector<5x32xf32>
    %25 = arith.truncf %24 : vector<5x32xf32> to vector<5x32xbf16>
    %c0_10 = arith.constant 0 : index
    %c0_11 = arith.constant 0 : index
    %26 = vector.load %arg5[%c0_10, %c0_11] : memref<32x96xbf16, #tpu.memory_space<vmem>>, vector<32x96xbf16>
    %cst_12 = arith.constant dense<0.000000e+00> : vector<5x96xf32>
    %27 = tpu.matmul %25, %26, %cst_12 {dimension_numbers = #tpu.dot_dimension_numbers<[1], [0], [0], [1], [0, 0, 1, 1], [], []>} : vector<5x32xbf16>, vector<32x96xbf16>, vector<5x96xf32> -> vector<5x96xf32>
    %c0_13 = arith.constant 0 : index
    %c0_14 = arith.constant 0 : index
    %28 = vector.load %arg6[%c0_13, %c0_14] : memref<1x96xf32, #tpu.memory_space<vmem>>, vector<1x96xf32>
    %29 = vector.broadcast %28 : vector<1x96xf32> to vector<5x96xf32>
    %30 = arith.addf %27, %29 : vector<5x96xf32>
    %31 = vector.extract_strided_slice %30 {offsets = [0, 0], sizes = [5, 16], strides = [1, 1]} : vector<5x96xf32> to vector<5x16xf32>
    %cst_15 = arith.constant 2.500000e-01 : f32
    %32 = vector.broadcast %cst_15 : f32 to vector<5x16xf32>
    %33 = arith.mulf %31, %32 : vector<5x16xf32>
    %34 = arith.truncf %33 : vector<5x16xf32> to vector<5x16xbf16>
    %35 = vector.extract_strided_slice %30 {offsets = [0, 32], sizes = [5, 16], strides = [1, 1]} : vector<5x96xf32> to vector<5x16xf32>
    %36 = arith.truncf %35 : vector<5x16xf32> to vector<5x16xbf16>
    %37 = vector.extract_strided_slice %30 {offsets = [0, 64], sizes = [5, 16], strides = [1, 1]} : vector<5x96xf32> to vector<5x16xf32>
    %38 = arith.truncf %37 : vector<5x16xf32> to vector<5x16xbf16>
    %cst_16 = arith.constant dense<0.000000e+00> : vector<5x5xf32>
    %39 = tpu.matmul %34, %36, %cst_16 {dimension_numbers = #tpu.dot_dimension_numbers<[1], [1], [0], [0], [0, 0, 1, 0], [], []>} : vector<5x16xbf16>, vector<5x16xbf16>, vector<5x5xf32> -> vector<5x5xf32>
    %cst_17 = arith.constant dense<0xFF800000> : vector<5xf32>
    %40 = vector.multi_reduction <maximumf>, %39, %cst_17 [1] : vector<5x5xf32> to vector<5xf32>
    %41 = vector.shape_cast %40 : vector<5xf32> to vector<5x1xf32>
    %42 = vector.broadcast %41 : vector<5x1xf32> to vector<5x5xf32>
    %43 = arith.subf %39, %42 : vector<5x5xf32>
    %44 = math.exp %43 : vector<5x5xf32>
    %cst_18 = arith.constant dense<0.000000e+00> : vector<5xf32>
    %45 = vector.multi_reduction <add>, %44, %cst_18 [1] : vector<5x5xf32> to vector<5xf32>
    %46 = vector.shape_cast %45 : vector<5xf32> to vector<5x1xf32>
    %47 = arith.truncf %44 : vector<5x5xf32> to vector<5x5xbf16>
    %cst_19 = arith.constant dense<0.000000e+00> : vector<5x16xf32>
    %48 = tpu.matmul %47, %38, %cst_19 {dimension_numbers = #tpu.dot_dimension_numbers<[1], [0], [0], [1], [0, 0, 1, 1], [], []>} : vector<5x5xbf16>, vector<5x16xbf16>, vector<5x16xf32> -> vector<5x16xf32>
    %49 = tpu.reciprocal %46 {approx = true} : vector<5x1xf32> -> vector<5x1xf32>
    %50 = vector.broadcast %49 : vector<5x1xf32> to vector<5x16xf32>
    %51 = arith.mulf %48, %50 : vector<5x16xf32>
    %52 = arith.truncf %51 : vector<5x16xf32> to vector<5x16xbf16>
    %53 = vector.extract_strided_slice %30 {offsets = [0, 16], sizes = [5, 16], strides = [1, 1]} : vector<5x96xf32> to vector<5x16xf32>
    %cst_20 = arith.constant 2.500000e-01 : f32
    %54 = vector.broadcast %cst_20 : f32 to vector<5x16xf32>
    %55 = arith.mulf %53, %54 : vector<5x16xf32>
    %56 = arith.truncf %55 : vector<5x16xf32> to vector<5x16xbf16>
    %57 = vector.extract_strided_slice %30 {offsets = [0, 48], sizes = [5, 16], strides = [1, 1]} : vector<5x96xf32> to vector<5x16xf32>
    %58 = arith.truncf %57 : vector<5x16xf32> to vector<5x16xbf16>
    %59 = vector.extract_strided_slice %30 {offsets = [0, 80], sizes = [5, 16], strides = [1, 1]} : vector<5x96xf32> to vector<5x16xf32>
    %60 = arith.truncf %59 : vector<5x16xf32> to vector<5x16xbf16>
    %cst_21 = arith.constant dense<0.000000e+00> : vector<5x5xf32>
    %61 = tpu.matmul %56, %58, %cst_21 {dimension_numbers = #tpu.dot_dimension_numbers<[1], [1], [0], [0], [0, 0, 1, 0], [], []>} : vector<5x16xbf16>, vector<5x16xbf16>, vector<5x5xf32> -> vector<5x5xf32>
    %cst_22 = arith.constant dense<0xFF800000> : vector<5xf32>
    %62 = vector.multi_reduction <maximumf>, %61, %cst_22 [1] : vector<5x5xf32> to vector<5xf32>
    %63 = vector.shape_cast %62 : vector<5xf32> to vector<5x1xf32>
    %64 = vector.broadcast %63 : vector<5x1xf32> to vector<5x5xf32>
    %65 = arith.subf %61, %64 : vector<5x5xf32>
    %66 = math.exp %65 : vector<5x5xf32>
    %cst_23 = arith.constant dense<0.000000e+00> : vector<5xf32>
    %67 = vector.multi_reduction <add>, %66, %cst_23 [1] : vector<5x5xf32> to vector<5xf32>
    %68 = vector.shape_cast %67 : vector<5xf32> to vector<5x1xf32>
    %69 = arith.truncf %66 : vector<5x5xf32> to vector<5x5xbf16>
    %cst_24 = arith.constant dense<0.000000e+00> : vector<5x16xf32>
    %70 = tpu.matmul %69, %60, %cst_24 {dimension_numbers = #tpu.dot_dimension_numbers<[1], [0], [0], [1], [0, 0, 1, 1], [], []>} : vector<5x5xbf16>, vector<5x16xbf16>, vector<5x16xf32> -> vector<5x16xf32>
    %71 = tpu.reciprocal %68 {approx = true} : vector<5x1xf32> -> vector<5x1xf32>
    %72 = vector.broadcast %71 : vector<5x1xf32> to vector<5x16xf32>
    %73 = arith.mulf %70, %72 : vector<5x16xf32>
    %74 = arith.truncf %73 : vector<5x16xf32> to vector<5x16xbf16>
    %75 = tpu.concatenate %52, %74 in 1 : vector<5x16xbf16>, vector<5x16xbf16> -> vector<5x32xbf16>
    %c0_25 = arith.constant 0 : index
    %c0_26 = arith.constant 0 : index
    %76 = vector.load %arg7[%c0_25, %c0_26] : memref<32x32xbf16, #tpu.memory_space<vmem>>, vector<32x32xbf16>
    %cst_27 = arith.constant dense<0.000000e+00> : vector<5x32xf32>
    %77 = tpu.matmul %75, %76, %cst_27 {dimension_numbers = #tpu.dot_dimension_numbers<[1], [0], [0], [1], [0, 0, 1, 1], [], []>} : vector<5x32xbf16>, vector<32x32xbf16>, vector<5x32xf32> -> vector<5x32xf32>
    %c0_28 = arith.constant 0 : index
    %c0_29 = arith.constant 0 : index
    %78 = vector.load %arg8[%c0_28, %c0_29] : memref<1x32xf32, #tpu.memory_space<vmem>>, vector<1x32xf32>
    %79 = vector.broadcast %78 : vector<1x32xf32> to vector<5x32xf32>
    %80 = arith.addf %77, %79 : vector<5x32xf32>
    %81 = arith.addf %2, %80 : vector<5x32xf32>
    %c0_30 = arith.constant 0 : index
    %c0_31 = arith.constant 0 : index
    %82 = vector.load %arg9[%c0_30, %c0_31] : memref<1x32xf32, #tpu.memory_space<vmem>>, vector<1x32xf32>
    %c0_32 = arith.constant 0 : index
    %c0_33 = arith.constant 0 : index
    %83 = vector.load %arg10[%c0_32, %c0_33] : memref<1x32xf32, #tpu.memory_space<vmem>>, vector<1x32xf32>
    %cst_34 = arith.constant dense<0.000000e+00> : vector<5xf32>
    %84 = vector.multi_reduction <add>, %81, %cst_34 [1] : vector<5x32xf32> to vector<5xf32>
    %85 = vector.shape_cast %84 : vector<5xf32> to vector<5x1xf32>
    %cst_35 = arith.constant 3.200000e+01 : f32
    %86 = vector.broadcast %cst_35 : f32 to vector<5x1xf32>
    %87 = arith.divf %85, %86 : vector<5x1xf32>
    %88 = vector.broadcast %87 : vector<5x1xf32> to vector<5x32xf32>
    %89 = arith.subf %81, %88 : vector<5x32xf32>
    %90 = arith.mulf %89, %89 : vector<5x32xf32>
    %cst_36 = arith.constant dense<0.000000e+00> : vector<5xf32>
    %91 = vector.multi_reduction <add>, %90, %cst_36 [1] : vector<5x32xf32> to vector<5xf32>
    %92 = vector.shape_cast %91 : vector<5xf32> to vector<5x1xf32>
    %cst_37 = arith.constant 3.200000e+01 : f32
    %93 = vector.broadcast %cst_37 : f32 to vector<5x1xf32>
    %94 = arith.divf %92, %93 : vector<5x1xf32>
    %cst_38 = arith.constant 9.99999997E-7 : f32
    %95 = vector.broadcast %cst_38 : f32 to vector<5x1xf32>
    %96 = arith.addf %94, %95 : vector<5x1xf32>
    %97 = math.rsqrt %96 : vector<5x1xf32>
    %98 = vector.broadcast %97 : vector<5x1xf32> to vector<5x32xf32>
    %99 = arith.mulf %89, %98 : vector<5x32xf32>
    %100 = vector.broadcast %82 : vector<1x32xf32> to vector<5x32xf32>
    %101 = arith.mulf %99, %100 : vector<5x32xf32>
    %102 = vector.broadcast %83 : vector<1x32xf32> to vector<5x32xf32>
    %103 = arith.addf %101, %102 : vector<5x32xf32>
    %104 = arith.truncf %103 : vector<5x32xf32> to vector<5x32xbf16>
    %c0_39 = arith.constant 0 : index
    %c0_40 = arith.constant 0 : index
    %105 = vector.load %arg11[%c0_39, %c0_40] : memref<32x128xbf16, #tpu.memory_space<vmem>>, vector<32x128xbf16>
    %cst_41 = arith.constant dense<0.000000e+00> : vector<5x128xf32>
    %106 = tpu.matmul %104, %105, %cst_41 {dimension_numbers = #tpu.dot_dimension_numbers<[1], [0], [0], [1], [0, 0, 1, 1], [], []>} : vector<5x32xbf16>, vector<32x128xbf16>, vector<5x128xf32> -> vector<5x128xf32>
    %c0_42 = arith.constant 0 : index
    %c0_43 = arith.constant 0 : index
    %107 = vector.load %arg12[%c0_42, %c0_43] : memref<1x128xf32, #tpu.memory_space<vmem>>, vector<1x128xf32>
    %108 = vector.broadcast %107 : vector<1x128xf32> to vector<5x128xf32>
    %109 = arith.addf %106, %108 : vector<5x128xf32>
    %110 = arith.mulf %109, %109 : vector<5x128xf32>
    %111 = arith.mulf %109, %110 : vector<5x128xf32>
    %cst_44 = arith.constant 4.471500e-02 : f32
    %112 = vector.broadcast %cst_44 : f32 to vector<5x128xf32>
    %113 = arith.mulf %112, %111 : vector<5x128xf32>
    %114 = arith.addf %109, %113 : vector<5x128xf32>
    %cst_45 = arith.constant 0.797884583 : f32
    %115 = vector.broadcast %cst_45 : f32 to vector<5x128xf32>
    %116 = arith.mulf %115, %114 : vector<5x128xf32>
    %117 = math.tanh %116 : vector<5x128xf32>
    %cst_46 = arith.constant 1.000000e+00 : f32
    %118 = vector.broadcast %cst_46 : f32 to vector<5x128xf32>
    %119 = arith.addf %118, %117 : vector<5x128xf32>
    %cst_47 = arith.constant 5.000000e-01 : f32
    %120 = vector.broadcast %cst_47 : f32 to vector<5x128xf32>
    %121 = arith.mulf %120, %119 : vector<5x128xf32>
    %122 = arith.mulf %109, %121 : vector<5x128xf32>
    %123 = arith.truncf %122 : vector<5x128xf32> to vector<5x128xbf16>
    %c0_48 = arith.constant 0 : index
    %c0_49 = arith.constant 0 : index
    %124 = vector.load %arg13[%c0_48, %c0_49] : memref<128x32xbf16, #tpu.memory_space<vmem>>, vector<128x32xbf16>
    %cst_50 = arith.constant dense<0.000000e+00> : vector<5x32xf32>
    %125 = tpu.matmul %123, %124, %cst_50 {dimension_numbers = #tpu.dot_dimension_numbers<[1], [0], [0], [1], [0, 0, 1, 1], [], []>} : vector<5x128xbf16>, vector<128x32xbf16>, vector<5x32xf32> -> vector<5x32xf32>
    %c0_51 = arith.constant 0 : index
    %c0_52 = arith.constant 0 : index
    %126 = vector.load %arg14[%c0_51, %c0_52] : memref<1x32xf32, #tpu.memory_space<vmem>>, vector<1x32xf32>
    %127 = vector.broadcast %126 : vector<1x32xf32> to vector<5x32xf32>
    %128 = arith.addf %125, %127 : vector<5x32xf32>
    %129 = arith.addf %81, %128 : vector<5x32xf32>
    %c0_53 = arith.constant 0 : index
    %c0_54 = arith.constant 0 : index
    %130 = vector.load %arg15[%c0_53, %c0_54] : memref<1x32xf32, #tpu.memory_space<vmem>>, vector<1x32xf32>
    %c0_55 = arith.constant 0 : index
    %c0_56 = arith.constant 0 : index
    %131 = vector.load %arg16[%c0_55, %c0_56] : memref<1x32xf32, #tpu.memory_space<vmem>>, vector<1x32xf32>
    %cst_57 = arith.constant dense<0.000000e+00> : vector<5xf32>
    %132 = vector.multi_reduction <add>, %129, %cst_57 [1] : vector<5x32xf32> to vector<5xf32>
    %133 = vector.shape_cast %132 : vector<5xf32> to vector<5x1xf32>
    %cst_58 = arith.constant 3.200000e+01 : f32
    %134 = vector.broadcast %cst_58 : f32 to vector<5x1xf32>
    %135 = arith.divf %133, %134 : vector<5x1xf32>
    %136 = vector.broadcast %135 : vector<5x1xf32> to vector<5x32xf32>
    %137 = arith.subf %129, %136 : vector<5x32xf32>
    %138 = arith.mulf %137, %137 : vector<5x32xf32>
    %cst_59 = arith.constant dense<0.000000e+00> : vector<5xf32>
    %139 = vector.multi_reduction <add>, %138, %cst_59 [1] : vector<5x32xf32> to vector<5xf32>
    %140 = vector.shape_cast %139 : vector<5xf32> to vector<5x1xf32>
    %cst_60 = arith.constant 3.200000e+01 : f32
    %141 = vector.broadcast %cst_60 : f32 to vector<5x1xf32>
    %142 = arith.divf %140, %141 : vector<5x1xf32>
    %cst_61 = arith.constant 9.99999997E-7 : f32
    %143 = vector.broadcast %cst_61 : f32 to vector<5x1xf32>
    %144 = arith.addf %142, %143 : vector<5x1xf32>
    %145 = math.rsqrt %144 : vector<5x1xf32>
    %146 = vector.broadcast %145 : vector<5x1xf32> to vector<5x32xf32>
    %147 = arith.mulf %137, %146 : vector<5x32xf32>
    %148 = vector.broadcast %130 : vector<1x32xf32> to vector<5x32xf32>
    %149 = arith.mulf %147, %148 : vector<5x32xf32>
    %150 = vector.broadcast %131 : vector<1x32xf32> to vector<5x32xf32>
    %151 = arith.addf %149, %150 : vector<5x32xf32>
    %c0_62 = arith.constant 0 : index
    %c0_63 = arith.constant 0 : index
    %c0_64 = arith.constant 0 : index
    %152 = vector.load %arg2[%c0_62, %c0_63, %c0_64] : memref<1x5x32xbf16, #tpu.memory_space<vmem>>, vector<1x5x32xbf16>
    %153 = vector.shape_cast %152 : vector<1x5x32xbf16> to vector<5x32xbf16>
    %154 = arith.extf %153 : vector<5x32xbf16> to vector<5x32xf32>
    %cst_65 = arith.constant dense<0.000000e+00> : vector<5xf32>
    %155 = vector.multi_reduction <add>, %154, %cst_65 [1] : vector<5x32xf32> to vector<5xf32>
    %156 = vector.shape_cast %155 : vector<5xf32> to vector<5x1xf32>
    %cst_66 = arith.constant 3.200000e+01 : f32
    %157 = vector.broadcast %cst_66 : f32 to vector<5x1xf32>
    %158 = arith.divf %156, %157 : vector<5x1xf32>
    %159 = vector.broadcast %158 : vector<5x1xf32> to vector<5x32xf32>
    %160 = arith.subf %154, %159 : vector<5x32xf32>
    %161 = arith.mulf %160, %160 : vector<5x32xf32>
    %cst_67 = arith.constant dense<0.000000e+00> : vector<5xf32>
    %162 = vector.multi_reduction <add>, %161, %cst_67 [1] : vector<5x32xf32> to vector<5xf32>
    %163 = vector.shape_cast %162 : vector<5xf32> to vector<5x1xf32>
    %cst_68 = arith.constant 3.200000e+01 : f32
    %164 = vector.broadcast %cst_68 : f32 to vector<5x1xf32>
    %165 = arith.divf %163, %164 : vector<5x1xf32>
    %cst_69 = arith.constant 9.99999997E-7 : f32
    %166 = vector.broadcast %cst_69 : f32 to vector<5x1xf32>
    %167 = arith.addf %165, %166 : vector<5x1xf32>
    %168 = math.rsqrt %167 : vector<5x1xf32>
    %169 = vector.broadcast %168 : vector<5x1xf32> to vector<5x32xf32>
    %170 = arith.mulf %160, %169 : vector<5x32xf32>
    %171 = vector.broadcast %130 : vector<1x32xf32> to vector<5x32xf32>
    %172 = arith.mulf %170, %171 : vector<5x32xf32>
    %173 = vector.broadcast %131 : vector<1x32xf32> to vector<5x32xf32>
    %174 = arith.addf %172, %173 : vector<5x32xf32>
    %c0_70 = arith.constant 0 : index
    %c0_71 = arith.constant 0 : index
    %c0_72 = arith.constant 0 : index
    %175 = vector.load %arg20[%c0_70, %c0_71, %c0_72] : memref<1x5x32xf32, #tpu.memory_space<vmem>>, vector<1x5x32xf32>
    %176 = vector.shape_cast %175 : vector<1x5x32xf32> to vector<5x32xf32>
    %177 = vector.shape_cast %151 : vector<5x32xf32> to vector<1x5x32xf32>
    tpu.vector_store %arg20[%c0_70, %c0_71, %c0_72], %177 {strides = array<i32>} : memref<1x5x32xf32, #tpu.memory_space<vmem>>, vector<1x5x32xf32>,
    %c0_73 = arith.constant 0 : index
    %c0_74 = arith.constant 0 : index
    %c0_75 = arith.constant 0 : index
    %178 = vector.load %arg19[%c0_73, %c0_74, %c0_75] : memref<1x5x32xf32, #tpu.memory_space<vmem>>, vector<1x5x32xf32>
    %179 = vector.shape_cast %178 : vector<1x5x32xf32> to vector<5x32xf32>
    %180 = vector.shape_cast %174 : vector<5x32xf32> to vector<1x5x32xf32>
    tpu.vector_store %arg19[%c0_73, %c0_74, %c0_75], %180 {strides = array<i32>} : memref<1x5x32xf32, #tpu.memory_space<vmem>>, vector<1x5x32xf32>,
    %181 = arith.truncf %151 : vector<5x32xf32> to vector<5x32xbf16>
    %c0_76 = arith.constant 0 : index
    %c0_77 = arith.constant 0 : index
    %182 = vector.load %arg17[%c0_76, %c0_77] : memref<32x32xbf16, #tpu.memory_space<vmem>>, vector<32x32xbf16>
    %cst_78 = arith.constant dense<0.000000e+00> : vector<5x32xf32>
    %183 = tpu.matmul %181, %182, %cst_78 {dimension_numbers = #tpu.dot_dimension_numbers<[1], [0], [0], [1], [0, 0, 1, 1], [], []>} : vector<5x32xbf16>, vector<32x32xbf16>, vector<5x32xf32> -> vector<5x32xf32>
    %c0_79 = arith.constant 0 : index
    %c0_80 = arith.constant 0 : index
    %184 = vector.load %arg18[%c0_79, %c0_80] : memref<1x32xf32, #tpu.memory_space<vmem>>, vector<1x32xf32>
    %185 = vector.broadcast %184 : vector<1x32xf32> to vector<5x32xf32>
    %186 = arith.addf %183, %185 : vector<5x32xf32>
    %187 = arith.mulf %186, %186 : vector<5x32xf32>
    %cst_81 = arith.constant dense<0.000000e+00> : vector<5xf32>
    %188 = vector.multi_reduction <add>, %187, %cst_81 [1] : vector<5x32xf32> to vector<5xf32>
    %189 = vector.shape_cast %188 : vector<5xf32> to vector<5x1xf32>
    %cst_82 = arith.constant 1.000000e-24 : f32
    %190 = vector.broadcast %cst_82 : f32 to vector<5x1xf32>
    %191 = arith.maximumf %189, %190 : vector<5x1xf32>
    %192 = math.rsqrt %191 : vector<5x1xf32>
    %193 = vector.broadcast %192 : vector<5x1xf32> to vector<5x32xf32>
    %194 = arith.mulf %186, %193 : vector<5x32xf32>
    %c0_83 = arith.constant 0 : index
    %c0_84 = arith.constant 0 : index
    %c0_85 = arith.constant 0 : index
    %195 = vector.load %arg21[%c0_83, %c0_84, %c0_85] : memref<1x5x32xf32, #tpu.memory_space<vmem>>, vector<1x5x32xf32>
    %196 = vector.shape_cast %195 : vector<1x5x32xf32> to vector<5x32xf32>
    %197 = vector.shape_cast %194 : vector<5x32xf32> to vector<1x5x32xf32>
    tpu.vector_store %arg21[%c0_83, %c0_84, %c0_85], %197 {strides = array<i32>} : memref<1x5x32xf32, #tpu.memory_space<vmem>>, vector<1x5x32xf32>,
    return
  }
  func.func @transform_0(%arg0: i32) -> (i32, i32, i32) {
    %c0_i32 = arith.constant 0 : i32
    %c0_i32_0 = arith.constant 0 : i32
    %c0_i32_1 = arith.constant 0 : i32
    return %arg0, %c0_i32, %c0_i32_0 : i32, i32, i32
  }
  func.func @transform_1(%arg0: i32) -> (i32, i32, i32) {
    %c0_i32 = arith.constant 0 : i32
    %c0_i32_0 = arith.constant 0 : i32
    %c0_i32_1 = arith.constant 0 : i32
    return %arg0, %c0_i32, %c0_i32_0 : i32, i32, i32
  }
  func.func @transform_2(%arg0: i32) -> (i32, i32) {
    %c0_i32 = arith.constant 0 : i32
    %c0_i32_0 = arith.constant 0 : i32
    %c0_i32_1 = arith.constant 0 : i32
    return %c0_i32, %c0_i32_0 : i32, i32
  }
  func.func @transform_3(%arg0: i32) -> (i32, i32) {
    %c0_i32 = arith.constant 0 : i32
    %c0_i32_0 = arith.constant 0 : i32
    %c0_i32_1 = arith.constant 0 : i32
    return %c0_i32, %c0_i32_0 : i32, i32
  }
  func.func @transform_4(%arg0: i32) -> (i32, i32) {
    %c0_i32 = arith.constant 0 : i32
    %c0_i32_0 = arith.constant 0 : i32
    %c0_i32_1 = arith.constant 0 : i32
    return %c0_i32, %c0_i32_0 : i32, i32
  }
  func.func @transform_5(%arg0: i32) -> (i32, i32) {
    %c0_i32 = arith.constant 0 : i32
    %c0_i32_0 = arith.constant 0 : i32
    %c0_i32_1 = arith.constant 0 : i32
    return %c0_i32, %c0_i32_0 : i32, i32
  }
  func.func @transform_6(%arg0: i32) -> (i32, i32) {
    %c0_i32 = arith.constant 0 : i32
    %c0_i32_0 = arith.constant 0 : i32
    %c0_i32_1 = arith.constant 0 : i32
    return %c0_i32, %c0_i32_0 : i32, i32
  }
  func.func @transform_7(%arg0: i32) -> (i32, i32) {
    %c0_i32 = arith.constant 0 : i32
    %c0_i32_0 = arith.constant 0 : i32
    %c0_i32_1 = arith.constant 0 : i32
    return %c0_i32, %c0_i32_0 : i32, i32
  }
  func.func @transform_8(%arg0: i32) -> (i32, i32) {
    %c0_i32 = arith.constant 0 : i32
    %c0_i32_0 = arith.constant 0 : i32
    %c0_i32_1 = arith.constant 0 : i32
    return %c0_i32, %c0_i32_0 : i32, i32
  }
  func.func @transform_9(%arg0: i32) -> (i32, i32) {
    %c0_i32 = arith.constant 0 : i32
    %c0_i32_0 = arith.constant 0 : i32
    %c0_i32_1 = arith.constant 0 : i32
    return %c0_i32, %c0_i32_0 : i32, i32
  }
  func.func @transform_10(%arg0: i32) -> (i32, i32) {
    %c0_i32 = arith.constant 0 : i32
    %c0_i32_0 = arith.constant 0 : i32
    %c0_i32_1 = arith.constant 0 : i32
    return %c0_i32, %c0_i32_0 : i32, i32
  }
  func.func @transform_11(%arg0: i32) -> (i32, i32) {
    %c0_i32 = arith.constant 0 : i32
    %c0_i32_0 = arith.constant 0 : i32
    %c0_i32_1 = arith.constant 0 : i32
    return %c0_i32, %c0_i32_0 : i32, i32
  }
  func.func @transform_12(%arg0: i32) -> (i32, i32) {
    %c0_i32 = arith.constant 0 : i32
    %c0_i32_0 = arith.constant 0 : i32
    %c0_i32_1 = arith.constant 0 : i32
    return %c0_i32, %c0_i32_0 : i32, i32
  }
  func.func @transform_13(%arg0: i32) -> (i32, i32) {
    %c0_i32 = arith.constant 0 : i32
    %c0_i32_0 = arith.constant 0 : i32
    %c0_i32_1 = arith.constant 0 : i32
    return %c0_i32, %c0_i32_0 : i32, i32
  }
  func.func @transform_14(%arg0: i32) -> (i32, i32) {
    %c0_i32 = arith.constant 0 : i32
    %c0_i32_0 = arith.constant 0 : i32
    %c0_i32_1 = arith.constant 0 : i32
    return %c0_i32, %c0_i32_0 : i32, i32
  }
  func.func @transform_15(%arg0: i32) -> (i32, i32) {
    %c0_i32 = arith.constant 0 : i32
    %c0_i32_0 = arith.constant 0 : i32
    %c0_i32_1 = arith.constant 0 : i32
    return %c0_i32, %c0_i32_0 : i32, i32
  }
  func.func @transform_16(%arg0: i32) -> (i32, i32) {
    %c0_i32 = arith.constant 0 : i32
    %c0_i32_0 = arith.constant 0 : i32
    %c0_i32_1 = arith.constant 0 : i32
    return %c0_i32, %c0_i32_0 : i32, i32
  }
  func.func @transform_17(%arg0: i32) -> (i32, i32) {
    %c0_i32 = arith.constant 0 : i32
    %c0_i32_0 = arith.constant 0 : i32
    %c0_i32_1 = arith.constant 0 : i32
    return %c0_i32, %c0_i32_0 : i32, i32
  }
  func.func @transform_18(%arg0: i32) -> (i32, i32, i32) {
    %c0_i32 = arith.constant 0 : i32
    %c0_i32_0 = arith.constant 0 : i32
    %c0_i32_1 = arith.constant 0 : i32
    return %arg0, %c0_i32, %c0_i32_0 : i32, i32, i32
  }
  func.func @transform_19(%arg0: i32) -> (i32, i32, i32) {
    %c0_i32 = arith.constant 0 : i32
    %c0_i32_0 = arith.constant 0 : i32
    %c0_i32_1 = arith.constant 0 : i32
    return %arg0, %c0_i32, %c0_i32_0 : i32, i32, i32
  }
  func.func @transform_20(%arg0: i32) -> (i32, i32, i32) {
    %c0_i32 = arith.constant 0 : i32
    %c0_i32_0 = arith.constant 0 : i32
    %c0_i32_1 = arith.constant 0 : i32
    return %arg0, %c0_i32, %c0_i32_0 : i32, i32, i32
  }
}

</mosaic_0001>

<llo_original>
// kernel: dino_featurizer_forward.4
$region0: #{dino_featurizer_forward.4}
  #allocation0 [shape = 'u32[]', space=smem, size = 0x4, offset = 0x4, fixed_abs, tag = 'smem constant byte address 0x4 - core index']
  #allocation1 [shape = 'u32[144,128]{1,0:T(1,128)}', space=vmem, size = 0x12000, scoped, tag = 'internal scratch']
  %s0 = inlined_call_operand.hbm [shape: f32[8,192], index: 0, kind: input, shape index: {}]
  %s1 = inlined_call_operand.hbm [shape: bf16[192,32], index: 1, kind: input, shape index: {}]
  %s2 = inlined_call_operand.hbm [shape: f32[1,32], index: 2, kind: input, shape index: {}]
  %s3 = inlined_call_operand.hbm [shape: f32[8,32], index: 3, kind: output, shape index: {}]
  %s4 = sld [smem:[#allocation0]]
  $region34: #{dino_featurizer_forward.4} parent=0
    _
  %s6 = ssub.s32 1, %s4
  %s7 = scalar_select 0, %s6, %s4
  $region1: #{dino_featurizer_forward.4} parent=0
    #allocation2 [shape = 'u8[8192]{0}', space=vmem, size = 0x2000, scoped, tag = 'input window, operand 0, single buffered']
    #allocation3 [shape = 's32[1]{0}', space=sflag, size = 0x4, scoped, tag = 'scoped memory for dino_featurizer_forward.4']
    #allocation4 [shape = 's32[1]{0}', space=sflag, size = 0x4, scoped, tag = 'scoped memory for dino_featurizer_forward.4']
    #allocation5 [shape = 'u8[49152]{0}', space=vmem, size = 0xc000, scoped, tag = 'input window, operand 1, single buffered']
    #allocation6 [shape = 's32[1]{0}', space=sflag, size = 0x4, scoped, tag = 'scoped memory for dino_featurizer_forward.4']
    #allocation7 [shape = 'u8[512]{0}', space=vmem, size = 0x400, scoped, tag = 'input window, operand 2, single buffered']
    #allocation8 [shape = 'u8[4096]{0}', space=vmem, size = 0x1000, scoped, tag = 'output window, operand 0, single buffered']
    %8 = vsyncpa [#allocation3], 0
    %9 = vsyncpa [#allocation6], 0
    %10 = vsyncpa [#allocation4], 0
    // Predicated region
    $region2: #{dino_featurizer_forward.4} parent=1 // pred_check
      _
    $region3: #{dino_featurizer_forward.4} parent=1 // pred_check_branch
      %12 = sbr.rel (0) target = $region5
    $region4: #{dino_featurizer_forward.4} parent=1 // pred_region
      %s14 = ssub.s32 256, 256
      %15 = vsyncadd [#allocation3], %s14
      %s17 = sshll.u32 [#allocation2], 4
      %s18 = int_to_ptr.vmem [resolvable:$true] %s17
      %20 = dma.hbm_to_vmem [thread:$0]  %s0, 256, %s18, [#allocation3]
    $region5: #{dino_featurizer_forward.4} parent=1 // pred_fallthru
      _
    // Predicated region
    $region6: #{dino_featurizer_forward.4} parent=1 // pred_check
      _
    $region7: #{dino_featurizer_forward.4} parent=1 // pred_check_branch
      %22 = sbr.rel (0) target = $region9
    $region8: #{dino_featurizer_forward.4} parent=1 // pred_region
      %s24 = ssub.s32 1536, 1536
      %25 = vsyncadd [#allocation6], %s24
      %s26 = sshll.u32 [#allocation5], 4
      %s27 = int_to_ptr.vmem [resolvable:$true] %s26
      %32 = dma.hbm_to_vmem [thread:$0]  %s1, 1536, %s27, [#allocation6], 64, 64, 4
    $region9: #{dino_featurizer_forward.4} parent=1 // pred_fallthru
      _
    // Predicated region
    $region10: #{dino_featurizer_forward.4} parent=1 // pred_check
      _
    $region11: #{dino_featurizer_forward.4} parent=1 // pred_check_branch
      %34 = sbr.rel (0) target = $region13
    $region12: #{dino_featurizer_forward.4} parent=1 // pred_region
      %s36 = ssub.s32 16, 16
      %37 = vsyncadd [#allocation6], %s36
      %s39 = sshll.u32 [#allocation7], 4
      %s40 = int_to_ptr.vmem [resolvable:$true] %s39
      %42 = dma.hbm_to_vmem [thread:$0]  %s2, 16, %s40, [#allocation6]
    $region13: #{dino_featurizer_forward.4} parent=1 // pred_fallthru
      _
    // Predicated region
    $region14: #{dino_featurizer_forward.4} parent=1 // pred_check
      _
    $region15: #{dino_featurizer_forward.4} parent=1 // pred_check_branch
      %44 = sbr.rel (0) target = $region17
    $region16: #{dino_featurizer_forward.4} parent=1 // pred_region
      %45 = dma.done [#allocation3], 256
    $region17: #{dino_featurizer_forward.4} parent=1 // pred_fallthru
      _
    // Predicated region
    $region18: #{dino_featurizer_forward.4} parent=1 // pred_check
      _
    $region19: #{dino_featurizer_forward.4} parent=1 // pred_check_branch
      %47 = sbr.rel (0) target = $region21
    $region20: #{dino_featurizer_forward.4} parent=1 // pred_region
      %48 = dma.done [#allocation6], 1536
    $region21: #{dino_featurizer_forward.4} parent=1 // pred_fallthru
      _
    // Predicated region
    $region22: #{dino_featurizer_forward.4} parent=1 // pred_check
      _
    $region23: #{dino_featurizer_forward.4} parent=1 // pred_check_branch
      %50 = sbr.rel (0) target = $region25
    $region24: #{dino_featurizer_forward.4} parent=1 // pred_region
      %51 = dma.done [#allocation6], 16
    $region25: #{dino_featurizer_forward.4} parent=1 // pred_fallthru
      _
    %v53 = vld [vmem:[#allocation2] sm:$0xff]
    %v54 = vld [vmem:[#allocation2 + $0x8] sm:$0xff]
    %v55 = vpack.c.bf16 %v53, %v53
    %v56 = vpack.c.bf16 %v54, %v54
    %v57 = vld [vmem:[#allocation5] sm:$0xf]
    %v58 = vld [vmem:[#allocation5 + $0x4] sm:$0xf]
    %v59 = vld [vmem:[#allocation5 + $0x8] sm:$0xf]
    %v60 = vld [vmem:[#allocation5 + $0xc] sm:$0xf]
    %v61 = vld [vmem:[#allocation5 + $0x10] sm:$0xf]
    %v62 = vld [vmem:[#allocation5 + $0x14] sm:$0xf]
    %v63 = vld [vmem:[#allocation5 + $0x18] sm:$0xf]
    %v64 = vld [vmem:[#allocation5 + $0x1c] sm:$0xf]
    %v65 = vld [vmem:[#allocation5 + $0x20] sm:$0xf]
    %v66 = vld [vmem:[#allocation5 + $0x24] sm:$0xf]
    %v67 = vld [vmem:[#allocation5 + $0x28] sm:$0xf]
    %v68 = vld [vmem:[#allocation5 + $0x2c] sm:$0xf]
    %v69 = vld [vmem:[#allocation5 + $0x30] sm:$0xf]
    %v70 = vld [vmem:[#allocation5 + $0x34] sm:$0xf]
    %v71 = vld [vmem:[#allocation5 + $0x38] sm:$0xf]
    %v72 = vld [vmem:[#allocation5 + $0x3c] sm:$0xf]
    %v73 = vld [vmem:[#allocation5 + $0x40] sm:$0xf]
    %v74 = vld [vmem:[#allocation5 + $0x44] sm:$0xf]
    %v75 = vld [vmem:[#allocation5 + $0x48] sm:$0xf]
    %v76 = vld [vmem:[#allocation5 + $0x4c] sm:$0xf]
    %v77 = vld [vmem:[#allocation5 + $0x50] sm:$0xf]
    %v78 = vld [vmem:[#allocation5 + $0x54] sm:$0xf]
    %v79 = vld [vmem:[#allocation5 + $0x58] sm:$0xf]
    %v80 = vld [vmem:[#allocation5 + $0x5c] sm:$0xf]
    %v81 = vld [vmem:[#allocation7] sm:$0x1]
    %v83 = vlaneseq
    %v84 = vshrl.u32 %v83, 7
    %v85 = vsub.s32 0, %v84
    %v86 = vrot.slane %v81, %v85
    %v112 = vunpack.c.l.b16 %v57
    %v113 = vunpack.c.l.b16 %v58
    %v114 = vunpack.c.l.b16 %v59
    %v115 = vunpack.c.l.b16 %v60
    %v116 = vunpack.c.l.b16 %v61
    %v117 = vunpack.c.l.b16 %v62
    %v118 = vunpack.c.l.b16 %v63
    %v119 = vunpack.c.l.b16 %v64
    %v120 = vunpack.c.l.b16 %v65
    %v121 = vunpack.c.l.b16 %v66
    %v122 = vunpack.c.l.b16 %v67
    %v123 = vunpack.c.l.b16 %v68
    %v124 = vunpack.c.l.b16 %v69
    %v125 = vunpack.c.l.b16 %v70
    %v126 = vunpack.c.l.b16 %v71
    %v127 = vunpack.c.l.b16 %v72
    %v128 = vunpack.c.l.b16 %v73
    %v129 = vunpack.c.l.b16 %v74
    %v130 = vunpack.c.l.b16 %v75
    %v131 = vunpack.c.l.b16 %v76
    %v132 = vunpack.c.l.b16 %v77
    %v133 = vunpack.c.l.b16 %v78
    %v134 = vunpack.c.l.b16 %v79
    %v135 = vunpack.c.l.b16 %v80
    %v136 = vpack.c.b16 %v113, %v112
    %v137 = vpack.c.b16 %v115, %v114
    %v138 = vpack.c.b16 %v117, %v116
    %v139 = vpack.c.b16 %v119, %v118
    %v140 = vpack.c.b16 %v121, %v120
    %v141 = vpack.c.b16 %v123, %v122
    %v142 = vpack.c.b16 %v125, %v124
    %v143 = vpack.c.b16 %v127, %v126
    %v144 = vpack.c.b16 %v129, %v128
    %v145 = vpack.c.b16 %v131, %v130
    %v146 = vpack.c.b16 %v133, %v132
    %v147 = vpack.c.b16 %v135, %v134
    %vm160 = vcmask 523264
    %v162 = vsel %vm160, %v56, 0
    %164 = vmatprep.subr.bf16.mxu0 0
    %165 = vmatpush1.bf16.msra.mxu0 %v136
    %166 = vmatprep.subr.bf16.mxu0 0
    %167 = vmatpush1.bf16.msra.mxu0 %v137
    %168 = vmatprep.subr.bf16.mxu0 0
    %169 = vmatpush1.bf16.msra.mxu0 %v138
    %170 = vmatprep.subr.bf16.mxu0 0
    %171 = vmatpush1.bf16.msra.mxu0 %v139
    %172 = vmatprep.subr.bf16.mxu0 0
    %173 = vmatpush1.bf16.msra.mxu0 %v140
    %174 = vmatprep.subr.bf16.mxu0 0
    %175 = vmatpush1.bf16.msra.mxu0 %v141
    %176 = vmatprep.subr.bf16.mxu0 0
    %177 = vmatpush1.bf16.msra.mxu0 %v142
    %178 = vmatprep.subr.bf16.mxu0 0
    %179 = vmatpush1.bf16.msra.mxu0 %v143
    %180 = vmatprep.subr.bf16.mxu0 0
    %181 = vmatpush1.bf16.msra.mxu0 %v144
    %182 = vmatprep.subr.bf16.mxu0 0
    %183 = vmatpush1.bf16.msra.mxu0 %v145
    %184 = vmatprep.subr.bf16.mxu0 0
    %185 = vmatpush1.bf16.msra.mxu0 %v146
    %186 = vmatprep.subr.bf16.mxu0 0
    %187 = vmatpush1.bf16.msra.mxu0 %v147
    %188 = vmatprep.subr.bf16.mxu0 0
    %189 = vmatpush1.bf16.msra.mxu0 0
    %190 = vmatprep.subr.bf16.mxu0 0
    %191 = vmatpush1.bf16.msra.mxu0 0
    %192 = vmatprep.subr.bf16.mxu0 0
    %193 = vmatpush1.bf16.msra.mxu0 0
    %194 = vmatprep.subr.bf16.mxu0 0
    %195 = vmatpush1.bf16.msra.mxu0 0
    %196 = vmatprep.mubr.bf16.mxu0 %v162
    %197 = vmatmul.mubr.bf16.gmra.mrb[0].mxu0 %v55
    %v198 = vpop.f32.mrb[0].mxu0
    %v199 = vadd.f32 %v86, %v198
    %v200 = vpop.f32.mrb[0].mxu0
    %v201 = vpop.f32.mrb[0].mxu0
    %v202 = vpop.f32.mrb[0].mxu0
    %203 = vdwg.mxu0
    %vm204 = vcmask 261120
    %205 = vst.msk [vmem:[#allocation8] sm:$0xff] %vm204, %v199
    // Predicated region
    $region26: #{dino_featurizer_forward.4} parent=1 // pred_check
      _
    $region27: #{dino_featurizer_forward.4} parent=1 // pred_check_branch
      %207 = sbr.rel (0) target = $region29
    $region28: #{dino_featurizer_forward.4} parent=1 // pred_region
      %s209 = ssub.s32 128, 128
      %210 = vsyncadd [#allocation4], %s209
      %s212 = sshll.u32 [#allocation8], 4
      %s213 = int_to_ptr.vmem [resolvable:$true] %s212
      %215 = dma.vmem_to_hbm [thread:$0]  %s213, 128, %s3, [#allocation4]
    $region29: #{dino_featurizer_forward.4} parent=1 // pred_fallthru
      _
    // Predicated region
    $region30: #{dino_featurizer_forward.4} parent=1 // pred_check
      _
    $region31: #{dino_featurizer_forward.4} parent=1 // pred_check_branch
      %217 = sbr.rel (0) target = $region33
    $region32: #{dino_featurizer_forward.4} parent=1 // pred_region
      %218 = dma.done [#allocation4], 128
    $region33: #{dino_featurizer_forward.4} parent=1 // pred_fallthru
      _
    %219 = vsyncpa [#allocation3], 1
    %220 = vsyncpa [#allocation6], 1
    %221 = vsyncpa [#allocation4], 1

// kernel: dino_featurizer_forward.5
$region0: #{dino_featurizer_forward.5}
  #allocation0 [shape = 'u32[]', space=smem, size = 0x4, offset = 0x4, fixed_abs, tag = 'smem constant byte address 0x4 - core index']
  #allocation1 [shape = 'u32[144,128]{1,0:T(1,128)}', space=vmem, size = 0x12000, scoped, tag = 'internal scratch']
  %s0 = inlined_call_operand.hbm [shape: bf16[2,5,32], index: 0, kind: input, shape index: {}]
  %s1 = inlined_call_operand.hbm [shape: f32[1,32], index: 1, kind: input, shape index: {}]
  %s2 = inlined_call_operand.hbm [shape: f32[1,32], index: 2, kind: input, shape index: {}]
  %s3 = inlined_call_operand.hbm [shape: bf16[32,96], index: 3, kind: input, shape index: {}]
  %s4 = inlined_call_operand.hbm [shape: f32[1,96], index: 4, kind: input, shape index: {}]
  %s5 = inlined_call_operand.hbm [shape: bf16[32,32], index: 5, kind: input, shape index: {}]
  %s6 = inlined_call_operand.hbm [shape: f32[1,32], index: 6, kind: input, shape index: {}]
  %s7 = inlined_call_operand.hbm [shape: f32[1,32], index: 7, kind: input, shape index: {}]
  %s8 = inlined_call_operand.hbm [shape: f32[1,32], index: 8, kind: input, shape index: {}]
  %s9 = inlined_call_operand.hbm [shape: bf16[32,128], index: 9, kind: input, shape index: {}]
  %s10 = inlined_call_operand.hbm [shape: f32[1,128], index: 10, kind: input, shape index: {}]
  %s11 = inlined_call_operand.hbm [shape: bf16[128,32], index: 11, kind: input, shape index: {}]
  %s12 = inlined_call_operand.hbm [shape: f32[1,32], index: 12, kind: input, shape index: {}]
  %s13 = inlined_call_operand.hbm [shape: bf16[2,5,32], index: 13, kind: output, shape index: {}]
  %s14 = sld [smem:[#allocation0]]
  $region137: #{dino_featurizer_forward.5} parent=0
    _
  %s16 = ssub.s32 1, %s14
  %s17 = scalar_select 0, %s16, %s14
  $region1: #{dino_featurizer_forward.5} parent=0
    #allocation2 [shape = 'u8[4096]{0}', space=vmem, size = 0x1000, scoped, tag = 'input window, operand 0']
    #allocation3 [shape = 's32[2]{0}', space=sflag, size = 0x8, scoped, tag = 'scoped memory for dino_featurizer_forward.5']
    #allocation4 [shape = 's32[2]{0}', space=sflag, size = 0x8, scoped, tag = 'scoped memory for dino_featurizer_forward.5']
    #allocation5 [shape = 'u8[512]{0}', space=vmem, size = 0x400, scoped, tag = 'input window, operand 1, single buffered']
    #allocation6 [shape = 's32[1]{0}', space=sflag, size = 0x4, scoped, tag = 'scoped memory for dino_featurizer_forward.5']
    #allocation7 [shape = 'u8[512]{0}', space=vmem, size = 0x400, scoped, tag = 'input window, operand 2, single buffered']
    #allocation8 [shape = 'u8[8192]{0}', space=vmem, size = 0x2000, scoped, tag = 'input window, operand 3, single buffered']
    #allocation9 [shape = 's32[1]{0}', space=sflag, size = 0x4, scoped, tag = 'scoped memory for dino_featurizer_forward.5']
    #allocation10 [shape = 'u8[512]{0}', space=vmem, size = 0x400, scoped, tag = 'input window, operand 4, single buffered']
    #allocation11 [shape = 'u8[8192]{0}', space=vmem, size = 0x2000, scoped, tag = 'input window, operand 5, single buffered']
    #allocation12 [shape = 's32[1]{0}', space=sflag, size = 0x4, scoped, tag = 'scoped memory for dino_featurizer_forward.5']
    #allocation13 [shape = 'u8[512]{0}', space=vmem, size = 0x400, scoped, tag = 'input window, operand 6, single buffered']
    #allocation14 [shape = 'u8[512]{0}', space=vmem, size = 0x400, scoped, tag = 'input window, operand 7, single buffered']
    #allocation15 [shape = 's32[1]{0}', space=sflag, size = 0x4, scoped, tag = 'scoped memory for dino_featurizer_forward.5']
    #allocation16 [shape = 'u8[512]{0}', space=vmem, size = 0x400, scoped, tag = 'input window, operand 8, single buffered']
    #allocation17 [shape = 'u8[8192]{0}', space=vmem, size = 0x2000, scoped, tag = 'input window, operand 9, single buffered']
    #allocation18 [shape = 's32[1]{0}', space=sflag, size = 0x4, scoped, tag = 'scoped memory for dino_featurizer_forward.5']
    #allocation19 [shape = 'u8[512]{0}', space=vmem, size = 0x400, scoped, tag = 'input window, operand 10, single buffered']
    #allocation20 [shape = 'u8[32768]{0}', space=vmem, size = 0x8000, scoped, tag = 'input window, operand 11, single buffered']
    #allocation21 [shape = 's32[1]{0}', space=sflag, size = 0x4, scoped, tag = 'scoped memory for dino_featurizer_forward.5']
    #allocation22 [shape = 'u8[512]{0}', space=vmem, size = 0x400, scoped, tag = 'input window, operand 12, single buffered']
    #allocation23 [shape = 'u8[4096]{0}', space=vmem, size = 0x1000, scoped, tag = 'output window, operand 0']
    %18 = vsyncpa [#allocation3], 0
    %s19 = scalar_lea.sflag [#allocation3], 1
    %20 = vsyncpa %s19, 0
    %21 = vsyncpa [#allocation6], 0
    %22 = vsyncpa [#allocation9], 0
    %23 = vsyncpa [#allocation12], 0
    %24 = vsyncpa [#allocation15], 0
    %25 = vsyncpa [#allocation18], 0
    %26 = vsyncpa [#allocation21], 0
    %27 = vsyncpa [#allocation4], 0
    %s28 = scalar_lea.sflag [#allocation4], 1
    %29 = vsyncpa %s28, 0
    loop: start=0, step=1, limit=4
    $region2: #{dino_featurizer_forward.5} parent=1 // loop_pre_header
      _
    $region3: #{dino_featurizer_forward.5} parent=1 // loop_header
      %s31 = sphi 0, %s35
      %p32 = scmp.ge.s32.totalorder %s31, 4
      %s41 = sphi 0, %s43
      %s44 = sphi 0, %s41
      %s45 = sphi 0, %s44
      %s61 = sphi 0, %s45
      %s65 = sphi 0, %s65
      %s67 = sphi 0, %s65
      %s68 = sphi 0, %s67
      %s82 = sphi 0, %s68
      %s86 = sphi 0, %s86
      %s88 = sphi 0, %s86
      %s89 = sphi 0, %s88
      %s103 = sphi 0, %s89
      %s107 = sphi 0, %s107
      %s109 = sphi 0, %s107
      %s110 = sphi 0, %s109
      %s124 = sphi 0, %s110
      %s128 = sphi 0, %s128
      %s130 = sphi 0, %s128
      %s131 = sphi 0, %s130
      %s145 = sphi 0, %s131
      %s149 = sphi 0, %s149
      %s151 = sphi 0, %s149
      %s152 = sphi 0, %s151
      %s166 = sphi 0, %s152
      %s170 = sphi 0, %s170
      %s172 = sphi 0, %s170
      %s173 = sphi 0, %s172
      %s187 = sphi 0, %s173
      %s191 = sphi 0, %s191
      %s193 = sphi 0, %s191
      %s194 = sphi 0, %s193
      %s208 = sphi 0, %s194
      %s212 = sphi 0, %s212
      %s214 = sphi 0, %s212
      %s215 = sphi 0, %s214
      %s229 = sphi 0, %s215
      %s233 = sphi 0, %s233
      %s235 = sphi 0, %s233
      %s236 = sphi 0, %s235
      %s250 = sphi 0, %s236
      %s254 = sphi 0, %s254
      %s256 = sphi 0, %s254
      %s257 = sphi 0, %s256
      %s271 = sphi 0, %s257
      %s275 = sphi 0, %s275
      %s277 = sphi 0, %s275
      %s278 = sphi 0, %s277
      %s292 = sphi 0, %s278
      %s296 = sphi 0, %s296
      %s298 = sphi 0, %s296
      %s299 = sphi 0, %s298
      %s313 = sphi 0, %s299
      %s319 = sphi 0, %s321
      %s322 = sphi 0, %s319
      %s323 = sphi 0, %s322
      %s339 = sphi 0, %s323
    $region4: #{dino_featurizer_forward.5} parent=1 // loop_header_branch
      %34 = sbr.rel (%p32) target = $region8
    $region5: #{dino_featurizer_forward.5} parent=1 // loop_body
      %s36 = ssub.s32 %s31, 1
      %s37 = ssub.s32 %s31, 2
      %s38 = sadd.s32 %s31, 1
      %s39 = ssub.s32 %s31, %s38
      %p40 = scmp.eq.s32.totalorder %s39, 0
      %s42 = sadd.s32 %s41, 1
      %s43 = scalar_select %p40, %s41, %s42
      %p46 = pneg %p40
      %p47 = scmp.eq.s32.totalorder %s31, 1
      %p48 = por %p46, %p47
      %p49 = scmp.ne.s32.totalorder %s41, %s44
      %p50 = scmp.eq.s32.totalorder %s31, 0
      %p51 = por %p49, %p50
      %p52 = scmp.ne.s32.totalorder %s41, %s44
      %p53 = scmp.eq.s32.totalorder %s36, 1
      %p54 = por %p52, %p53
      %p55 = scmp.ne.s32.totalorder %s44, %s45
      %p56 = scmp.eq.s32.totalorder %s36, 0
      %p57 = por %p55, %p56
      %p58 = scmp.ne.s32.totalorder %s44, %s45
      %p59 = scmp.eq.s32.totalorder %s37, 1
      %p60 = por %p58, %p59
      %p62 = scmp.ne.s32.totalorder %s45, %s61
      %p63 = scmp.eq.s32.totalorder %s37, 0
      %p64 = por %p62, %p63
      %s66 = sadd.s32 %s65, 1
      %p69 = scmp.eq.s32.totalorder %s31, 1
      %p70 = scmp.ne.s32.totalorder %s65, %s67
      %p71 = scmp.eq.s32.totalorder %s31, 0
      %p72 = por %p70, %p71
      %p73 = scmp.ne.s32.totalorder %s65, %s67
      %p74 = scmp.eq.s32.totalorder %s36, 1
      %p75 = por %p73, %p74
      %p76 = scmp.ne.s32.totalorder %s67, %s68
      %p77 = scmp.eq.s32.totalorder %s36, 0
      %p78 = por %p76, %p77
      %p79 = scmp.ne.s32.totalorder %s67, %s68
      %p80 = scmp.eq.s32.totalorder %s37, 1
      %p81 = por %p79, %p80
      %p83 = scmp.ne.s32.totalorder %s68, %s82
      %p84 = scmp.eq.s32.totalorder %s37, 0
      %p85 = por %p83, %p84
      %s87 = sadd.s32 %s86, 1
      %p90 = scmp.eq.s32.totalorder %s31, 1
      %p91 = scmp.ne.s32.totalorder %s86, %s88
      %p92 = scmp.eq.s32.totalorder %s31, 0
      %p93 = por %p91, %p92
      %p94 = scmp.ne.s32.totalorder %s86, %s88
      %p95 = scmp.eq.s32.totalorder %s36, 1
      %p96 = por %p94, %p95
      %p97 = scmp.ne.s32.totalorder %s88, %s89
      %p98 = scmp.eq.s32.totalorder %s36, 0
      %p99 = por %p97, %p98
      %p100 = scmp.ne.s32.totalorder %s88, %s89
      %p101 = scmp.eq.s32.totalorder %s37, 1
      %p102 = por %p100, %p101
      %p104 = scmp.ne.s32.totalorder %s89, %s103
      %p105 = scmp.eq.s32.totalorder %s37, 0
      %p106 = por %p104, %p105
      %s108 = sadd.s32 %s107, 1
      %p111 = scmp.eq.s32.totalorder %s31, 1
      %p112 = scmp.ne.s32.totalorder %s107, %s109
      %p113 = scmp.eq.s32.totalorder %s31, 0
      %p114 = por %p112, %p113
      %p115 = scmp.ne.s32.totalorder %s107, %s109
      %p116 = scmp.eq.s32.totalorder %s36, 1
      %p117 = por %p115, %p116
      %p118 = scmp.ne.s32.totalorder %s109, %s110
      %p119 = scmp.eq.s32.totalorder %s36, 0
      %p120 = por %p118, %p119
      %p121 = scmp.ne.s32.totalorder %s109, %s110
      %p122 = scmp.eq.s32.totalorder %s37, 1
      %p123 = por %p121, %p122
      %p125 = scmp.ne.s32.totalorder %s110, %s124
      %p126 = scmp.eq.s32.totalorder %s37, 0
      %p127 = por %p125, %p126
      %s129 = sadd.s32 %s128, 1
      %p132 = scmp.eq.s32.totalorder %s31, 1
      %p133 = scmp.ne.s32.totalorder %s128, %s130
      %p134 = scmp.eq.s32.totalorder %s31, 0
      %p135 = por %p133, %p134
      %p136 = scmp.ne.s32.totalorder %s128, %s130
      %p137 = scmp.eq.s32.totalorder %s36, 1
      %p138 = por %p136, %p137
      %p139 = scmp.ne.s32.totalorder %s130, %s131
      %p140 = scmp.eq.s32.totalorder %s36, 0
      %p141 = por %p139, %p140
      %p142 = scmp.ne.s32.totalorder %s130, %s131
      %p143 = scmp.eq.s32.totalorder %s37, 1
      %p144 = por %p142, %p143
      %p146 = scmp.ne.s32.totalorder %s131, %s145
      %p147 = scmp.eq.s32.totalorder %s37, 0
      %p148 = por %p146, %p147
      %s150 = sadd.s32 %s149, 1
      %p153 = scmp.eq.s32.totalorder %s31, 1
      %p154 = scmp.ne.s32.totalorder %s149, %s151
      %p155 = scmp.eq.s32.totalorder %s31, 0
      %p156 = por %p154, %p155
      %p157 = scmp.ne.s32.totalorder %s149, %s151
      %p158 = scmp.eq.s32.totalorder %s36, 1
      %p159 = por %p157, %p158
      %p160 = scmp.ne.s32.totalorder %s151, %s152
      %p161 = scmp.eq.s32.totalorder %s36, 0
      %p162 = por %p160, %p161
      %p163 = scmp.ne.s32.totalorder %s151, %s152
      %p164 = scmp.eq.s32.totalorder %s37, 1
      %p165 = por %p163, %p164
      %p167 = scmp.ne.s32.totalorder %s152, %s166
      %p168 = scmp.eq.s32.totalorder %s37, 0
      %p169 = por %p167, %p168
      %s171 = sadd.s32 %s170, 1
      %p174 = scmp.eq.s32.totalorder %s31, 1
      %p175 = scmp.ne.s32.totalorder %s170, %s172
      %p176 = scmp.eq.s32.totalorder %s31, 0
      %p177 = por %p175, %p176
      %p178 = scmp.ne.s32.totalorder %s170, %s172
      %p179 = scmp.eq.s32.totalorder %s36, 1
      %p180 = por %p178, %p179
      %p181 = scmp.ne.s32.totalorder %s172, %s173
      %p182 = scmp.eq.s32.totalorder %s36, 0
      %p183 = por %p181, %p182
      %p184 = scmp.ne.s32.totalorder %s172, %s173
      %p185 = scmp.eq.s32.totalorder %s37, 1
      %p186 = por %p184, %p185
      %p188 = scmp.ne.s32.totalorder %s173, %s187
      %p189 = scmp.eq.s32.totalorder %s37, 0
      %p190 = por %p188, %p189
      %s192 = sadd.s32 %s191, 1
      %p195 = scmp.eq.s32.totalorder %s31, 1
      %p196 = scmp.ne.s32.totalorder %s191, %s193
      %p197 = scmp.eq.s32.totalorder %s31, 0
      %p198 = por %p196, %p197
      %p199 = scmp.ne.s32.totalorder %s191, %s193
      %p200 = scmp.eq.s32.totalorder %s36, 1
      %p201 = por %p199, %p200
      %p202 = scmp.ne.s32.totalorder %s193, %s194
      %p203 = scmp.eq.s32.totalorder %s36, 0
      %p204 = por %p202, %p203
      %p205 = scmp.ne.s32.totalorder %s193, %s194
      %p206 = scmp.eq.s32.totalorder %s37, 1
      %p207 = por %p205, %p206
      %p209 = scmp.ne.s32.totalorder %s194, %s208
      %p210 = scmp.eq.s32.totalorder %s37, 0
      %p211 = por %p209, %p210
      %s213 = sadd.s32 %s212, 1
      %p216 = scmp.eq.s32.totalorder %s31, 1
      %p217 = scmp.ne.s32.totalorder %s212, %s214
      %p218 = scmp.eq.s32.totalorder %s31, 0
      %p219 = por %p217, %p218
      %p220 = scmp.ne.s32.totalorder %s212, %s214
      %p221 = scmp.eq.s32.totalorder %s36, 1
      %p222 = por %p220, %p221
      %p223 = scmp.ne.s32.totalorder %s214, %s215
      %p224 = scmp.eq.s32.totalorder %s36, 0
      %p225 = por %p223, %p224
      %p226 = scmp.ne.s32.totalorder %s214, %s215
      %p227 = scmp.eq.s32.totalorder %s37, 1
      %p228 = por %p226, %p227
      %p230 = scmp.ne.s32.totalorder %s215, %s229
      %p231 = scmp.eq.s32.totalorder %s37, 0
      %p232 = por %p230, %p231
      %s234 = sadd.s32 %s233, 1
      %p237 = scmp.eq.s32.totalorder %s31, 1
      %p238 = scmp.ne.s32.totalorder %s233, %s235
      %p239 = scmp.eq.s32.totalorder %s31, 0
      %p240 = por %p238, %p239
      %p241 = scmp.ne.s32.totalorder %s233, %s235
      %p242 = scmp.eq.s32.totalorder %s36, 1
      %p243 = por %p241, %p242
      %p244 = scmp.ne.s32.totalorder %s235, %s236
      %p245 = scmp.eq.s32.totalorder %s36, 0
      %p246 = por %p244, %p245
      %p247 = scmp.ne.s32.totalorder %s235, %s236
      %p248 = scmp.eq.s32.totalorder %s37, 1
      %p249 = por %p247, %p248
      %p251 = scmp.ne.s32.totalorder %s236, %s250
      %p252 = scmp.eq.s32.totalorder %s37, 0
      %p253 = por %p251, %p252
      %s255 = sadd.s32 %s254, 1
      %p258 = scmp.eq.s32.totalorder %s31, 1
      %p259 = scmp.ne.s32.totalorder %s254, %s256
      %p260 = scmp.eq.s32.totalorder %s31, 0
      %p261 = por %p259, %p260
      %p262 = scmp.ne.s32.totalorder %s254, %s256
      %p263 = scmp.eq.s32.totalorder %s36, 1
      %p264 = por %p262, %p263
      %p265 = scmp.ne.s32.totalorder %s256, %s257
      %p266 = scmp.eq.s32.totalorder %s36, 0
      %p267 = por %p265, %p266
      %p268 = scmp.ne.s32.totalorder %s256, %s257
      %p269 = scmp.eq.s32.totalorder %s37, 1
      %p270 = por %p268, %p269
      %p272 = scmp.ne.s32.totalorder %s257, %s271
      %p273 = scmp.eq.s32.totalorder %s37, 0
      %p274 = por %p272, %p273
      %s276 = sadd.s32 %s275, 1
      %p279 = scmp.eq.s32.totalorder %s31, 1
      %p280 = scmp.ne.s32.totalorder %s275, %s277
      %p281 = scmp.eq.s32.totalorder %s31, 0
      %p282 = por %p280, %p281
      %p283 = scmp.ne.s32.totalorder %s275, %s277
      %p284 = scmp.eq.s32.totalorder %s36, 1
      %p285 = por %p283, %p284
      %p286 = scmp.ne.s32.totalorder %s277, %s278
      %p287 = scmp.eq.s32.totalorder %s36, 0
      %p288 = por %p286, %p287
      %p289 = scmp.ne.s32.totalorder %s277, %s278
      %p290 = scmp.eq.s32.totalorder %s37, 1
      %p291 = por %p289, %p290
      %p293 = scmp.ne.s32.totalorder %s278, %s292
      %p294 = scmp.eq.s32.totalorder %s37, 0
      %p295 = por %p293, %p294
      %s297 = sadd.s32 %s296, 1
      %p300 = scmp.eq.s32.totalorder %s31, 1
      %p301 = scmp.ne.s32.totalorder %s296, %s298
      %p302 = scmp.eq.s32.totalorder %s31, 0
      %p303 = por %p301, %p302
      %p304 = scmp.ne.s32.totalorder %s296, %s298
      %p305 = scmp.eq.s32.totalorder %s36, 1
      %p306 = por %p304, %p305
      %p307 = scmp.ne.s32.totalorder %s298, %s299
      %p308 = scmp.eq.s32.totalorder %s36, 0
      %p309 = por %p307, %p308
      %p310 = scmp.ne.s32.totalorder %s298, %s299
      %p311 = scmp.eq.s32.totalorder %s37, 1
      %p312 = por %p310, %p311
      %p314 = scmp.ne.s32.totalorder %s299, %s313
      %p315 = scmp.eq.s32.totalorder %s37, 0
      %p316 = por %p314, %p315
      %s317 = ssub.s32 %s31, %s38
      %p318 = scmp.eq.s32.totalorder %s317, 0
      %s320 = sadd.s32 %s319, 1
      %s321 = scalar_select %p318, %s319, %s320
      %p324 = pneg %p318
      %p325 = scmp.eq.s32.totalorder %s31, 1
      %p326 = por %p324, %p325
      %p327 = scmp.ne.s32.totalorder %s319, %s322
      %p328 = scmp.eq.s32.totalorder %s31, 0
      %p329 = por %p327, %p328
      %p330 = scmp.ne.s32.totalorder %s319, %s322
      %p331 = scmp.eq.s32.totalorder %s36, 1
      %p332 = por %p330, %p331
      %p333 = scmp.ne.s32.totalorder %s322, %s323
      %p334 = scmp.eq.s32.totalorder %s36, 0
      %p335 = por %p333, %p334
      %p336 = scmp.ne.s32.totalorder %s322, %s323
      %p337 = scmp.eq.s32.totalorder %s37, 1
      %p338 = por %p336, %p337
      %p340 = scmp.ne.s32.totalorder %s323, %s339
      %p341 = scmp.eq.s32.totalorder %s37, 0
      %p342 = por %p340, %p341
      %p343 = scmp.le.s32.totalorder 1, %s31
      %p344 = scmp.lt.s32.totalorder %s31, 3
      %p345 = pnand %p343, %p344
      %p346 = pneg %p345
      // Predicated region
      $region9: #{dino_featurizer_forward.5} parent=5 // pred_check
        _
      $region10: #{dino_featurizer_forward.5} parent=5 // pred_check_branch
        %348 = sbr.rel (%p345) target = $region12
      $region11: #{dino_featurizer_forward.5} parent=5 // pred_region
        %s349 = ssub.s32 %s31, 1
        // Predicated region
        $region13: #{dino_featurizer_forward.5} parent=11 // pred_check
          %p350 = pneg %p78
        $region14: #{dino_featurizer_forward.5} parent=11 // pred_check_branch
          %352 = sbr.rel (%p350) target = $region16
        $region15: #{dino_featurizer_forward.5} parent=11 // pred_region
          %s354 = ssub.s32 16, 16
          %355 = vsyncadd [#allocation6], %s354
          %s357 = sshll.u32 [#allocation5], 4
          %s358 = int_to_ptr.vmem [resolvable:$true] %s357
          %360 = dma.hbm_to_vmem [thread:$0]  %s1, 16, %s358, [#allocation6]
        $region16: #{dino_featurizer_forward.5} parent=11 // pred_fallthru
          _
        // Predicated region
        $region17: #{dino_featurizer_forward.5} parent=11 // pred_check
          %p361 = pneg %p99
        $region18: #{dino_featurizer_forward.5} parent=11 // pred_check_branch
          %363 = sbr.rel (%p361) target = $region20
        $region19: #{dino_featurizer_forward.5} parent=11 // pred_region
          %s365 = ssub.s32 16, 16
          %366 = vsyncadd [#allocation6], %s365
          %s368 = sshll.u32 [#allocation7], 4
          %s369 = int_to_ptr.vmem [resolvable:$true] %s368
          %371 = dma.hbm_to_vmem [thread:$0]  %s2, 16, %s369, [#allocation6]
        $region20: #{dino_featurizer_forward.5} parent=11 // pred_fallthru
          _
        // Predicated region
        $region21: #{dino_featurizer_forward.5} parent=11 // pred_check
          %p372 = pneg %p120
        $region22: #{dino_featurizer_forward.5} parent=11 // pred_check_branch
          %374 = sbr.rel (%p372) target = $region24
        $region23: #{dino_featurizer_forward.5} parent=11 // pred_region
          %s376 = ssub.s32 256, 256
          %377 = vsyncadd [#allocation9], %s376
          %s378 = sshll.u32 [#allocation8], 4
          %s379 = int_to_ptr.vmem [resolvable:$true] %s378
          %384 = dma.hbm_to_vmem [thread:$0]  %s3, 256, %s379, [#allocation9], 64, 64, 4
        $region24: #{dino_featurizer_forward.5} parent=11 // pred_fallthru
          _
        // Predicated region
        $region25: #{dino_featurizer_forward.5} parent=11 // pred_check
          %p385 = pneg %p141
        $region26: #{dino_featurizer_forward.5} parent=11 // pred_check_branch
          %387 = sbr.rel (%p385) target = $region28
        $region27: #{dino_featurizer_forward.5} parent=11 // pred_region
          %s389 = ssub.s32 16, 16
          %390 = vsyncadd [#allocation9], %s389
          %s392 = sshll.u32 [#allocation10], 4
          %s393 = int_to_ptr.vmem [resolvable:$true] %s392
          %395 = dma.hbm_to_vmem [thread:$0]  %s4, 16, %s393, [#allocation9]
        $region28: #{dino_featurizer_forward.5} parent=11 // pred_fallthru
          _
        // Predicated region
        $region29: #{dino_featurizer_forward.5} parent=11 // pred_check
          %p396 = pneg %p162
        $region30: #{dino_featurizer_forward.5} parent=11 // pred_check_branch
          %398 = sbr.rel (%p396) target = $region32
        $region31: #{dino_featurizer_forward.5} parent=11 // pred_region
          %s400 = ssub.s32 256, 256
          %401 = vsyncadd [#allocation12], %s400
          %s402 = sshll.u32 [#allocation11], 4
          %s403 = int_to_ptr.vmem [resolvable:$true] %s402
          %408 = dma.hbm_to_vmem [thread:$0]  %s5, 256, %s403, [#allocation12], 64, 64, 4
        $region32: #{dino_featurizer_forward.5} parent=11 // pred_fallthru
          _
        // Predicated region
        $region33: #{dino_featurizer_forward.5} parent=11 // pred_check
          %p409 = pneg %p183
        $region34: #{dino_featurizer_forward.5} parent=11 // pred_check_branch
          %411 = sbr.rel (%p409) target = $region36
        $region35: #{dino_featurizer_forward.5} parent=11 // pred_region
          %s413 = ssub.s32 16, 16
          %414 = vsyncadd [#allocation12], %s413
          %s416 = sshll.u32 [#allocation13], 4
          %s417 = int_to_ptr.vmem [resolvable:$true] %s416
          %419 = dma.hbm_to_vmem [thread:$0]  %s6, 16, %s417, [#allocation12]
        $region36: #{dino_featurizer_forward.5} parent=11 // pred_fallthru
          _
        // Predicated region
        $region37: #{dino_featurizer_forward.5} parent=11 // pred_check
          %p420 = pneg %p204
        $region38: #{dino_featurizer_forward.5} parent=11 // pred_check_branch
          %422 = sbr.rel (%p420) target = $region40
        $region39: #{dino_featurizer_forward.5} parent=11 // pred_region
          %s424 = ssub.s32 16, 16
          %425 = vsyncadd [#allocation15], %s424
          %s427 = sshll.u32 [#allocation14], 4
          %s428 = int_to_ptr.vmem [resolvable:$true] %s427
          %430 = dma.hbm_to_vmem [thread:$0]  %s7, 16, %s428, [#allocation15]
        $region40: #{dino_featurizer_forward.5} parent=11 // pred_fallthru
          _
        // Predicated region
        $region41: #{dino_featurizer_forward.5} parent=11 // pred_check
          %p431 = pneg %p225
        $region42: #{dino_featurizer_forward.5} parent=11 // pred_check_branch
          %433 = sbr.rel (%p431) target = $region44
        $region43: #{dino_featurizer_forward.5} parent=11 // pred_region
          %s435 = ssub.s32 16, 16
          %436 = vsyncadd [#allocation15], %s435
          %s438 = sshll.u32 [#allocation16], 4
          %s439 = int_to_ptr.vmem [resolvable:$true] %s438
          %441 = dma.hbm_to_vmem [thread:$0]  %s8, 16, %s439, [#allocation15]
        $region44: #{dino_featurizer_forward.5} parent=11 // pred_fallthru
          _
        // Predicated region
        $region45: #{dino_featurizer_forward.5} parent=11 // pred_check
          %p442 = pneg %p246
        $region46: #{dino_featurizer_forward.5} parent=11 // pred_check_branch
          %444 = sbr.rel (%p442) target = $region48
        $region47: #{dino_featurizer_forward.5} parent=11 // pred_region
          %s446 = ssub.s32 256, 256
          %447 = vsyncadd [#allocation18], %s446
          %s448 = sshll.u32 [#allocation17], 4
          %s449 = int_to_ptr.vmem [resolvable:$true] %s448
          %454 = dma.hbm_to_vmem [thread:$0]  %s9, 256, %s449, [#allocation18], 64, 64, 4
        $region48: #{dino_featurizer_forward.5} parent=11 // pred_fallthru
          _
        // Predicated region
        $region49: #{dino_featurizer_forward.5} parent=11 // pred_check
          %p455 = pneg %p267
        $region50: #{dino_featurizer_forward.5} parent=11 // pred_check_branch
          %457 = sbr.rel (%p455) target = $region52
        $region51: #{dino_featurizer_forward.5} parent=11 // pred_region
          %s459 = ssub.s32 16, 16
          %460 = vsyncadd [#allocation18], %s459
          %s462 = sshll.u32 [#allocation19], 4
          %s463 = int_to_ptr.vmem [resolvable:$true] %s462
          %465 = dma.hbm_to_vmem [thread:$0]  %s10, 16, %s463, [#allocation18]
        $region52: #{dino_featurizer_forward.5} parent=11 // pred_fallthru
          _
        // Predicated region
        $region53: #{dino_featurizer_forward.5} parent=11 // pred_check
          %p466 = pneg %p288
        $region54: #{dino_featurizer_forward.5} parent=11 // pred_check_branch
          %468 = sbr.rel (%p466) target = $region56
        $region55: #{dino_featurizer_forward.5} parent=11 // pred_region
          %s470 = ssub.s32 1024, 1024
          %471 = vsyncadd [#allocation21], %s470
          %s472 = sshll.u32 [#allocation20], 4
          %s473 = int_to_ptr.vmem [resolvable:$true] %s472
          %478 = dma.hbm_to_vmem [thread:$0]  %s11, 1024, %s473, [#allocation21], 64, 64, 4
        $region56: #{dino_featurizer_forward.5} parent=11 // pred_fallthru
          _
        // Predicated region
        $region57: #{dino_featurizer_forward.5} parent=11 // pred_check
          %p479 = pneg %p309
        $region58: #{dino_featurizer_forward.5} parent=11 // pred_check_branch
          %481 = sbr.rel (%p479) target = $region60
        $region59: #{dino_featurizer_forward.5} parent=11 // pred_region
          %s483 = ssub.s32 16, 16
          %484 = vsyncadd [#allocation21], %s483
          %s486 = sshll.u32 [#allocation22], 4
          %s487 = int_to_ptr.vmem [resolvable:$true] %s486
          %489 = dma.hbm_to_vmem [thread:$0]  %s12, 16, %s487, [#allocation21]
        $region60: #{dino_featurizer_forward.5} parent=11 // pred_fallthru
          _
      $region12: #{dino_featurizer_forward.5} parent=5 // pred_fallthru
        _
      %p490 = scmp.lt.s32.totalorder %s31, 2
      // Predicated region
      $region61: #{dino_featurizer_forward.5} parent=5 // pred_check
        %p491 = pneg %p490
      $region62: #{dino_featurizer_forward.5} parent=5 // pred_check_branch
        %493 = sbr.rel (%p491) target = $region64
      $region63: #{dino_featurizer_forward.5} parent=5 // pred_region
        // Predicated region
        $region65: #{dino_featurizer_forward.5} parent=63 // pred_check
          %p494 = pneg %p51
        $region66: #{dino_featurizer_forward.5} parent=63 // pred_check_branch
          %496 = sbr.rel (%p494) target = $region68
        $region67: #{dino_featurizer_forward.5} parent=63 // pred_region
          %s497 = sand.u32 %s41, 1
          %s498 = scalar_lea.sflag [#allocation3], %s497
          %s499 = sand.u32 %s41, 1
          %s500 = smul.addr %s499, 4
          %s501 = scalar_lea.vmem [#allocation2], %s500
          %s503 = ssub.s32 64, 64
          %504 = vsyncadd %s498, %s503
          %s505 = smul.addr %s31, 64
          %s506 = scalar_lea.hbm %s0, %s505
          %s508 = sshll.u32 %s501, 4
          %s509 = int_to_ptr.vmem [resolvable:$true] %s508
          %511 = dma.hbm_to_vmem [thread:$0]  %s506, 64, %s509, %s498
        $region68: #{dino_featurizer_forward.5} parent=63 // pred_fallthru
          _
      $region64: #{dino_featurizer_forward.5} parent=5 // pred_fallthru
        _
      %p512 = scmp.le.s32.totalorder 1, %s31
      %p513 = scmp.lt.s32.totalorder %s31, 3
      %p514 = pnand %p512, %p513
      %p515 = pneg %p514
      // Predicated region
      $region69: #{dino_featurizer_forward.5} parent=5 // pred_check
        _
      $region70: #{dino_featurizer_forward.5} parent=5 // pred_check_branch
        %517 = sbr.rel (%p514) target = $region72
      $region71: #{dino_featurizer_forward.5} parent=5 // pred_region
        %s518 = ssub.s32 %s31, 1
        %s519 = sand.u32 %s44, 1
        %s520 = scalar_lea.sflag [#allocation3], %s519
        %s521 = sand.u32 %s44, 1
        %s522 = smul.addr %s521, 4
        %s523 = scalar_lea.vmem [#allocation2], %s522
        // Predicated region
        $region73: #{dino_featurizer_forward.5} parent=71 // pred_check
          %p524 = pneg %p57
        $region74: #{dino_featurizer_forward.5} parent=71 // pred_check_branch
          %526 = sbr.rel (%p524) target = $region76
        $region75: #{dino_featurizer_forward.5} parent=71 // pred_region
          %527 = dma.done %s520, 64
        $region76: #{dino_featurizer_forward.5} parent=71 // pred_fallthru
          _
        // Predicated region
        $region77: #{dino_featurizer_forward.5} parent=71 // pred_check
          %p528 = pneg %p78
        $region78: #{dino_featurizer_forward.5} parent=71 // pred_check_branch
          %530 = sbr.rel (%p528) target = $region80
        $region79: #{dino_featurizer_forward.5} parent=71 // pred_region
          %531 = dma.done [#allocation6], 16
        $region80: #{dino_featurizer_forward.5} parent=71 // pred_fallthru
          _
        // Predicated region
        $region81: #{dino_featurizer_forward.5} parent=71 // pred_check
          %p532 = pneg %p99
        $region82: #{dino_featurizer_forward.5} parent=71 // pred_check_branch
          %534 = sbr.rel (%p532) target = $region84
        $region83: #{dino_featurizer_forward.5} parent=71 // pred_region
          %535 = dma.done [#allocation6], 16
        $region84: #{dino_featurizer_forward.5} parent=71 // pred_fallthru
          _
        // Predicated region
        $region85: #{dino_featurizer_forward.5} parent=71 // pred_check
          %p536 = pneg %p120
        $region86: #{dino_featurizer_forward.5} parent=71 // pred_check_branch
          %538 = sbr.rel (%p536) target = $region88
        $region87: #{dino_featurizer_forward.5} parent=71 // pred_region
          %539 = dma.done [#allocation9], 256
        $region88: #{dino_featurizer_forward.5} parent=71 // pred_fallthru
          _
        // Predicated region
        $region89: #{dino_featurizer_forward.5} parent=71 // pred_check
          %p540 = pneg %p141
        $region90: #{dino_featurizer_forward.5} parent=71 // pred_check_branch
          %542 = sbr.rel (%p540) target = $region92
        $region91: #{dino_featurizer_forward.5} parent=71 // pred_region
          %543 = dma.done [#allocation9], 16
        $region92: #{dino_featurizer_forward.5} parent=71 // pred_fallthru
          _
        // Predicated region
        $region93: #{dino_featurizer_forward.5} parent=71 // pred_check
          %p544 = pneg %p162
        $region94: #{dino_featurizer_forward.5} parent=71 // pred_check_branch
          %546 = sbr.rel (%p544) target = $region96
        $region95: #{dino_featurizer_forward.5} parent=71 // pred_region
          %547 = dma.done [#allocation12], 256
        $region96: #{dino_featurizer_forward.5} parent=71 // pred_fallthru
          _
        // Predicated region
        $region97: #{dino_featurizer_forward.5} parent=71 // pred_check
          %p548 = pneg %p183
        $region98: #{dino_featurizer_forward.5} parent=71 // pred_check_branch
          %550 = sbr.rel (%p548) target = $region100
        $region99: #{dino_featurizer_forward.5} parent=71 // pred_region
          %551 = dma.done [#allocation12], 16
        $region100: #{dino_featurizer_forward.5} parent=71 // pred_fallthru
          _
        // Predicated region
        $region101: #{dino_featurizer_forward.5} parent=71 // pred_check
          %p552 = pneg %p204
        $region102: #{dino_featurizer_forward.5} parent=71 // pred_check_branch
          %554 = sbr.rel (%p552) target = $region104
        $region103: #{dino_featurizer_forward.5} parent=71 // pred_region
          %555 = dma.done [#allocation15], 16
        $region104: #{dino_featurizer_forward.5} parent=71 // pred_fallthru
          _
        // Predicated region
        $region105: #{dino_featurizer_forward.5} parent=71 // pred_check
          %p556 = pneg %p225
        $region106: #{dino_featurizer_forward.5} parent=71 // pred_check_branch
          %558 = sbr.rel (%p556) target = $region108
        $region107: #{dino_featurizer_forward.5} parent=71 // pred_region
          %559 = dma.done [#allocation15], 16
        $region108: #{dino_featurizer_forward.5} parent=71 // pred_fallthru
          _
        // Predicated region
        $region109: #{dino_featurizer_forward.5} parent=71 // pred_check
          %p560 = pneg %p246
        $region110: #{dino_featurizer_forward.5} parent=71 // pred_check_branch
          %562 = sbr.rel (%p560) target = $region112
        $region111: #{dino_featurizer_forward.5} parent=71 // pred_region
          %563 = dma.done [#allocation18], 256
        $region112: #{dino_featurizer_forward.5} parent=71 // pred_fallthru
          _
        // Predicated region
        $region113: #{dino_featurizer_forward.5} parent=71 // pred_check
          %p564 = pneg %p267
        $region114: #{dino_featurizer_forward.5} parent=71 // pred_check_branch
          %566 = sbr.rel (%p564) target = $region116
        $region115: #{dino_featurizer_forward.5} parent=71 // pred_region
          %567 = dma.done [#allocation18], 16
        $region116: #{dino_featurizer_forward.5} parent=71 // pred_fallthru
          _
        // Predicated region
        $region117: #{dino_featurizer_forward.5} parent=71 // pred_check
          %p568 = pneg %p288
        $region118: #{dino_featurizer_forward.5} parent=71 // pred_check_branch
          %570 = sbr.rel (%p568) target = $region120
        $region119: #{dino_featurizer_forward.5} parent=71 // pred_region
          %571 = dma.done [#allocation21], 1024
        $region120: #{dino_featurizer_forward.5} parent=71 // pred_fallthru
          _
        // Predicated region
        $region121: #{dino_featurizer_forward.5} parent=71 // pred_check
          %p572 = pneg %p309
        $region122: #{dino_featurizer_forward.5} parent=71 // pred_check_branch
          %574 = sbr.rel (%p572) target = $region124
        $region123: #{dino_featurizer_forward.5} parent=71 // pred_region
          %575 = dma.done [#allocation21], 16
        $region124: #{dino_featurizer_forward.5} parent=71 // pred_fallthru
          _
        %s576 = sand.u32 %s44, 1
        %s577 = scalar_lea.sflag [#allocation3], %s576
        %s578 = sand.u32 %s44, 1
        %s579 = smul.addr %s578, 4
        %s580 = scalar_lea.vmem [#allocation2], %s579
        %p581 = pneg %p57
        %p582 = pneg %p54
        %p583 = pneg %p78
        %p584 = pneg %p75
        %p585 = pneg %p99
        %p586 = pneg %p96
        %p587 = pneg %p120
        %p588 = pneg %p117
        %p589 = pneg %p141
        %p590 = pneg %p138
        %p591 = pneg %p162
        %p592 = pneg %p159
        %p593 = pneg %p183
        %p594 = pneg %p180
        %p595 = pneg %p204
        %p596 = pneg %p201
        %p597 = pneg %p225
        %p598 = pneg %p222
        %p599 = pneg %p246
        %p600 = pneg %p243
        %p601 = pneg %p267
        %p602 = pneg %p264
        %p603 = pneg %p288
        %p604 = pneg %p285
        %p605 = pneg %p309
        %p606 = pneg %p306
        %p607 = pneg %p335
        %p608 = pneg %p332
        %s609 = sand.u32 %s322, 1
        %s610 = scalar_lea.sflag [#allocation4], %s609
        %s611 = sand.u32 %s322, 1
        %s612 = smul.addr %s611, 4
        %s613 = scalar_lea.vmem [#allocation23], %s612
        %v615 = vld [vmem:[%s523] sm:$0x7]
        %v616 = vunpack.c.l.bf16 %v615
        %v617 = vld [vmem:[#allocation5] sm:$0x1]
        %v618 = vld [vmem:[#allocation7] sm:$0x1]
        %vm619 = vcmask 258048
        %v620 = vsel %vm619, %v616, 0.0
        %621 = vadd.xlane.f32.xlu0 %v620
        %v622 = vpop.xlane.xlu0 %621
        %v623 = vrcp.pop 32.0
        %v624 = vmul.f32 %v622, %v623
        %v625 = vsub.f32 %v616, %v624
        %v626 = vmul.f32 %v625, %v625
        %v627 = vsel %vm619, %v626, 0.0
        %628 = vadd.xlane.f32.xlu0 %v627
        %v629 = vpop.xlane.xlu0 %628
        %v630 = vmul.f32 %v629, %v623
        %v631 = vadd.f32 %v630, 1e-06
        %v632 = vrsqrt.pop %v631
        %v633 = vmul.f32 %v625, %v632
        %v635 = vlaneseq
        %v636 = vshrl.u32 %v635, 7
        %v637 = vsub.s32 0, %v636
        %v638 = vrot.slane %v617, %v637
        %v640 = vmul.f32 %v633, %v638
        %v642 = vlaneseq
        %v643 = vshrl.u32 %v642, 7
        %v644 = vsub.s32 0, %v643
        %v645 = vrot.slane %v618, %v644
        %v647 = vadd.f32 %v640, %v645
        %v648 = vpack.c.bf16 %v647, %v647
        %v649 = vld [vmem:[#allocation8] sm:$0xf]
        %v650 = vld [vmem:[#allocation8 + $0x4] sm:$0xf]
        %v651 = vld [vmem:[#allocation8 + $0x8] sm:$0xf]
        %v652 = vld [vmem:[#allocation8 + $0xc] sm:$0xf]
        %v653 = vld [vmem:[#allocation10] sm:$0x1]
        %v655 = vlaneseq
        %v656 = vshrl.u32 %v655, 7
        %v657 = vsub.s32 0, %v656
        %v658 = vrot.slane %v653, %v657
        %v664 = vunpack.c.l.b16 %v649
        %v665 = vunpack.c.l.b16 %v650
        %v666 = vunpack.c.l.b16 %v651
        %v667 = vunpack.c.l.b16 %v652
        %v668 = vpack.c.b16 %v665, %v664
        %v669 = vpack.c.b16 %v667, %v666
        %vm672 = vcmask 261120
        %v674 = vsel %vm672, %v648, 0
        %676 = vmatprep.subr.bf16.mxu0 0
        %677 = vmatpush1.bf16.msra.mxu0 %v668
        %678 = vmatprep.subr.bf16.mxu0 0
        %679 = vmatpush1.bf16.msra.mxu0 %v669
        %680 = vmatprep.subr.bf16.mxu0 0
        %681 = vmatpush1.bf16.msra.mxu0 0
        %682 = vmatprep.subr.bf16.mxu0 0
        %683 = vmatpush1.bf16.msra.mxu0 0
        %684 = vmatprep.subr.bf16.mxu0 0
        %685 = vmatpush1.bf16.msra.mxu0 0
        %686 = vmatprep.subr.bf16.mxu0 0
        %687 = vmatpush1.bf16.msra.mxu0 0
        %688 = vmatprep.subr.bf16.mxu0 0
        %689 = vmatpush1.bf16.msra.mxu0 0
        %690 = vmatprep.subr.bf16.mxu0 0
        %691 = vmatpush1.bf16.msra.mxu0 0
        %692 = vmatprep.subr.bf16.mxu0 0
        %693 = vmatpush1.bf16.msra.mxu0 0
        %694 = vmatprep.subr.bf16.mxu0 0
        %695 = vmatpush1.bf16.msra.mxu0 0
        %696 = vmatprep.subr.bf16.mxu0 0
        %697 = vmatpush1.bf16.msra.mxu0 0
        %698 = vmatprep.subr.bf16.mxu0 0
        %699 = vmatpush1.bf16.msra.mxu0 0
        %700 = vmatprep.subr.bf16.mxu0 0
        %701 = vmatpush1.bf16.msra.mxu0 0
        %702 = vmatprep.subr.bf16.mxu0 0
        %703 = vmatpush1.bf16.msra.mxu0 0
        %704 = vmatprep.subr.bf16.mxu0 0
        %705 = vmatpush1.bf16.msra.mxu0 0
        %706 = vmatprep.subr.bf16.mxu0 0
        %707 = vmatpush1.bf16.msra.mxu0 0
        %708 = vmatprep.mubr.bf16.mxu0 0
        %709 = vmatmul.mubr.bf16.gmra.mrb[0].mxu0 %v674
        %v710 = vpop.f32.mrb[0].mxu0
        %v711 = vadd.f32 %v658, %v710
        %v712 = vpop.f32.mrb[0].mxu0
        %v713 = vpop.f32.mrb[0].mxu0
        %v714 = vpop.f32.mrb[0].mxu0
        %715 = vdwg.mxu0
        %v716 = vmul.f32 %v711, 0.25
        %v717 = vpack.c.bf16 %v716, %v716
        %v718 = vpack.c.bf16 %v711, %v711
        %720 = vrot.lane.b32.xlu0 %v718, 96
        %v721 = vpop.permute.xlu0 %720
        %vm722 = vcmask 130048
        %v724 = vsel %vm722, %v717, 0
        %v727 = vsel %vm722, %v721, 0
        %729 = vmatprep.subr.bf16.mxu0 0
        %730 = vmatpush1.bf16.xpose.msra.mxu0 %v727
        %731 = vmatprep.subr.bf16.mxu0 0
        %732 = vmatpush1.bf16.xpose.msra.mxu0 0
        %733 = vmatprep.subr.bf16.mxu0 0
        %734 = vmatpush1.bf16.xpose.msra.mxu0 0
        %735 = vmatprep.subr.bf16.mxu0 0
        %736 = vmatpush1.bf16.xpose.msra.mxu0 0
        %737 = vmatprep.subr.bf16.mxu0 0
        %738 = vmatpush1.bf16.xpose.msra.mxu0 0
        %739 = vmatprep.subr.bf16.mxu0 0
        %740 = vmatpush1.bf16.xpose.msra.mxu0 0
        %741 = vmatprep.subr.bf16.mxu0 0
        %742 = vmatpush1.bf16.xpose.msra.mxu0 0
        %743 = vmatprep.subr.bf16.mxu0 0
        %744 = vmatpush1.bf16.xpose.msra.mxu0 0
        %745 = vmatprep.subr.bf16.mxu0 0
        %746 = vmatpush1.bf16.xpose.msra.mxu0 0
        %747 = vmatprep.subr.bf16.mxu0 0
        %748 = vmatpush1.bf16.xpose.msra.mxu0 0
        %749 = vmatprep.subr.bf16.mxu0 0
        %750 = vmatpush1.bf16.xpose.msra.mxu0 0
        %751 = vmatprep.subr.bf16.mxu0 0
        %752 = vmatpush1.bf16.xpose.msra.mxu0 0
        %753 = vmatprep.subr.bf16.mxu0 0
        %754 = vmatpush1.bf16.xpose.msra.mxu0 0
        %755 = vmatprep.subr.bf16.mxu0 0
        %756 = vmatpush1.bf16.xpose.msra.mxu0 0
        %757 = vmatprep.subr.bf16.mxu0 0
        %758 = vmatpush1.bf16.xpose.msra.mxu0 0
        %759 = vmatprep.subr.bf16.mxu0 0
        %760 = vmatpush1.bf16.xpose.msra.mxu0 0
        %761 = vmatprep.mubr.bf16.mxu0 0
        %762 = vmatmul.mubr.bf16.gmra.mrb[0].mxu0 %v724
        %v763 = vpop.f32.mrb[0].mxu0
        %v764 = vadd.f32 0.0, %v763
        %v765 = vpop.f32.mrb[0].mxu0
        %v766 = vpop.f32.mrb[0].mxu0
        %v767 = vpop.f32.mrb[0].mxu0
        %768 = vdwg.mxu0
        %vm769 = vcmask 36864
        %v770 = vsel %vm769, %v764, -inf
        %771 = vmax.xlane.f32.xlu0 %v770
        %v772 = vpop.xlane.xlu0 %771
        %v773 = vsub.f32 %v764, %v772
        %v774 = vmul.f32 %v773, 1.442695
        %v775 = vpow.pop %v774
        %v776 = vsel %vm769, %v775, 0.0
        %777 = vadd.xlane.f32.xlu0 %v776
        %v778 = vpop.xlane.xlu0 %777
        %v779 = vpack.c.bf16 %v775, %v775
        %780 = vrot.lane.b32.xlu0 %v718, 64
        %v781 = vpop.permute.xlu0 %780
        %vm782 = vcmask 39936
        %v784 = vsel %vm782, %v779, 0
        %vm786 = vcmask 1041408
        %vm787 = vcmask 1042432
        %v788 = vsel %vm786, 4294967295, 65535
        %v789 = vsel %vm787, %v788, 0
        %v791 = vand.u32 %v781, %v789
        %793 = vmatprep.subr.bf16.mxu0 0
        %794 = vmatpush1.bf16.msra.mxu0 %v791
        %795 = vmatprep.subr.bf16.mxu0 0
        %796 = vmatpush1.bf16.msra.mxu0 0
        %797 = vmatprep.subr.bf16.mxu0 0
        %798 = vmatpush1.bf16.msra.mxu0 0
        %799 = vmatprep.subr.bf16.mxu0 0
        %800 = vmatpush1.bf16.msra.mxu0 0
        %801 = vmatprep.subr.bf16.mxu0 0
        %802 = vmatpush1.bf16.msra.mxu0 0
        %803 = vmatprep.subr.bf16.mxu0 0
        %804 = vmatpush1.bf16.msra.mxu0 0
        %805 = vmatprep.subr.bf16.mxu0 0
        %806 = vmatpush1.bf16.msra.mxu0 0
        %807 = vmatprep.subr.bf16.mxu0 0
        %808 = vmatpush1.bf16.msra.mxu0 0
        %809 = vmatprep.subr.bf16.mxu0 0
        %810 = vmatpush1.bf16.msra.mxu0 0
        %811 = vmatprep.subr.bf16.mxu0 0
        %812 = vmatpush1.bf16.msra.mxu0 0
        %813 = vmatprep.subr.bf16.mxu0 0
        %814 = vmatpush1.bf16.msra.mxu0 0
        %815 = vmatprep.subr.bf16.mxu0 0
        %816 = vmatpush1.bf16.msra.mxu0 0
        %817 = vmatprep.subr.bf16.mxu0 0
        %818 = vmatpush1.bf16.msra.mxu0 0
        %819 = vmatprep.subr.bf16.mxu0 0
        %820 = vmatpush1.bf16.msra.mxu0 0
        %821 = vmatprep.subr.bf16.mxu0 0
        %822 = vmatpush1.bf16.msra.mxu0 0
        %823 = vmatprep.subr.bf16.mxu0 0
        %824 = vmatpush1.bf16.msra.mxu0 0
        %825 = vmatprep.mubr.bf16.mxu0 0
        %826 = vmatmul.mubr.bf16.gmra.mrb[0].mxu0 %v784
        %v827 = vpop.f32.mrb[0].mxu0
        %v828 = vadd.f32 0.0, %v827
        %v829 = vpop.f32.mrb[0].mxu0
        %v830 = vpop.f32.mrb[0].mxu0
        %v831 = vpop.f32.mrb[0].mxu0
        %832 = vdwg.mxu0
        %v833 = vrcp.pop %v778
        %v834 = vmul.f32 %v828, %v833
        %v835 = vpack.c.bf16 %v834, %v834
        %837 = vrot.lane.b32.xlu0 %v717, 112
        %v838 = vpop.permute.xlu0 %837
        %839 = vrot.lane.b32.xlu0 %v718, 80
        %v840 = vpop.permute.xlu0 %839
        %v842 = vsel %vm722, %v838, 0
        %v845 = vsel %vm722, %v840, 0
        %847 = vmatprep.subr.bf16.mxu0 0
        %848 = vmatpush1.bf16.xpose.msra.mxu0 %v845
        %849 = vmatprep.subr.bf16.mxu0 0
        %850 = vmatpush1.bf16.xpose.msra.mxu0 0
        %851 = vmatprep.subr.bf16.mxu0 0
        %852 = vmatpush1.bf16.xpose.msra.mxu0 0
        %853 = vmatprep.subr.bf16.mxu0 0
        %854 = vmatpush1.bf16.xpose.msra.mxu0 0
        %855 = vmatprep.subr.bf16.mxu0 0
        %856 = vmatpush1.bf16.xpose.msra.mxu0 0
        %857 = vmatprep.subr.bf16.mxu0 0
        %858 = vmatpush1.bf16.xpose.msra.mxu0 0
        %859 = vmatprep.subr.bf16.mxu0 0
        %860 = vmatpush1.bf16.xpose.msra.mxu0 0
        %861 = vmatprep.subr.bf16.mxu0 0
        %862 = vmatpush1.bf16.xpose.msra.mxu0 0
        %863 = vmatprep.subr.bf16.mxu0 0
        %864 = vmatpush1.bf16.xpose.msra.mxu0 0
        %865 = vmatprep.subr.bf16.mxu0 0
        %866 = vmatpush1.bf16.xpose.msra.mxu0 0
        %867 = vmatprep.subr.bf16.mxu0 0
        %868 = vmatpush1.bf16.xpose.msra.mxu0 0
        %869 = vmatprep.subr.bf16.mxu0 0
        %870 = vmatpush1.bf16.xpose.msra.mxu0 0
        %871 = vmatprep.subr.bf16.mxu0 0
        %872 = vmatpush1.bf16.xpose.msra.mxu0 0
        %873 = vmatprep.subr.bf16.mxu0 0
        %874 = vmatpush1.bf16.xpose.msra.mxu0 0
        %875 = vmatprep.subr.bf16.mxu0 0
        %876 = vmatpush1.bf16.xpose.msra.mxu0 0
        %877 = vmatprep.subr.bf16.mxu0 0
        %878 = vmatpush1.bf16.xpose.msra.mxu0 0
        %879 = vmatprep.mubr.bf16.mxu0 0
        %880 = vmatmul.mubr.bf16.gmra.mrb[0].mxu0 %v842
        %v881 = vpop.f32.mrb[0].mxu0
        %v882 = vadd.f32 0.0, %v881
        %v883 = vpop.f32.mrb[0].mxu0
        %v884 = vpop.f32.mrb[0].mxu0
        %v885 = vpop.f32.mrb[0].mxu0
        %886 = vdwg.mxu0
        %v887 = vsel %vm769, %v882, -inf
        %888 = vmax.xlane.f32.xlu0 %v887
        %v889 = vpop.xlane.xlu0 %888
        %v890 = vsub.f32 %v882, %v889
        %v891 = vmul.f32 %v890, 1.442695
        %v892 = vpow.pop %v891
        %v893 = vsel %vm769, %v892, 0.0
        %894 = vadd.xlane.f32.xlu0 %v893
        %v895 = vpop.xlane.xlu0 %894
        %v896 = vpack.c.bf16 %v892, %v892
        %897 = vrot.lane.b32.xlu0 %v718, 48
        %v898 = vpop.permute.xlu0 %897
        %v900 = vsel %vm782, %v896, 0
        %v903 = vand.u32 %v898, %v789
        %905 = vmatprep.subr.bf16.mxu0 0
        %906 = vmatpush1.bf16.msra.mxu0 %v903
        %907 = vmatprep.subr.bf16.mxu0 0
        %908 = vmatpush1.bf16.msra.mxu0 0
        %909 = vmatprep.subr.bf16.mxu0 0
        %910 = vmatpush1.bf16.msra.mxu0 0
        %911 = vmatprep.subr.bf16.mxu0 0
        %912 = vmatpush1.bf16.msra.mxu0 0
        %913 = vmatprep.subr.bf16.mxu0 0
        %914 = vmatpush1.bf16.msra.mxu0 0
        %915 = vmatprep.subr.bf16.mxu0 0
        %916 = vmatpush1.bf16.msra.mxu0 0
        %917 = vmatprep.subr.bf16.mxu0 0
        %918 = vmatpush1.bf16.msra.mxu0 0
        %919 = vmatprep.subr.bf16.mxu0 0
        %920 = vmatpush1.bf16.msra.mxu0 0
        %921 = vmatprep.subr.bf16.mxu0 0
        %922 = vmatpush1.bf16.msra.mxu0 0
        %923 = vmatprep.subr.bf16.mxu0 0
        %924 = vmatpush1.bf16.msra.mxu0 0
        %925 = vmatprep.subr.bf16.mxu0 0
        %926 = vmatpush1.bf16.msra.mxu0 0
        %927 = vmatprep.subr.bf16.mxu0 0
        %928 = vmatpush1.bf16.msra.mxu0 0
        %929 = vmatprep.subr.bf16.mxu0 0
        %930 = vmatpush1.bf16.msra.mxu0 0
        %931 = vmatprep.subr.bf16.mxu0 0
        %932 = vmatpush1.bf16.msra.mxu0 0
        %933 = vmatprep.subr.bf16.mxu0 0
        %934 = vmatpush1.bf16.msra.mxu0 0
        %935 = vmatprep.subr.bf16.mxu0 0
        %936 = vmatpush1.bf16.msra.mxu0 0
        %937 = vmatprep.mubr.bf16.mxu0 0
        %938 = vmatmul.mubr.bf16.gmra.mrb[0].mxu0 %v900
        %v939 = vpop.f32.mrb[0].mxu0
        %v940 = vadd.f32 0.0, %v939
        %v941 = vpop.f32.mrb[0].mxu0
        %v942 = vpop.f32.mrb[0].mxu0
        %v943 = vpop.f32.mrb[0].mxu0
        %944 = vdwg.mxu0
        %v945 = vrcp.pop %v895
        %v946 = vmul.f32 %v940, %v945
        %v947 = vpack.c.bf16 %v946, %v946
        %949 = vrot.lane.b32.xlu0 %v947, 16
        %v950 = vpop.permute.xlu0 %949
        %v953 = vsel %vm722, %v835, %v950
        %v954 = vld [vmem:[#allocation11] sm:$0xf]
        %v955 = vld [vmem:[#allocation11 + $0x4] sm:$0xf]
        %v956 = vld [vmem:[#allocation11 + $0x8] sm:$0xf]
        %v957 = vld [vmem:[#allocation11 + $0xc] sm:$0xf]
        %v958 = vld [vmem:[#allocation13] sm:$0x1]
        %v960 = vlaneseq
        %v961 = vshrl.u32 %v960, 7
        %v962 = vsub.s32 0, %v961
        %v963 = vrot.slane %v958, %v962
        %v969 = vunpack.c.l.b16 %v954
        %v970 = vunpack.c.l.b16 %v955
        %v971 = vunpack.c.l.b16 %v956
        %v972 = vunpack.c.l.b16 %v957
        %v973 = vpack.c.b16 %v970, %v969
        %v974 = vpack.c.b16 %v972, %v971
        %v977 = vsel %vm672, %v953, 0
        %979 = vmatprep.subr.bf16.mxu0 0
        %980 = vmatpush1.bf16.msra.mxu0 %v973
        %981 = vmatprep.subr.bf16.mxu0 0
        %982 = vmatpush1.bf16.msra.mxu0 %v974
        %983 = vmatprep.subr.bf16.mxu0 0
        %984 = vmatpush1.bf16.msra.mxu0 0
        %985 = vmatprep.subr.bf16.mxu0 0
        %986 = vmatpush1.bf16.msra.mxu0 0
        %987 = vmatprep.subr.bf16.mxu0 0
        %988 = vmatpush1.bf16.msra.mxu0 0
        %989 = vmatprep.subr.bf16.mxu0 0
        %990 = vmatpush1.bf16.msra.mxu0 0
        %991 = vmatprep.subr.bf16.mxu0 0
        %992 = vmatpush1.bf16.msra.mxu0 0
        %993 = vmatprep.subr.bf16.mxu0 0
        %994 = vmatpush1.bf16.msra.mxu0 0
        %995 = vmatprep.subr.bf16.mxu0 0
        %996 = vmatpush1.bf16.msra.mxu0 0
        %997 = vmatprep.subr.bf16.mxu0 0
        %998 = vmatpush1.bf16.msra.mxu0 0
        %999 = vmatprep.subr.bf16.mxu0 0
        %1000 = vmatpush1.bf16.msra.mxu0 0
        %1001 = vmatprep.subr.bf16.mxu0 0
        %1002 = vmatpush1.bf16.msra.mxu0 0
        %1003 = vmatprep.subr.bf16.mxu0 0
        %1004 = vmatpush1.bf16.msra.mxu0 0
        %1005 = vmatprep.subr.bf16.mxu0 0
        %1006 = vmatpush1.bf16.msra.mxu0 0
        %1007 = vmatprep.subr.bf16.mxu0 0
        %1008 = vmatpush1.bf16.msra.mxu0 0
        %1009 = vmatprep.subr.bf16.mxu0 0
        %1010 = vmatpush1.bf16.msra.mxu0 0
        %1011 = vmatprep.mubr.bf16.mxu0 0
        %1012 = vmatmul.mubr.bf16.gmra.mrb[0].mxu0 %v977
        %v1013 = vpop.f32.mrb[0].mxu0
        %v1014 = vadd.f32 %v963, %v1013
        %v1015 = vpop.f32.mrb[0].mxu0
        %v1016 = vpop.f32.mrb[0].mxu0
        %v1017 = vpop.f32.mrb[0].mxu0
        %1018 = vdwg.mxu0
        %v1019 = vadd.f32 %v616, %v1014
        %v1020 = vld [vmem:[#allocation14] sm:$0x1]
        %v1021 = vld [vmem:[#allocation16] sm:$0x1]
        %v1022 = vsel %vm619, %v1019, 0.0
        %1023 = vadd.xlane.f32.xlu0 %v1022
        %v1024 = vpop.xlane.xlu0 %1023
        %v1025 = vmul.f32 %v1024, %v623
        %v1026 = vsub.f32 %v1019, %v1025
        %v1027 = vmul.f32 %v1026, %v1026
        %v1028 = vsel %vm619, %v1027, 0.0
        %1029 = vadd.xlane.f32.xlu0 %v1028
        %v1030 = vpop.xlane.xlu0 %1029
        %v1031 = vmul.f32 %v1030, %v623
        %v1032 = vadd.f32 %v1031, 1e-06
        %v1033 = vrsqrt.pop %v1032
        %v1034 = vmul.f32 %v1026, %v1033
        %v1036 = vlaneseq
        %v1037 = vshrl.u32 %v1036, 7
        %v1038 = vsub.s32 0, %v1037
        %v1039 = vrot.slane %v1020, %v1038
        %v1041 = vmul.f32 %v1034, %v1039
        %v1043 = vlaneseq
        %v1044 = vshrl.u32 %v1043, 7
        %v1045 = vsub.s32 0, %v1044
        %v1046 = vrot.slane %v1021, %v1045
        %v1048 = vadd.f32 %v1041, %v1046
        %v1049 = vpack.c.bf16 %v1048, %v1048
        %v1050 = vld [vmem:[#allocation17] sm:$0xf]
        %v1051 = vld [vmem:[#allocation17 + $0x4] sm:$0xf]
        %v1052 = vld [vmem:[#allocation17 + $0x8] sm:$0xf]
        %v1053 = vld [vmem:[#allocation17 + $0xc] sm:$0xf]
        %v1054 = vld [vmem:[#allocation19] sm:$0x1]
        %v1056 = vlaneseq
        %v1057 = vshrl.u32 %v1056, 7
        %v1058 = vsub.s32 0, %v1057
        %v1059 = vrot.slane %v1054, %v1058
        %v1065 = vunpack.c.l.b16 %v1050
        %v1066 = vunpack.c.l.b16 %v1051
        %v1067 = vunpack.c.l.b16 %v1052
        %v1068 = vunpack.c.l.b16 %v1053
        %v1069 = vpack.c.b16 %v1066, %v1065
        %v1070 = vpack.c.b16 %v1068, %v1067
        %v1074 = vsel %vm672, %v1049, 0
        %1076 = vmatprep.subr.bf16.mxu0 0
        %1077 = vmatpush1.bf16.msra.mxu0 %v1069
        %1078 = vmatprep.subr.bf16.mxu0 0
        %1079 = vmatpush1.bf16.msra.mxu0 %v1070
        %1080 = vmatprep.subr.bf16.mxu0 0
        %1081 = vmatpush1.bf16.msra.mxu0 0
        %1082 = vmatprep.subr.bf16.mxu0 0
        %1083 = vmatpush1.bf16.msra.mxu0 0
        %1084 = vmatprep.subr.bf16.mxu0 0
        %1085 = vmatpush1.bf16.msra.mxu0 0
        %1086 = vmatprep.subr.bf16.mxu0 0
        %1087 = vmatpush1.bf16.msra.mxu0 0
        %1088 = vmatprep.subr.bf16.mxu0 0
        %1089 = vmatpush1.bf16.msra.mxu0 0
        %1090 = vmatprep.subr.bf16.mxu0 0
        %1091 = vmatpush1.bf16.msra.mxu0 0
        %1092 = vmatprep.subr.bf16.mxu0 0
        %1093 = vmatpush1.bf16.msra.mxu0 0
        %1094 = vmatprep.subr.bf16.mxu0 0
        %1095 = vmatpush1.bf16.msra.mxu0 0
        %1096 = vmatprep.subr.bf16.mxu0 0
        %1097 = vmatpush1.bf16.msra.mxu0 0
        %1098 = vmatprep.subr.bf16.mxu0 0
        %1099 = vmatpush1.bf16.msra.mxu0 0
        %1100 = vmatprep.subr.bf16.mxu0 0
        %1101 = vmatpush1.bf16.msra.mxu0 0
        %1102 = vmatprep.subr.bf16.mxu0 0
        %1103 = vmatpush1.bf16.msra.mxu0 0
        %1104 = vmatprep.subr.bf16.mxu0 0
        %1105 = vmatpush1.bf16.msra.mxu0 0
        %1106 = vmatprep.subr.bf16.mxu0 0
        %1107 = vmatpush1.bf16.msra.mxu0 0
        %1108 = vmatprep.mubr.bf16.mxu0 0
        %1109 = vmatmul.mubr.bf16.gmra.mrb[0].mxu0 %v1074
        %v1110 = vpop.f32.mrb[0].mxu0
        %v1111 = vadd.f32 %v1059, %v1110
        %v1112 = vpop.f32.mrb[0].mxu0
        %v1113 = vpop.f32.mrb[0].mxu0
        %v1114 = vpop.f32.mrb[0].mxu0
        %1115 = vdwg.mxu0
        %v1116 = vmul.f32 %v1111, %v1111
        %v1117 = vmul.f32 %v1111, %v1116
        %v1118 = vmul.f32 %v1117, 0.044715
        %v1119 = vadd.f32 %v1111, %v1118
        %v1120 = vmul.f32 %v1119, 0.7978846
        %v1121 = vtanh.pop %v1120
        %v1122 = vadd.f32 %v1121, 1.0
        %v1123 = vmul.f32 %v1122, 0.5
        %v1124 = vmul.f32 %v1111, %v1123
        %v1125 = vpack.c.bf16 %v1124, %v1124
        %v1126 = vld [vmem:[#allocation20] sm:$0xf]
        %v1127 = vld [vmem:[#allocation20 + $0x4] sm:$0xf]
        %v1128 = vld [vmem:[#allocation20 + $0x8] sm:$0xf]
        %v1129 = vld [vmem:[#allocation20 + $0xc] sm:$0xf]
        %v1130 = vld [vmem:[#allocation20 + $0x10] sm:$0xf]
        %v1131 = vld [vmem:[#allocation20 + $0x14] sm:$0xf]
        %v1132 = vld [vmem:[#allocation20 + $0x18] sm:$0xf]
        %v1133 = vld [vmem:[#allocation20 + $0x1c] sm:$0xf]
        %v1134 = vld [vmem:[#allocation20 + $0x20] sm:$0xf]
        %v1135 = vld [vmem:[#allocation20 + $0x24] sm:$0xf]
        %v1136 = vld [vmem:[#allocation20 + $0x28] sm:$0xf]
        %v1137 = vld [vmem:[#allocation20 + $0x2c] sm:$0xf]
        %v1138 = vld [vmem:[#allocation20 + $0x30] sm:$0xf]
        %v1139 = vld [vmem:[#allocation20 + $0x34] sm:$0xf]
        %v1140 = vld [vmem:[#allocation20 + $0x38] sm:$0xf]
        %v1141 = vld [vmem:[#allocation20 + $0x3c] sm:$0xf]
        %v1142 = vld [vmem:[#allocation22] sm:$0x1]
        %v1144 = vlaneseq
        %v1145 = vshrl.u32 %v1144, 7
        %v1146 = vsub.s32 0, %v1145
        %v1147 = vrot.slane %v1142, %v1146
        %v1165 = vunpack.c.l.b16 %v1126
        %v1166 = vunpack.c.l.b16 %v1127
        %v1167 = vunpack.c.l.b16 %v1128
        %v1168 = vunpack.c.l.b16 %v1129
        %v1169 = vunpack.c.l.b16 %v1130
        %v1170 = vunpack.c.l.b16 %v1131
        %v1171 = vunpack.c.l.b16 %v1132
        %v1172 = vunpack.c.l.b16 %v1133
        %v1173 = vunpack.c.l.b16 %v1134
        %v1174 = vunpack.c.l.b16 %v1135
        %v1175 = vunpack.c.l.b16 %v1136
        %v1176 = vunpack.c.l.b16 %v1137
        %v1177 = vunpack.c.l.b16 %v1138
        %v1178 = vunpack.c.l.b16 %v1139
        %v1179 = vunpack.c.l.b16 %v1140
        %v1180 = vunpack.c.l.b16 %v1141
        %v1181 = vpack.c.b16 %v1166, %v1165
        %v1182 = vpack.c.b16 %v1168, %v1167
        %v1183 = vpack.c.b16 %v1170, %v1169
        %v1184 = vpack.c.b16 %v1172, %v1171
        %v1185 = vpack.c.b16 %v1174, %v1173
        %v1186 = vpack.c.b16 %v1176, %v1175
        %v1187 = vpack.c.b16 %v1178, %v1177
        %v1188 = vpack.c.b16 %v1180, %v1179
        %1197 = vmatprep.subr.bf16.mxu0 0
        %1198 = vmatpush1.bf16.msra.mxu0 %v1181
        %1199 = vmatprep.subr.bf16.mxu0 0
        %1200 = vmatpush1.bf16.msra.mxu0 %v1182
        %1201 = vmatprep.subr.bf16.mxu0 0
        %1202 = vmatpush1.bf16.msra.mxu0 %v1183
        %1203 = vmatprep.subr.bf16.mxu0 0
        %1204 = vmatpush1.bf16.msra.mxu0 %v1184
        %1205 = vmatprep.subr.bf16.mxu0 0
        %1206 = vmatpush1.bf16.msra.mxu0 %v1185
        %1207 = vmatprep.subr.bf16.mxu0 0
        %1208 = vmatpush1.bf16.msra.mxu0 %v1186
        %1209 = vmatprep.subr.bf16.mxu0 0
        %1210 = vmatpush1.bf16.msra.mxu0 %v1187
        %1211 = vmatprep.subr.bf16.mxu0 0
        %1212 = vmatpush1.bf16.msra.mxu0 %v1188
        %1213 = vmatprep.subr.bf16.mxu0 0
        %1214 = vmatpush1.bf16.msra.mxu0 0
        %1215 = vmatprep.subr.bf16.mxu0 0
        %1216 = vmatpush1.bf16.msra.mxu0 0
        %1217 = vmatprep.subr.bf16.mxu0 0
        %1218 = vmatpush1.bf16.msra.mxu0 0
        %1219 = vmatprep.subr.bf16.mxu0 0
        %1220 = vmatpush1.bf16.msra.mxu0 0
        %1221 = vmatprep.subr.bf16.mxu0 0
        %1222 = vmatpush1.bf16.msra.mxu0 0
        %1223 = vmatprep.subr.bf16.mxu0 0
        %1224 = vmatpush1.bf16.msra.mxu0 0
        %1225 = vmatprep.subr.bf16.mxu0 0
        %1226 = vmatpush1.bf16.msra.mxu0 0
        %1227 = vmatprep.subr.bf16.mxu0 0
        %1228 = vmatpush1.bf16.msra.mxu0 0
        %1229 = vmatprep.mubr.bf16.mxu0 0
        %1230 = vmatmul.mubr.bf16.gmra.mrb[0].mxu0 %v1125
        %v1231 = vpop.f32.mrb[0].mxu0
        %v1232 = vadd.f32 %v1147, %v1231
        %v1233 = vpop.f32.mrb[0].mxu0
        %v1234 = vpop.f32.mrb[0].mxu0
        %v1235 = vpop.f32.mrb[0].mxu0
        %1236 = vdwg.mxu0
        %v1237 = vadd.f32 %v1019, %v1232
        %v1238 = vpack.c.bf16 %v1237, %v1237
        %vm1239 = vcmask 256000
        %vm1240 = vsmask.f32 2304
        %vm1241 = vmand %vm1239, %vm1240
        %v1242 = vld [vmem:[%s613] sm:$0x7]
        %v1243 = vsel %vm1241, %v1238, %v1242
        %1244 = vst [vmem:[%s613] sm:$0x7] %v1243
        %s1245 = sand.u32 %s322, 1
        %s1246 = scalar_lea.sflag [#allocation4], %s1245
        %s1247 = sand.u32 %s322, 1
        %s1248 = smul.addr %s1247, 4
        %s1249 = scalar_lea.vmem [#allocation23], %s1248
        // Predicated region
        $region125: #{dino_featurizer_forward.5} parent=71 // pred_check
          %p1250 = pneg %p332
        $region126: #{dino_featurizer_forward.5} parent=71 // pred_check_branch
          %1252 = sbr.rel (%p1250) target = $region128
        $region127: #{dino_featurizer_forward.5} parent=71 // pred_region
          %s1254 = ssub.s32 64, 64
          %1255 = vsyncadd %s1246, %s1254
          %s1256 = smul.addr %s36, 64
          %s1257 = scalar_lea.hbm %s13, %s1256
          %s1259 = sshll.u32 %s1249, 4
          %s1260 = int_to_ptr.vmem [resolvable:$true] %s1259
          %1262 = dma.vmem_to_hbm [thread:$0]  %s1260, 64, %s1257, %s1246
        $region128: #{dino_featurizer_forward.5} parent=71 // pred_fallthru
          _
      $region72: #{dino_featurizer_forward.5} parent=5 // pred_fallthru
        _
      %p1263 = scmp.le.s32.totalorder 2, %s31
      // Predicated region
      $region129: #{dino_featurizer_forward.5} parent=5 // pred_check
        %p1264 = pneg %p1263
      $region130: #{dino_featurizer_forward.5} parent=5 // pred_check_branch
        %1266 = sbr.rel (%p1264) target = $region132
      $region131: #{dino_featurizer_forward.5} parent=5 // pred_region
        %s1267 = ssub.s32 %s31, 2
        // Predicated region
        $region133: #{dino_featurizer_forward.5} parent=131 // pred_check
          %p1268 = pneg %p338
        $region134: #{dino_featurizer_forward.5} parent=131 // pred_check_branch
          %1270 = sbr.rel (%p1268) target = $region136
        $region135: #{dino_featurizer_forward.5} parent=131 // pred_region
          %s1271 = sand.u32 %s323, 1
          %s1272 = scalar_lea.sflag [#allocation4], %s1271
          %s1273 = sand.u32 %s323, 1
          %s1274 = smul.addr %s1273, 4
          %s1275 = scalar_lea.vmem [#allocation23], %s1274
          %1276 = dma.done %s1272, 64
        $region136: #{dino_featurizer_forward.5} parent=131 // pred_fallthru
          _
      $region132: #{dino_featurizer_forward.5} parent=5 // pred_fallthru
        _
    $region6: #{dino_featurizer_forward.5} parent=1 // loop_footer
      %s35 = sadd.s32 1, %s31
    $region7: #{dino_featurizer_forward.5} parent=1 // loop_footer_branch
      %30 = sbr.rel target = $region3
    $region8: #{dino_featurizer_forward.5} parent=1 // loop_exit
      _
    %1277 = vsyncpa [#allocation3], 1
    %s1278 = scalar_lea.sflag [#allocation3], 1
    %1279 = vsyncpa %s1278, 1
    %1280 = vsyncpa [#allocation6], 1
    %1281 = vsyncpa [#allocation9], 1
    %1282 = vsyncpa [#allocation12], 1
    %1283 = vsyncpa [#allocation15], 1
    %1284 = vsyncpa [#allocation18], 1
    %1285 = vsyncpa [#allocation21], 1
    %1286 = vsyncpa [#allocation4], 1
    %s1287 = scalar_lea.sflag [#allocation4], 1
    %1288 = vsyncpa %s1287, 1

// kernel: dino_featurizer_forward.7
$region0: #{dino_featurizer_forward.7}
  #allocation0 [shape = 'u32[]', space=smem, size = 0x4, offset = 0x4, fixed_abs, tag = 'smem constant byte address 0x4 - core index']
  #allocation1 [shape = 'u32[144,128]{1,0:T(1,128)}', space=vmem, size = 0x12000, scoped, tag = 'internal scratch']
  %s0 = inlined_call_operand.hbm [shape: bf16[2,5,32], index: 0, kind: input, shape index: {}]
  %s1 = inlined_call_operand.hbm [shape: bf16[2,5,32], index: 1, kind: input, shape index: {}]
  %s2 = inlined_call_operand.hbm [shape: f32[1,32], index: 2, kind: input, shape index: {}]
  %s3 = inlined_call_operand.hbm [shape: f32[1,32], index: 3, kind: input, shape index: {}]
  %s4 = inlined_call_operand.hbm [shape: bf16[32,96], index: 4, kind: input, shape index: {}]
  %s5 = inlined_call_operand.hbm [shape: f32[1,96], index: 5, kind: input, shape index: {}]
  %s6 = inlined_call_operand.hbm [shape: bf16[32,32], index: 6, kind: input, shape index: {}]
  %s7 = inlined_call_operand.hbm [shape: f32[1,32], index: 7, kind: input, shape index: {}]
  %s8 = inlined_call_operand.hbm [shape: f32[1,32], index: 8, kind: input, shape index: {}]
  %s9 = inlined_call_operand.hbm [shape: f32[1,32], index: 9, kind: input, shape index: {}]
  %s10 = inlined_call_operand.hbm [shape: bf16[32,128], index: 10, kind: input, shape index: {}]
  %s11 = inlined_call_operand.hbm [shape: f32[1,128], index: 11, kind: input, shape index: {}]
  %s12 = inlined_call_operand.hbm [shape: bf16[128,32], index: 12, kind: input, shape index: {}]
  %s13 = inlined_call_operand.hbm [shape: f32[1,32], index: 13, kind: input, shape index: {}]
  %s14 = inlined_call_operand.hbm [shape: f32[1,32], index: 14, kind: input, shape index: {}]
  %s15 = inlined_call_operand.hbm [shape: f32[1,32], index: 15, kind: input, shape index: {}]
  %s16 = inlined_call_operand.hbm [shape: bf16[32,32], index: 16, kind: input, shape index: {}]
  %s17 = inlined_call_operand.hbm [shape: f32[1,32], index: 17, kind: input, shape index: {}]
  %s18 = inlined_call_operand.hbm [shape: f32[2,5,32], index: 18, kind: output, shape index: {0}]
  %s19 = inlined_call_operand.hbm [shape: f32[2,5,32], index: 19, kind: output, shape index: {1}]
  %s20 = inlined_call_operand.hbm [shape: f32[2,5,32], index: 20, kind: output, shape index: {2}]
  %21 = xla_tuple %s18, %s19, %s20
  %s22 = sld [smem:[#allocation0]]
  $region193: #{dino_featurizer_forward.7} parent=0
    _
  %s24 = ssub.s32 1, %s22
  %s25 = scalar_select 0, %s24, %s22
  $region1: #{dino_featurizer_forward.7} parent=0
    #allocation2 [shape = 'u8[4096]{0}', space=vmem, size = 0x1000, scoped, tag = 'input window, operand 0']
    #allocation3 [shape = 's32[2]{0}', space=sflag, size = 0x8, scoped, tag = 'scoped memory for dino_featurizer_forward.7']
    #allocation4 [shape = 's32[2]{0}', space=sflag, size = 0x8, scoped, tag = 'scoped memory for dino_featurizer_forward.7']
    #allocation5 [shape = 'u8[4096]{0}', space=vmem, size = 0x1000, scoped, tag = 'input window, operand 1']
    #allocation6 [shape = 's32[2]{0}', space=sflag, size = 0x8, scoped, tag = 'scoped memory for dino_featurizer_forward.7']
    #allocation7 [shape = 'u8[512]{0}', space=vmem, size = 0x400, scoped, tag = 'input window, operand 2, single buffered']
    #allocation8 [shape = 'u8[512]{0}', space=vmem, size = 0x400, scoped, tag = 'input window, operand 3, single buffered']
    #allocation9 [shape = 's32[1]{0}', space=sflag, size = 0x4, scoped, tag = 'scoped memory for dino_featurizer_forward.7']
    #allocation10 [shape = 'u8[8192]{0}', space=vmem, size = 0x2000, scoped, tag = 'input window, operand 4, single buffered']
    #allocation11 [shape = 'u8[512]{0}', space=vmem, size = 0x400, scoped, tag = 'input window, operand 5, single buffered']
    #allocation12 [shape = 's32[1]{0}', space=sflag, size = 0x4, scoped, tag = 'scoped memory for dino_featurizer_forward.7']
    #allocation13 [shape = 'u8[8192]{0}', space=vmem, size = 0x2000, scoped, tag = 'input window, operand 6, single buffered']
    #allocation14 [shape = 'u8[512]{0}', space=vmem, size = 0x400, scoped, tag = 'input window, operand 7, single buffered']
    #allocation15 [shape = 's32[1]{0}', space=sflag, size = 0x4, scoped, tag = 'scoped memory for dino_featurizer_forward.7']
    #allocation16 [shape = 'u8[512]{0}', space=vmem, size = 0x400, scoped, tag = 'input window, operand 8, single buffered']
    #allocation17 [shape = 'u8[512]{0}', space=vmem, size = 0x400, scoped, tag = 'input window, operand 9, single buffered']
    #allocation18 [shape = 's32[1]{0}', space=sflag, size = 0x4, scoped, tag = 'scoped memory for dino_featurizer_forward.7']
    #allocation19 [shape = 'u8[8192]{0}', space=vmem, size = 0x2000, scoped, tag = 'input window, operand 10, single buffered']
    #allocation20 [shape = 'u8[512]{0}', space=vmem, size = 0x400, scoped, tag = 'input window, operand 11, single buffered']
    #allocation21 [shape = 's32[1]{0}', space=sflag, size = 0x4, scoped, tag = 'scoped memory for dino_featurizer_forward.7']
    #allocation22 [shape = 'u8[32768]{0}', space=vmem, size = 0x8000, scoped, tag = 'input window, operand 12, single buffered']
    #allocation23 [shape = 'u8[512]{0}', space=vmem, size = 0x400, scoped, tag = 'input window, operand 13, single buffered']
    #allocation24 [shape = 's32[1]{0}', space=sflag, size = 0x4, scoped, tag = 'scoped memory for dino_featurizer_forward.7']
    #allocation25 [shape = 'u8[512]{0}', space=vmem, size = 0x400, scoped, tag = 'input window, operand 14, single buffered']
    #allocation26 [shape = 'u8[512]{0}', space=vmem, size = 0x400, scoped, tag = 'input window, operand 15, single buffered']
    #allocation27 [shape = 's32[1]{0}', space=sflag, size = 0x4, scoped, tag = 'scoped memory for dino_featurizer_forward.7']
    #allocation28 [shape = 'u8[8192]{0}', space=vmem, size = 0x2000, scoped, tag = 'input window, operand 16, single buffered']
    #allocation29 [shape = 'u8[512]{0}', space=vmem, size = 0x400, scoped, tag = 'input window, operand 17, single buffered']
    #allocation30 [shape = 's32[1]{0}', space=sflag, size = 0x4, scoped, tag = 'scoped memory for dino_featurizer_forward.7']
    #allocation31 [shape = 'u8[8192]{0}', space=vmem, size = 0x2000, scoped, tag = 'output window, operand 0']
    #allocation32 [shape = 'u8[8192]{0}', space=vmem, size = 0x2000, scoped, tag = 'output window, operand 1']
    #allocation33 [shape = 's32[2]{0}', space=sflag, size = 0x8, scoped, tag = 'scoped memory for dino_featurizer_forward.7']
    #allocation34 [shape = 'u8[8192]{0}', space=vmem, size = 0x2000, scoped, tag = 'output window, operand 2']
    %26 = vsyncpa [#allocation3], 0
    %s27 = scalar_lea.sflag [#allocation3], 1
    %28 = vsyncpa %s27, 0
    %29 = vsyncpa [#allocation6], 0
    %s30 = scalar_lea.sflag [#allocation6], 1
    %31 = vsyncpa %s30, 0
    %32 = vsyncpa [#allocation9], 0
    %33 = vsyncpa [#allocation12], 0
    %34 = vsyncpa [#allocation15], 0
    %35 = vsyncpa [#allocation18], 0
    %36 = vsyncpa [#allocation21], 0
    %37 = vsyncpa [#allocation24], 0
    %38 = vsyncpa [#allocation27], 0
    %39 = vsyncpa [#allocation30], 0
    %40 = vsyncpa [#allocation4], 0
    %s41 = scalar_lea.sflag [#allocation4], 1
    %42 = vsyncpa %s41, 0
    %43 = vsyncpa [#allocation33], 0
    %s44 = scalar_lea.sflag [#allocation33], 1
    %45 = vsyncpa %s44, 0
    loop: start=0, step=1, limit=4
    $region2: #{dino_featurizer_forward.7} parent=1 // loop_pre_header
      _
    $region3: #{dino_featurizer_forward.7} parent=1 // loop_header
      %s47 = sphi 0, %s51
      %p48 = scmp.ge.s32.totalorder %s47, 4
      %s57 = sphi 0, %s59
      %s60 = sphi 0, %s57
      %s61 = sphi 0, %s60
      %s77 = sphi 0, %s61
      %s83 = sphi 0, %s85
      %s86 = sphi 0, %s83
      %s87 = sphi 0, %s86
      %s103 = sphi 0, %s87
      %s107 = sphi 0, %s107
      %s109 = sphi 0, %s107
      %s110 = sphi 0, %s109
      %s124 = sphi 0, %s110
      %s128 = sphi 0, %s128
      %s130 = sphi 0, %s128
      %s131 = sphi 0, %s130
      %s145 = sphi 0, %s131
      %s149 = sphi 0, %s149
      %s151 = sphi 0, %s149
      %s152 = sphi 0, %s151
      %s166 = sphi 0, %s152
      %s170 = sphi 0, %s170
      %s172 = sphi 0, %s170
      %s173 = sphi 0, %s172
      %s187 = sphi 0, %s173
      %s191 = sphi 0, %s191
      %s193 = sphi 0, %s191
      %s194 = sphi 0, %s193
      %s208 = sphi 0, %s194
      %s212 = sphi 0, %s212
      %s214 = sphi 0, %s212
      %s215 = sphi 0, %s214
      %s229 = sphi 0, %s215
      %s233 = sphi 0, %s233
      %s235 = sphi 0, %s233
      %s236 = sphi 0, %s235
      %s250 = sphi 0, %s236
      %s254 = sphi 0, %s254
      %s256 = sphi 0, %s254
      %s257 = sphi 0, %s256
      %s271 = sphi 0, %s257
      %s275 = sphi 0, %s275
      %s277 = sphi 0, %s275
      %s278 = sphi 0, %s277
      %s292 = sphi 0, %s278
      %s296 = sphi 0, %s296
      %s298 = sphi 0, %s296
      %s299 = sphi 0, %s298
      %s313 = sphi 0, %s299
      %s317 = sphi 0, %s317
      %s319 = sphi 0, %s317
      %s320 = sphi 0, %s319
      %s334 = sphi 0, %s320
      %s338 = sphi 0, %s338
      %s340 = sphi 0, %s338
      %s341 = sphi 0, %s340
      %s355 = sphi 0, %s341
      %s359 = sphi 0, %s359
      %s361 = sphi 0, %s359
      %s362 = sphi 0, %s361
      %s376 = sphi 0, %s362
      %s380 = sphi 0, %s380
      %s382 = sphi 0, %s380
      %s383 = sphi 0, %s382
      %s397 = sphi 0, %s383
      %s401 = sphi 0, %s401
      %s403 = sphi 0, %s401
      %s404 = sphi 0, %s403
      %s418 = sphi 0, %s404
      %s422 = sphi 0, %s422
      %s424 = sphi 0, %s422
      %s425 = sphi 0, %s424
      %s439 = sphi 0, %s425
      %s445 = sphi 0, %s447
      %s448 = sphi 0, %s445
      %s449 = sphi 0, %s448
      %s465 = sphi 0, %s449
      %s471 = sphi 0, %s473
      %s474 = sphi 0, %s471
      %s475 = sphi 0, %s474
      %s491 = sphi 0, %s475
      %s497 = sphi 0, %s499
      %s500 = sphi 0, %s497
      %s501 = sphi 0, %s500
      %s517 = sphi 0, %s501
    $region4: #{dino_featurizer_forward.7} parent=1 // loop_header_branch
      %50 = sbr.rel (%p48) target = $region8
    $region5: #{dino_featurizer_forward.7} parent=1 // loop_body
      %s52 = ssub.s32 %s47, 1
      %s53 = ssub.s32 %s47, 2
      %s54 = sadd.s32 %s47, 1
      %s55 = ssub.s32 %s47, %s54
      %p56 = scmp.eq.s32.totalorder %s55, 0
      %s58 = sadd.s32 %s57, 1
      %s59 = scalar_select %p56, %s57, %s58
      %p62 = pneg %p56
      %p63 = scmp.eq.s32.totalorder %s47, 1
      %p64 = por %p62, %p63
      %p65 = scmp.ne.s32.totalorder %s57, %s60
      %p66 = scmp.eq.s32.totalorder %s47, 0
      %p67 = por %p65, %p66
      %p68 = scmp.ne.s32.totalorder %s57, %s60
      %p69 = scmp.eq.s32.totalorder %s52, 1
      %p70 = por %p68, %p69
      %p71 = scmp.ne.s32.totalorder %s60, %s61
      %p72 = scmp.eq.s32.totalorder %s52, 0
      %p73 = por %p71, %p72
      %p74 = scmp.ne.s32.totalorder %s60, %s61
      %p75 = scmp.eq.s32.totalorder %s53, 1
      %p76 = por %p74, %p75
      %p78 = scmp.ne.s32.totalorder %s61, %s77
      %p79 = scmp.eq.s32.totalorder %s53, 0
      %p80 = por %p78, %p79
      %s81 = ssub.s32 %s47, %s54
      %p82 = scmp.eq.s32.totalorder %s81, 0
      %s84 = sadd.s32 %s83, 1
      %s85 = scalar_select %p82, %s83, %s84
      %p88 = pneg %p82
      %p89 = scmp.eq.s32.totalorder %s47, 1
      %p90 = por %p88, %p89
      %p91 = scmp.ne.s32.totalorder %s83, %s86
      %p92 = scmp.eq.s32.totalorder %s47, 0
      %p93 = por %p91, %p92
      %p94 = scmp.ne.s32.totalorder %s83, %s86
      %p95 = scmp.eq.s32.totalorder %s52, 1
      %p96 = por %p94, %p95
      %p97 = scmp.ne.s32.totalorder %s86, %s87
      %p98 = scmp.eq.s32.totalorder %s52, 0
      %p99 = por %p97, %p98
      %p100 = scmp.ne.s32.totalorder %s86, %s87
      %p101 = scmp.eq.s32.totalorder %s53, 1
      %p102 = por %p100, %p101
      %p104 = scmp.ne.s32.totalorder %s87, %s103
      %p105 = scmp.eq.s32.totalorder %s53, 0
      %p106 = por %p104, %p105
      %s108 = sadd.s32 %s107, 1
      %p111 = scmp.eq.s32.totalorder %s47, 1
      %p112 = scmp.ne.s32.totalorder %s107, %s109
      %p113 = scmp.eq.s32.totalorder %s47, 0
      %p114 = por %p112, %p113
      %p115 = scmp.ne.s32.totalorder %s107, %s109
      %p116 = scmp.eq.s32.totalorder %s52, 1
      %p117 = por %p115, %p116
      %p118 = scmp.ne.s32.totalorder %s109, %s110
      %p119 = scmp.eq.s32.totalorder %s52, 0
      %p120 = por %p118, %p119
      %p121 = scmp.ne.s32.totalorder %s109, %s110
      %p122 = scmp.eq.s32.totalorder %s53, 1
      %p123 = por %p121, %p122
      %p125 = scmp.ne.s32.totalorder %s110, %s124
      %p126 = scmp.eq.s32.totalorder %s53, 0
      %p127 = por %p125, %p126
      %s129 = sadd.s32 %s128, 1
      %p132 = scmp.eq.s32.totalorder %s47, 1
      %p133 = scmp.ne.s32.totalorder %s128, %s130
      %p134 = scmp.eq.s32.totalorder %s47, 0
      %p135 = por %p133, %p134
      %p136 = scmp.ne.s32.totalorder %s128, %s130
      %p137 = scmp.eq.s32.totalorder %s52, 1
      %p138 = por %p136, %p137
      %p139 = scmp.ne.s32.totalorder %s130, %s131
      %p140 = scmp.eq.s32.totalorder %s52, 0
      %p141 = por %p139, %p140
      %p142 = scmp.ne.s32.totalorder %s130, %s131
      %p143 = scmp.eq.s32.totalorder %s53, 1
      %p144 = por %p142, %p143
      %p146 = scmp.ne.s32.totalorder %s131, %s145
      %p147 = scmp.eq.s32.totalorder %s53, 0
      %p148 = por %p146, %p147
      %s150 = sadd.s32 %s149, 1
      %p153 = scmp.eq.s32.totalorder %s47, 1
      %p154 = scmp.ne.s32.totalorder %s149, %s151
      %p155 = scmp.eq.s32.totalorder %s47, 0
      %p156 = por %p154, %p155
      %p157 = scmp.ne.s32.totalorder %s149, %s151
      %p158 = scmp.eq.s32.totalorder %s52, 1
      %p159 = por %p157, %p158
      %p160 = scmp.ne.s32.totalorder %s151, %s152
      %p161 = scmp.eq.s32.totalorder %s52, 0
      %p162 = por %p160, %p161
      %p163 = scmp.ne.s32.totalorder %s151, %s152
      %p164 = scmp.eq.s32.totalorder %s53, 1
      %p165 = por %p163, %p164
      %p167 = scmp.ne.s32.totalorder %s152, %s166
      %p168 = scmp.eq.s32.totalorder %s53, 0
      %p169 = por %p167, %p168
      %s171 = sadd.s32 %s170, 1
      %p174 = scmp.eq.s32.totalorder %s47, 1
      %p175 = scmp.ne.s32.totalorder %s170, %s172
      %p176 = scmp.eq.s32.totalorder %s47, 0
      %p177 = por %p175, %p176
      %p178 = scmp.ne.s32.totalorder %s170, %s172
      %p179 = scmp.eq.s32.totalorder %s52, 1
      %p180 = por %p178, %p179
      %p181 = scmp.ne.s32.totalorder %s172, %s173
      %p182 = scmp.eq.s32.totalorder %s52, 0
      %p183 = por %p181, %p182
      %p184 = scmp.ne.s32.totalorder %s172, %s173
      %p185 = scmp.eq.s32.totalorder %s53, 1
      %p186 = por %p184, %p185
      %p188 = scmp.ne.s32.totalorder %s173, %s187
      %p189 = scmp.eq.s32.totalorder %s53, 0
      %p190 = por %p188, %p189
      %s192 = sadd.s32 %s191, 1
      %p195 = scmp.eq.s32.totalorder %s47, 1
      %p196 = scmp.ne.s32.totalorder %s191, %s193
      %p197 = scmp.eq.s32.totalorder %s47, 0
      %p198 = por %p196, %p197
      %p199 = scmp.ne.s32.totalorder %s191, %s193
      %p200 = scmp.eq.s32.totalorder %s52, 1
      %p201 = por %p199, %p200
      %p202 = scmp.ne.s32.totalorder %s193, %s194
      %p203 = scmp.eq.s32.totalorder %s52, 0
      %p204 = por %p202, %p203
      %p205 = scmp.ne.s32.totalorder %s193, %s194
      %p206 = scmp.eq.s32.totalorder %s53, 1
      %p207 = por %p205, %p206
      %p209 = scmp.ne.s32.totalorder %s194, %s208
      %p210 = scmp.eq.s32.totalorder %s53, 0
      %p211 = por %p209, %p210
      %s213 = sadd.s32 %s212, 1
      %p216 = scmp.eq.s32.totalorder %s47, 1
      %p217 = scmp.ne.s32.totalorder %s212, %s214
      %p218 = scmp.eq.s32.totalorder %s47, 0
      %p219 = por %p217, %p218
      %p220 = scmp.ne.s32.totalorder %s212, %s214
      %p221 = scmp.eq.s32.totalorder %s52, 1
      %p222 = por %p220, %p221
      %p223 = scmp.ne.s32.totalorder %s214, %s215
      %p224 = scmp.eq.s32.totalorder %s52, 0
      %p225 = por %p223, %p224
      %p226 = scmp.ne.s32.totalorder %s214, %s215
      %p227 = scmp.eq.s32.totalorder %s53, 1
      %p228 = por %p226, %p227
      %p230 = scmp.ne.s32.totalorder %s215, %s229
      %p231 = scmp.eq.s32.totalorder %s53, 0
      %p232 = por %p230, %p231
      %s234 = sadd.s32 %s233, 1
      %p237 = scmp.eq.s32.totalorder %s47, 1
      %p238 = scmp.ne.s32.totalorder %s233, %s235
      %p239 = scmp.eq.s32.totalorder %s47, 0
      %p240 = por %p238, %p239
      %p241 = scmp.ne.s32.totalorder %s233, %s235
      %p242 = scmp.eq.s32.totalorder %s52, 1
      %p243 = por %p241, %p242
      %p244 = scmp.ne.s32.totalorder %s235, %s236
      %p245 = scmp.eq.s32.totalorder %s52, 0
      %p246 = por %p244, %p245
      %p247 = scmp.ne.s32.totalorder %s235, %s236
      %p248 = scmp.eq.s32.totalorder %s53, 1
      %p249 = por %p247, %p248
      %p251 = scmp.ne.s32.totalorder %s236, %s250
      %p252 = scmp.eq.s32.totalorder %s53, 0
      %p253 = por %p251, %p252
      %s255 = sadd.s32 %s254, 1
      %p258 = scmp.eq.s32.totalorder %s47, 1
      %p259 = scmp.ne.s32.totalorder %s254, %s256
      %p260 = scmp.eq.s32.totalorder %s47, 0
      %p261 = por %p259, %p260
      %p262 = scmp.ne.s32.totalorder %s254, %s256
      %p263 = scmp.eq.s32.totalorder %s52, 1
      %p264 = por %p262, %p263
      %p265 = scmp.ne.s32.totalorder %s256, %s257
      %p266 = scmp.eq.s32.totalorder %s52, 0
      %p267 = por %p265, %p266
      %p268 = scmp.ne.s32.totalorder %s256, %s257
      %p269 = scmp.eq.s32.totalorder %s53, 1
      %p270 = por %p268, %p269
      %p272 = scmp.ne.s32.totalorder %s257, %s271
      %p273 = scmp.eq.s32.totalorder %s53, 0
      %p274 = por %p272, %p273
      %s276 = sadd.s32 %s275, 1
      %p279 = scmp.eq.s32.totalorder %s47, 1
      %p280 = scmp.ne.s32.totalorder %s275, %s277
      %p281 = scmp.eq.s32.totalorder %s47, 0
      %p282 = por %p280, %p281
      %p283 = scmp.ne.s32.totalorder %s275, %s277
      %p284 = scmp.eq.s32.totalorder %s52, 1
      %p285 = por %p283, %p284
      %p286 = scmp.ne.s32.totalorder %s277, %s278
      %p287 = scmp.eq.s32.totalorder %s52, 0
      %p288 = por %p286, %p287
      %p289 = scmp.ne.s32.totalorder %s277, %s278
      %p290 = scmp.eq.s32.totalorder %s53, 1
      %p291 = por %p289, %p290
      %p293 = scmp.ne.s32.totalorder %s278, %s292
      %p294 = scmp.eq.s32.totalorder %s53, 0
      %p295 = por %p293, %p294
      %s297 = sadd.s32 %s296, 1
      %p300 = scmp.eq.s32.totalorder %s47, 1
      %p301 = scmp.ne.s32.totalorder %s296, %s298
      %p302 = scmp.eq.s32.totalorder %s47, 0
      %p303 = por %p301, %p302
      %p304 = scmp.ne.s32.totalorder %s296, %s298
      %p305 = scmp.eq.s32.totalorder %s52, 1
      %p306 = por %p304, %p305
      %p307 = scmp.ne.s32.totalorder %s298, %s299
      %p308 = scmp.eq.s32.totalorder %s52, 0
      %p309 = por %p307, %p308
      %p310 = scmp.ne.s32.totalorder %s298, %s299
      %p311 = scmp.eq.s32.totalorder %s53, 1
      %p312 = por %p310, %p311
      %p314 = scmp.ne.s32.totalorder %s299, %s313
      %p315 = scmp.eq.s32.totalorder %s53, 0
      %p316 = por %p314, %p315
      %s318 = sadd.s32 %s317, 1
      %p321 = scmp.eq.s32.totalorder %s47, 1
      %p322 = scmp.ne.s32.totalorder %s317, %s319
      %p323 = scmp.eq.s32.totalorder %s47, 0
      %p324 = por %p322, %p323
      %p325 = scmp.ne.s32.totalorder %s317, %s319
      %p326 = scmp.eq.s32.totalorder %s52, 1
      %p327 = por %p325, %p326
      %p328 = scmp.ne.s32.totalorder %s319, %s320
      %p329 = scmp.eq.s32.totalorder %s52, 0
      %p330 = por %p328, %p329
      %p331 = scmp.ne.s32.totalorder %s319, %s320
      %p332 = scmp.eq.s32.totalorder %s53, 1
      %p333 = por %p331, %p332
      %p335 = scmp.ne.s32.totalorder %s320, %s334
      %p336 = scmp.eq.s32.totalorder %s53, 0
      %p337 = por %p335, %p336
      %s339 = sadd.s32 %s338, 1
      %p342 = scmp.eq.s32.totalorder %s47, 1
      %p343 = scmp.ne.s32.totalorder %s338, %s340
      %p344 = scmp.eq.s32.totalorder %s47, 0
      %p345 = por %p343, %p344
      %p346 = scmp.ne.s32.totalorder %s338, %s340
      %p347 = scmp.eq.s32.totalorder %s52, 1
      %p348 = por %p346, %p347
      %p349 = scmp.ne.s32.totalorder %s340, %s341
      %p350 = scmp.eq.s32.totalorder %s52, 0
      %p351 = por %p349, %p350
      %p352 = scmp.ne.s32.totalorder %s340, %s341
      %p353 = scmp.eq.s32.totalorder %s53, 1
      %p354 = por %p352, %p353
      %p356 = scmp.ne.s32.totalorder %s341, %s355
      %p357 = scmp.eq.s32.totalorder %s53, 0
      %p358 = por %p356, %p357
      %s360 = sadd.s32 %s359, 1
      %p363 = scmp.eq.s32.totalorder %s47, 1
      %p364 = scmp.ne.s32.totalorder %s359, %s361
      %p365 = scmp.eq.s32.totalorder %s47, 0
      %p366 = por %p364, %p365
      %p367 = scmp.ne.s32.totalorder %s359, %s361
      %p368 = scmp.eq.s32.totalorder %s52, 1
      %p369 = por %p367, %p368
      %p370 = scmp.ne.s32.totalorder %s361, %s362
      %p371 = scmp.eq.s32.totalorder %s52, 0
      %p372 = por %p370, %p371
      %p373 = scmp.ne.s32.totalorder %s361, %s362
      %p374 = scmp.eq.s32.totalorder %s53, 1
      %p375 = por %p373, %p374
      %p377 = scmp.ne.s32.totalorder %s362, %s376
      %p378 = scmp.eq.s32.totalorder %s53, 0
      %p379 = por %p377, %p378
      %s381 = sadd.s32 %s380, 1
      %p384 = scmp.eq.s32.totalorder %s47, 1
      %p385 = scmp.ne.s32.totalorder %s380, %s382
      %p386 = scmp.eq.s32.totalorder %s47, 0
      %p387 = por %p385, %p386
      %p388 = scmp.ne.s32.totalorder %s380, %s382
      %p389 = scmp.eq.s32.totalorder %s52, 1
      %p390 = por %p388, %p389
      %p391 = scmp.ne.s32.totalorder %s382, %s383
      %p392 = scmp.eq.s32.totalorder %s52, 0
      %p393 = por %p391, %p392
      %p394 = scmp.ne.s32.totalorder %s382, %s383
      %p395 = scmp.eq.s32.totalorder %s53, 1
      %p396 = por %p394, %p395
      %p398 = scmp.ne.s32.totalorder %s383, %s397
      %p399 = scmp.eq.s32.totalorder %s53, 0
      %p400 = por %p398, %p399
      %s402 = sadd.s32 %s401, 1
      %p405 = scmp.eq.s32.totalorder %s47, 1
      %p406 = scmp.ne.s32.totalorder %s401, %s403
      %p407 = scmp.eq.s32.totalorder %s47, 0
      %p408 = por %p406, %p407
      %p409 = scmp.ne.s32.totalorder %s401, %s403
      %p410 = scmp.eq.s32.totalorder %s52, 1
      %p411 = por %p409, %p410
      %p412 = scmp.ne.s32.totalorder %s403, %s404
      %p413 = scmp.eq.s32.totalorder %s52, 0
      %p414 = por %p412, %p413
      %p415 = scmp.ne.s32.totalorder %s403, %s404
      %p416 = scmp.eq.s32.totalorder %s53, 1
      %p417 = por %p415, %p416
      %p419 = scmp.ne.s32.totalorder %s404, %s418
      %p420 = scmp.eq.s32.totalorder %s53, 0
      %p421 = por %p419, %p420
      %s423 = sadd.s32 %s422, 1
      %p426 = scmp.eq.s32.totalorder %s47, 1
      %p427 = scmp.ne.s32.totalorder %s422, %s424
      %p428 = scmp.eq.s32.totalorder %s47, 0
      %p429 = por %p427, %p428
      %p430 = scmp.ne.s32.totalorder %s422, %s424
      %p431 = scmp.eq.s32.totalorder %s52, 1
      %p432 = por %p430, %p431
      %p433 = scmp.ne.s32.totalorder %s424, %s425
      %p434 = scmp.eq.s32.totalorder %s52, 0
      %p435 = por %p433, %p434
      %p436 = scmp.ne.s32.totalorder %s424, %s425
      %p437 = scmp.eq.s32.totalorder %s53, 1
      %p438 = por %p436, %p437
      %p440 = scmp.ne.s32.totalorder %s425, %s439
      %p441 = scmp.eq.s32.totalorder %s53, 0
      %p442 = por %p440, %p441
      %s443 = ssub.s32 %s47, %s54
      %p444 = scmp.eq.s32.totalorder %s443, 0
      %s446 = sadd.s32 %s445, 1
      %s447 = scalar_select %p444, %s445, %s446
      %p450 = pneg %p444
      %p451 = scmp.eq.s32.totalorder %s47, 1
      %p452 = por %p450, %p451
      %p453 = scmp.ne.s32.totalorder %s445, %s448
      %p454 = scmp.eq.s32.totalorder %s47, 0
      %p455 = por %p453, %p454
      %p456 = scmp.ne.s32.totalorder %s445, %s448
      %p457 = scmp.eq.s32.totalorder %s52, 1
      %p458 = por %p456, %p457
      %p459 = scmp.ne.s32.totalorder %s448, %s449
      %p460 = scmp.eq.s32.totalorder %s52, 0
      %p461 = por %p459, %p460
      %p462 = scmp.ne.s32.totalorder %s448, %s449
      %p463 = scmp.eq.s32.totalorder %s53, 1
      %p464 = por %p462, %p463
      %p466 = scmp.ne.s32.totalorder %s449, %s465
      %p467 = scmp.eq.s32.totalorder %s53, 0
      %p468 = por %p466, %p467
      %s469 = ssub.s32 %s47, %s54
      %p470 = scmp.eq.s32.totalorder %s469, 0
      %s472 = sadd.s32 %s471, 1
      %s473 = scalar_select %p470, %s471, %s472
      %p476 = pneg %p470
      %p477 = scmp.eq.s32.totalorder %s47, 1
      %p478 = por %p476, %p477
      %p479 = scmp.ne.s32.totalorder %s471, %s474
      %p480 = scmp.eq.s32.totalorder %s47, 0
      %p481 = por %p479, %p480
      %p482 = scmp.ne.s32.totalorder %s471, %s474
      %p483 = scmp.eq.s32.totalorder %s52, 1
      %p484 = por %p482, %p483
      %p485 = scmp.ne.s32.totalorder %s474, %s475
      %p486 = scmp.eq.s32.totalorder %s52, 0
      %p487 = por %p485, %p486
      %p488 = scmp.ne.s32.totalorder %s474, %s475
      %p489 = scmp.eq.s32.totalorder %s53, 1
      %p490 = por %p488, %p489
      %p492 = scmp.ne.s32.totalorder %s475, %s491
      %p493 = scmp.eq.s32.totalorder %s53, 0
      %p494 = por %p492, %p493
      %s495 = ssub.s32 %s47, %s54
      %p496 = scmp.eq.s32.totalorder %s495, 0
      %s498 = sadd.s32 %s497, 1
      %s499 = scalar_select %p496, %s497, %s498
      %p502 = pneg %p496
      %p503 = scmp.eq.s32.totalorder %s47, 1
      %p504 = por %p502, %p503
      %p505 = scmp.ne.s32.totalorder %s497, %s500
      %p506 = scmp.eq.s32.totalorder %s47, 0
      %p507 = por %p505, %p506
      %p508 = scmp.ne.s32.totalorder %s497, %s500
      %p509 = scmp.eq.s32.totalorder %s52, 1
      %p510 = por %p508, %p509
      %p511 = scmp.ne.s32.totalorder %s500, %s501
      %p512 = scmp.eq.s32.totalorder %s52, 0
      %p513 = por %p511, %p512
      %p514 = scmp.ne.s32.totalorder %s500, %s501
      %p515 = scmp.eq.s32.totalorder %s53, 1
      %p516 = por %p514, %p515
      %p518 = scmp.ne.s32.totalorder %s501, %s517
      %p519 = scmp.eq.s32.totalorder %s53, 0
      %p520 = por %p518, %p519
      %p521 = scmp.le.s32.totalorder 1, %s47
      %p522 = scmp.lt.s32.totalorder %s47, 3
      %p523 = pnand %p521, %p522
      %p524 = pneg %p523
      // Predicated region
      $region9: #{dino_featurizer_forward.7} parent=5 // pred_check
        _
      $region10: #{dino_featurizer_forward.7} parent=5 // pred_check_branch
        %526 = sbr.rel (%p523) target = $region12
      $region11: #{dino_featurizer_forward.7} parent=5 // pred_region
        %s527 = ssub.s32 %s47, 1
        // Predicated region
        $region13: #{dino_featurizer_forward.7} parent=11 // pred_check
          %p528 = pneg %p120
        $region14: #{dino_featurizer_forward.7} parent=11 // pred_check_branch
          %530 = sbr.rel (%p528) target = $region16
        $region15: #{dino_featurizer_forward.7} parent=11 // pred_region
          %s532 = ssub.s32 16, 16
          %533 = vsyncadd [#allocation6], %s532
          %s535 = sshll.u32 [#allocation7], 4
          %s536 = int_to_ptr.vmem [resolvable:$true] %s535
          %538 = dma.hbm_to_vmem [thread:$0]  %s2, 16, %s536, [#allocation6]
        $region16: #{dino_featurizer_forward.7} parent=11 // pred_fallthru
          _
        // Predicated region
        $region17: #{dino_featurizer_forward.7} parent=11 // pred_check
          %p539 = pneg %p141
        $region18: #{dino_featurizer_forward.7} parent=11 // pred_check_branch
          %541 = sbr.rel (%p539) target = $region20
        $region19: #{dino_featurizer_forward.7} parent=11 // pred_region
          %s543 = ssub.s32 16, 16
          %544 = vsyncadd [#allocation9], %s543
          %s546 = sshll.u32 [#allocation8], 4
          %s547 = int_to_ptr.vmem [resolvable:$true] %s546
          %549 = dma.hbm_to_vmem [thread:$0]  %s3, 16, %s547, [#allocation9]
        $region20: #{dino_featurizer_forward.7} parent=11 // pred_fallthru
          _
        // Predicated region
        $region21: #{dino_featurizer_forward.7} parent=11 // pred_check
          %p550 = pneg %p162
        $region22: #{dino_featurizer_forward.7} parent=11 // pred_check_branch
          %552 = sbr.rel (%p550) target = $region24
        $region23: #{dino_featurizer_forward.7} parent=11 // pred_region
          %s554 = ssub.s32 256, 256
          %555 = vsyncadd [#allocation9], %s554
          %s556 = sshll.u32 [#allocation10], 4
          %s557 = int_to_ptr.vmem [resolvable:$true] %s556
          %562 = dma.hbm_to_vmem [thread:$0]  %s4, 256, %s557, [#allocation9], 64, 64, 4
        $region24: #{dino_featurizer_forward.7} parent=11 // pred_fallthru
          _
        // Predicated region
        $region25: #{dino_featurizer_forward.7} parent=11 // pred_check
          %p563 = pneg %p183
        $region26: #{dino_featurizer_forward.7} parent=11 // pred_check_branch
          %565 = sbr.rel (%p563) target = $region28
        $region27: #{dino_featurizer_forward.7} parent=11 // pred_region
          %s567 = ssub.s32 16, 16
          %568 = vsyncadd [#allocation12], %s567
          %s570 = sshll.u32 [#allocation11], 4
          %s571 = int_to_ptr.vmem [resolvable:$true] %s570
          %573 = dma.hbm_to_vmem [thread:$0]  %s5, 16, %s571, [#allocation12]
        $region28: #{dino_featurizer_forward.7} parent=11 // pred_fallthru
          _
        // Predicated region
        $region29: #{dino_featurizer_forward.7} parent=11 // pred_check
          %p574 = pneg %p204
        $region30: #{dino_featurizer_forward.7} parent=11 // pred_check_branch
          %576 = sbr.rel (%p574) target = $region32
        $region31: #{dino_featurizer_forward.7} parent=11 // pred_region
          %s578 = ssub.s32 256, 256
          %579 = vsyncadd [#allocation12], %s578
          %s580 = sshll.u32 [#allocation13], 4
          %s581 = int_to_ptr.vmem [resolvable:$true] %s580
          %586 = dma.hbm_to_vmem [thread:$0]  %s6, 256, %s581, [#allocation12], 64, 64, 4
        $region32: #{dino_featurizer_forward.7} parent=11 // pred_fallthru
          _
        // Predicated region
        $region33: #{dino_featurizer_forward.7} parent=11 // pred_check
          %p587 = pneg %p225
        $region34: #{dino_featurizer_forward.7} parent=11 // pred_check_branch
          %589 = sbr.rel (%p587) target = $region36
        $region35: #{dino_featurizer_forward.7} parent=11 // pred_region
          %s591 = ssub.s32 16, 16
          %592 = vsyncadd [#allocation15], %s591
          %s594 = sshll.u32 [#allocation14], 4
          %s595 = int_to_ptr.vmem [resolvable:$true] %s594
          %597 = dma.hbm_to_vmem [thread:$0]  %s7, 16, %s595, [#allocation15]
        $region36: #{dino_featurizer_forward.7} parent=11 // pred_fallthru
          _
        // Predicated region
        $region37: #{dino_featurizer_forward.7} parent=11 // pred_check
          %p598 = pneg %p246
        $region38: #{dino_featurizer_forward.7} parent=11 // pred_check_branch
          %600 = sbr.rel (%p598) target = $region40
        $region39: #{dino_featurizer_forward.7} parent=11 // pred_region
          %s602 = ssub.s32 16, 16
          %603 = vsyncadd [#allocation15], %s602
          %s605 = sshll.u32 [#allocation16], 4
          %s606 = int_to_ptr.vmem [resolvable:$true] %s605
          %608 = dma.hbm_to_vmem [thread:$0]  %s8, 16, %s606, [#allocation15]
        $region40: #{dino_featurizer_forward.7} parent=11 // pred_fallthru
          _
        // Predicated region
        $region41: #{dino_featurizer_forward.7} parent=11 // pred_check
          %p609 = pneg %p267
        $region42: #{dino_featurizer_forward.7} parent=11 // pred_check_branch
          %611 = sbr.rel (%p609) target = $region44
        $region43: #{dino_featurizer_forward.7} parent=11 // pred_region
          %s613 = ssub.s32 16, 16
          %614 = vsyncadd [#allocation18], %s613
          %s616 = sshll.u32 [#allocation17], 4
          %s617 = int_to_ptr.vmem [resolvable:$true] %s616
          %619 = dma.hbm_to_vmem [thread:$0]  %s9, 16, %s617, [#allocation18]
        $region44: #{dino_featurizer_forward.7} parent=11 // pred_fallthru
          _
        // Predicated region
        $region45: #{dino_featurizer_forward.7} parent=11 // pred_check
          %p620 = pneg %p288
        $region46: #{dino_featurizer_forward.7} parent=11 // pred_check_branch
          %622 = sbr.rel (%p620) target = $region48
        $region47: #{dino_featurizer_forward.7} parent=11 // pred_region
          %s624 = ssub.s32 256, 256
          %625 = vsyncadd [#allocation18], %s624
          %s626 = sshll.u32 [#allocation19], 4
          %s627 = int_to_ptr.vmem [resolvable:$true] %s626
          %632 = dma.hbm_to_vmem [thread:$0]  %s10, 256, %s627, [#allocation18], 64, 64, 4
        $region48: #{dino_featurizer_forward.7} parent=11 // pred_fallthru
          _
        // Predicated region
        $region49: #{dino_featurizer_forward.7} parent=11 // pred_check
          %p633 = pneg %p309
        $region50: #{dino_featurizer_forward.7} parent=11 // pred_check_branch
          %635 = sbr.rel (%p633) target = $region52
        $region51: #{dino_featurizer_forward.7} parent=11 // pred_region
          %s637 = ssub.s32 16, 16
          %638 = vsyncadd [#allocation21], %s637
          %s640 = sshll.u32 [#allocation20], 4
          %s641 = int_to_ptr.vmem [resolvable:$true] %s640
          %643 = dma.hbm_to_vmem [thread:$0]  %s11, 16, %s641, [#allocation21]
        $region52: #{dino_featurizer_forward.7} parent=11 // pred_fallthru
          _
        // Predicated region
        $region53: #{dino_featurizer_forward.7} parent=11 // pred_check
          %p644 = pneg %p330
        $region54: #{dino_featurizer_forward.7} parent=11 // pred_check_branch
          %646 = sbr.rel (%p644) target = $region56
        $region55: #{dino_featurizer_forward.7} parent=11 // pred_region
          %s648 = ssub.s32 1024, 1024
          %649 = vsyncadd [#allocation21], %s648
          %s650 = sshll.u32 [#allocation22], 4
          %s651 = int_to_ptr.vmem [resolvable:$true] %s650
          %656 = dma.hbm_to_vmem [thread:$0]  %s12, 1024, %s651, [#allocation21], 64, 64, 4
        $region56: #{dino_featurizer_forward.7} parent=11 // pred_fallthru
          _
        // Predicated region
        $region57: #{dino_featurizer_forward.7} parent=11 // pred_check
          %p657 = pneg %p351
        $region58: #{dino_featurizer_forward.7} parent=11 // pred_check_branch
          %659 = sbr.rel (%p657) target = $region60
        $region59: #{dino_featurizer_forward.7} parent=11 // pred_region
          %s661 = ssub.s32 16, 16
          %662 = vsyncadd [#allocation24], %s661
          %s664 = sshll.u32 [#allocation23], 4
          %s665 = int_to_ptr.vmem [resolvable:$true] %s664
          %667 = dma.hbm_to_vmem [thread:$0]  %s13, 16, %s665, [#allocation24]
        $region60: #{dino_featurizer_forward.7} parent=11 // pred_fallthru
          _
        // Predicated region
        $region61: #{dino_featurizer_forward.7} parent=11 // pred_check
          %p668 = pneg %p372
        $region62: #{dino_featurizer_forward.7} parent=11 // pred_check_branch
          %670 = sbr.rel (%p668) target = $region64
        $region63: #{dino_featurizer_forward.7} parent=11 // pred_region
          %s672 = ssub.s32 16, 16
          %673 = vsyncadd [#allocation24], %s672
          %s675 = sshll.u32 [#allocation25], 4
          %s676 = int_to_ptr.vmem [resolvable:$true] %s675
          %678 = dma.hbm_to_vmem [thread:$0]  %s14, 16, %s676, [#allocation24]
        $region64: #{dino_featurizer_forward.7} parent=11 // pred_fallthru
          _
        // Predicated region
        $region65: #{dino_featurizer_forward.7} parent=11 // pred_check
          %p679 = pneg %p393
        $region66: #{dino_featurizer_forward.7} parent=11 // pred_check_branch
          %681 = sbr.rel (%p679) target = $region68
        $region67: #{dino_featurizer_forward.7} parent=11 // pred_region
          %s683 = ssub.s32 16, 16
          %684 = vsyncadd [#allocation27], %s683
          %s686 = sshll.u32 [#allocation26], 4
          %s687 = int_to_ptr.vmem [resolvable:$true] %s686
          %689 = dma.hbm_to_vmem [thread:$0]  %s15, 16, %s687, [#allocation27]
        $region68: #{dino_featurizer_forward.7} parent=11 // pred_fallthru
          _
        // Predicated region
        $region69: #{dino_featurizer_forward.7} parent=11 // pred_check
          %p690 = pneg %p414
        $region70: #{dino_featurizer_forward.7} parent=11 // pred_check_branch
          %692 = sbr.rel (%p690) target = $region72
        $region71: #{dino_featurizer_forward.7} parent=11 // pred_region
          %s694 = ssub.s32 256, 256
          %695 = vsyncadd [#allocation27], %s694
          %s696 = sshll.u32 [#allocation28], 4
          %s697 = int_to_ptr.vmem [resolvable:$true] %s696
          %702 = dma.hbm_to_vmem [thread:$0]  %s16, 256, %s697, [#allocation27], 64, 64, 4
        $region72: #{dino_featurizer_forward.7} parent=11 // pred_fallthru
          _
        // Predicated region
        $region73: #{dino_featurizer_forward.7} parent=11 // pred_check
          %p703 = pneg %p435
        $region74: #{dino_featurizer_forward.7} parent=11 // pred_check_branch
          %705 = sbr.rel (%p703) target = $region76
        $region75: #{dino_featurizer_forward.7} parent=11 // pred_region
          %s707 = ssub.s32 16, 16
          %708 = vsyncadd [#allocation30], %s707
          %s710 = sshll.u32 [#allocation29], 4
          %s711 = int_to_ptr.vmem [resolvable:$true] %s710
          %713 = dma.hbm_to_vmem [thread:$0]  %s17, 16, %s711, [#allocation30]
        $region76: #{dino_featurizer_forward.7} parent=11 // pred_fallthru
          _
      $region12: #{dino_featurizer_forward.7} parent=5 // pred_fallthru
        _
      %p714 = scmp.lt.s32.totalorder %s47, 2
      // Predicated region
      $region77: #{dino_featurizer_forward.7} parent=5 // pred_check
        %p715 = pneg %p714
      $region78: #{dino_featurizer_forward.7} parent=5 // pred_check_branch
        %717 = sbr.rel (%p715) target = $region80
      $region79: #{dino_featurizer_forward.7} parent=5 // pred_region
        // Predicated region
        $region81: #{dino_featurizer_forward.7} parent=79 // pred_check
          %p718 = pneg %p67
        $region82: #{dino_featurizer_forward.7} parent=79 // pred_check_branch
          %720 = sbr.rel (%p718) target = $region84
        $region83: #{dino_featurizer_forward.7} parent=79 // pred_region
          %s721 = sand.u32 %s57, 1
          %s722 = scalar_lea.sflag [#allocation3], %s721
          %s723 = sand.u32 %s57, 1
          %s724 = smul.addr %s723, 4
          %s725 = scalar_lea.vmem [#allocation2], %s724
          %s727 = ssub.s32 64, 64
          %728 = vsyncadd %s722, %s727
          %s729 = smul.addr %s47, 64
          %s730 = scalar_lea.hbm %s0, %s729
          %s732 = sshll.u32 %s725, 4
          %s733 = int_to_ptr.vmem [resolvable:$true] %s732
          %735 = dma.hbm_to_vmem [thread:$0]  %s730, 64, %s733, %s722
        $region84: #{dino_featurizer_forward.7} parent=79 // pred_fallthru
          _
        // Predicated region
        $region85: #{dino_featurizer_forward.7} parent=79 // pred_check
          %p736 = pneg %p93
        $region86: #{dino_featurizer_forward.7} parent=79 // pred_check_branch
          %738 = sbr.rel (%p736) target = $region88
        $region87: #{dino_featurizer_forward.7} parent=79 // pred_region
          %s739 = sand.u32 %s47, 1
          %s740 = scalar_lea.sflag [#allocation6], %s739
          %s741 = sand.u32 %s83, 1
          %s742 = smul.addr %s741, 4
          %s743 = scalar_lea.vmem [#allocation5], %s742
          %s745 = ssub.s32 64, 64
          %746 = vsyncadd %s740, %s745
          %s747 = smul.addr %s47, 64
          %s748 = scalar_lea.hbm %s1, %s747
          %s750 = sshll.u32 %s743, 4
          %s751 = int_to_ptr.vmem [resolvable:$true] %s750
          %753 = dma.hbm_to_vmem [thread:$0]  %s748, 64, %s751, %s740
        $region88: #{dino_featurizer_forward.7} parent=79 // pred_fallthru
          _
      $region80: #{dino_featurizer_forward.7} parent=5 // pred_fallthru
        _
      %p754 = scmp.le.s32.totalorder 1, %s47
      %p755 = scmp.lt.s32.totalorder %s47, 3
      %p756 = pnand %p754, %p755
      %p757 = pneg %p756
      // Predicated region
      $region89: #{dino_featurizer_forward.7} parent=5 // pred_check
        _
      $region90: #{dino_featurizer_forward.7} parent=5 // pred_check_branch
        %759 = sbr.rel (%p756) target = $region92
      $region91: #{dino_featurizer_forward.7} parent=5 // pred_region
        %s760 = ssub.s32 %s47, 1
        %s761 = sand.u32 %s60, 1
        %s762 = scalar_lea.sflag [#allocation3], %s761
        %s763 = sand.u32 %s60, 1
        %s764 = smul.addr %s763, 4
        %s765 = scalar_lea.vmem [#allocation2], %s764
        // Predicated region
        $region93: #{dino_featurizer_forward.7} parent=91 // pred_check
          %p766 = pneg %p73
        $region94: #{dino_featurizer_forward.7} parent=91 // pred_check_branch
          %768 = sbr.rel (%p766) target = $region96
        $region95: #{dino_featurizer_forward.7} parent=91 // pred_region
          %769 = dma.done %s762, 64
        $region96: #{dino_featurizer_forward.7} parent=91 // pred_fallthru
          _
        %s770 = sand.u32 %s52, 1
        %s771 = scalar_lea.sflag [#allocation6], %s770
        %s772 = sand.u32 %s86, 1
        %s773 = smul.addr %s772, 4
        %s774 = scalar_lea.vmem [#allocation5], %s773
        // Predicated region
        $region97: #{dino_featurizer_forward.7} parent=91 // pred_check
          %p775 = pneg %p99
        $region98: #{dino_featurizer_forward.7} parent=91 // pred_check_branch
          %777 = sbr.rel (%p775) target = $region100
        $region99: #{dino_featurizer_forward.7} parent=91 // pred_region
          %778 = dma.done %s771, 64
        $region100: #{dino_featurizer_forward.7} parent=91 // pred_fallthru
          _
        // Predicated region
        $region101: #{dino_featurizer_forward.7} parent=91 // pred_check
          %p779 = pneg %p120
        $region102: #{dino_featurizer_forward.7} parent=91 // pred_check_branch
          %781 = sbr.rel (%p779) target = $region104
        $region103: #{dino_featurizer_forward.7} parent=91 // pred_region
          %782 = dma.done [#allocation6], 16
        $region104: #{dino_featurizer_forward.7} parent=91 // pred_fallthru
          _
        // Predicated region
        $region105: #{dino_featurizer_forward.7} parent=91 // pred_check
          %p783 = pneg %p141
        $region106: #{dino_featurizer_forward.7} parent=91 // pred_check_branch
          %785 = sbr.rel (%p783) target = $region108
        $region107: #{dino_featurizer_forward.7} parent=91 // pred_region
          %786 = dma.done [#allocation9], 16
        $region108: #{dino_featurizer_forward.7} parent=91 // pred_fallthru
          _
        // Predicated region
        $region109: #{dino_featurizer_forward.7} parent=91 // pred_check
          %p787 = pneg %p162
        $region110: #{dino_featurizer_forward.7} parent=91 // pred_check_branch
          %789 = sbr.rel (%p787) target = $region112
        $region111: #{dino_featurizer_forward.7} parent=91 // pred_region
          %790 = dma.done [#allocation9], 256
        $region112: #{dino_featurizer_forward.7} parent=91 // pred_fallthru
          _
        // Predicated region
        $region113: #{dino_featurizer_forward.7} parent=91 // pred_check
          %p791 = pneg %p183
        $region114: #{dino_featurizer_forward.7} parent=91 // pred_check_branch
          %793 = sbr.rel (%p791) target = $region116
        $region115: #{dino_featurizer_forward.7} parent=91 // pred_region
          %794 = dma.done [#allocation12], 16
        $region116: #{dino_featurizer_forward.7} parent=91 // pred_fallthru
          _
        // Predicated region
        $region117: #{dino_featurizer_forward.7} parent=91 // pred_check
          %p795 = pneg %p204
        $region118: #{dino_featurizer_forward.7} parent=91 // pred_check_branch
          %797 = sbr.rel (%p795) target = $region120
        $region119: #{dino_featurizer_forward.7} parent=91 // pred_region
          %798 = dma.done [#allocation12], 256
        $region120: #{dino_featurizer_forward.7} parent=91 // pred_fallthru
          _
        // Predicated region
        $region121: #{dino_featurizer_forward.7} parent=91 // pred_check
          %p799 = pneg %p225
        $region122: #{dino_featurizer_forward.7} parent=91 // pred_check_branch
          %801 = sbr.rel (%p799) target = $region124
        $region123: #{dino_featurizer_forward.7} parent=91 // pred_region
          %802 = dma.done [#allocation15], 16
        $region124: #{dino_featurizer_forward.7} parent=91 // pred_fallthru
          _
        // Predicated region
        $region125: #{dino_featurizer_forward.7} parent=91 // pred_check
          %p803 = pneg %p246
        $region126: #{dino_featurizer_forward.7} parent=91 // pred_check_branch
          %805 = sbr.rel (%p803) target = $region128
        $region127: #{dino_featurizer_forward.7} parent=91 // pred_region
          %806 = dma.done [#allocation15], 16
        $region128: #{dino_featurizer_forward.7} parent=91 // pred_fallthru
          _
        // Predicated region
        $region129: #{dino_featurizer_forward.7} parent=91 // pred_check
          %p807 = pneg %p267
        $region130: #{dino_featurizer_forward.7} parent=91 // pred_check_branch
          %809 = sbr.rel (%p807) target = $region132
        $region131: #{dino_featurizer_forward.7} parent=91 // pred_region
          %810 = dma.done [#allocation18], 16
        $region132: #{dino_featurizer_forward.7} parent=91 // pred_fallthru
          _
        // Predicated region
        $region133: #{dino_featurizer_forward.7} parent=91 // pred_check
          %p811 = pneg %p288
        $region134: #{dino_featurizer_forward.7} parent=91 // pred_check_branch
          %813 = sbr.rel (%p811) target = $region136
        $region135: #{dino_featurizer_forward.7} parent=91 // pred_region
          %814 = dma.done [#allocation18], 256
        $region136: #{dino_featurizer_forward.7} parent=91 // pred_fallthru
          _
        // Predicated region
        $region137: #{dino_featurizer_forward.7} parent=91 // pred_check
          %p815 = pneg %p309
        $region138: #{dino_featurizer_forward.7} parent=91 // pred_check_branch
          %817 = sbr.rel (%p815) target = $region140
        $region139: #{dino_featurizer_forward.7} parent=91 // pred_region
          %818 = dma.done [#allocation21], 16
        $region140: #{dino_featurizer_forward.7} parent=91 // pred_fallthru
          _
        // Predicated region
        $region141: #{dino_featurizer_forward.7} parent=91 // pred_check
          %p819 = pneg %p330
        $region142: #{dino_featurizer_forward.7} parent=91 // pred_check_branch
          %821 = sbr.rel (%p819) target = $region144
        $region143: #{dino_featurizer_forward.7} parent=91 // pred_region
          %822 = dma.done [#allocation21], 1024
        $region144: #{dino_featurizer_forward.7} parent=91 // pred_fallthru
          _
        // Predicated region
        $region145: #{dino_featurizer_forward.7} parent=91 // pred_check
          %p823 = pneg %p351
        $region146: #{dino_featurizer_forward.7} parent=91 // pred_check_branch
          %825 = sbr.rel (%p823) target = $region148
        $region147: #{dino_featurizer_forward.7} parent=91 // pred_region
          %826 = dma.done [#allocation24], 16
        $region148: #{dino_featurizer_forward.7} parent=91 // pred_fallthru
          _
        // Predicated region
        $region149: #{dino_featurizer_forward.7} parent=91 // pred_check
          %p827 = pneg %p372
        $region150: #{dino_featurizer_forward.7} parent=91 // pred_check_branch
          %829 = sbr.rel (%p827) target = $region152
        $region151: #{dino_featurizer_forward.7} parent=91 // pred_region
          %830 = dma.done [#allocation24], 16
        $region152: #{dino_featurizer_forward.7} parent=91 // pred_fallthru
          _
        // Predicated region
        $region153: #{dino_featurizer_forward.7} parent=91 // pred_check
          %p831 = pneg %p393
        $region154: #{dino_featurizer_forward.7} parent=91 // pred_check_branch
          %833 = sbr.rel (%p831) target = $region156
        $region155: #{dino_featurizer_forward.7} parent=91 // pred_region
          %834 = dma.done [#allocation27], 16
        $region156: #{dino_featurizer_forward.7} parent=91 // pred_fallthru
          _
        // Predicated region
        $region157: #{dino_featurizer_forward.7} parent=91 // pred_check
          %p835 = pneg %p414
        $region158: #{dino_featurizer_forward.7} parent=91 // pred_check_branch
          %837 = sbr.rel (%p835) target = $region160
        $region159: #{dino_featurizer_forward.7} parent=91 // pred_region
          %838 = dma.done [#allocation27], 256
        $region160: #{dino_featurizer_forward.7} parent=91 // pred_fallthru
          _
        // Predicated region
        $region161: #{dino_featurizer_forward.7} parent=91 // pred_check
          %p839 = pneg %p435
        $region162: #{dino_featurizer_forward.7} parent=91 // pred_check_branch
          %841 = sbr.rel (%p839) target = $region164
        $region163: #{dino_featurizer_forward.7} parent=91 // pred_region
          %842 = dma.done [#allocation30], 16
        $region164: #{dino_featurizer_forward.7} parent=91 // pred_fallthru
          _
        %s843 = sand.u32 %s60, 1
        %s844 = scalar_lea.sflag [#allocation3], %s843
        %s845 = sand.u32 %s60, 1
        %s846 = smul.addr %s845, 4
        %s847 = scalar_lea.vmem [#allocation2], %s846
        %p848 = pneg %p73
        %p849 = pneg %p70
        %s850 = sand.u32 %s52, 1
        %s851 = scalar_lea.sflag [#allocation6], %s850
        %s852 = sand.u32 %s86, 1
        %s853 = smul.addr %s852, 4
        %s854 = scalar_lea.vmem [#allocation5], %s853
        %p855 = pneg %p99
        %p856 = pneg %p96
        %p857 = pneg %p120
        %p858 = pneg %p117
        %p859 = pneg %p141
        %p860 = pneg %p138
        %p861 = pneg %p162
        %p862 = pneg %p159
        %p863 = pneg %p183
        %p864 = pneg %p180
        %p865 = pneg %p204
        %p866 = pneg %p201
        %p867 = pneg %p225
        %p868 = pneg %p222
        %p869 = pneg %p246
        %p870 = pneg %p243
        %p871 = pneg %p267
        %p872 = pneg %p264
        %p873 = pneg %p288
        %p874 = pneg %p285
        %p875 = pneg %p309
        %p876 = pneg %p306
        %p877 = pneg %p330
        %p878 = pneg %p327
        %p879 = pneg %p351
        %p880 = pneg %p348
        %p881 = pneg %p372
        %p882 = pneg %p369
        %p883 = pneg %p393
        %p884 = pneg %p390
        %p885 = pneg %p414
        %p886 = pneg %p411
        %p887 = pneg %p435
        %p888 = pneg %p432
        %p889 = pneg %p461
        %p890 = pneg %p458
        %s891 = sand.u32 %s448, 1
        %s892 = scalar_lea.sflag [#allocation4], %s891
        %s893 = sand.u32 %s448, 1
        %s894 = smul.addr %s893, 8
        %s895 = scalar_lea.vmem [#allocation31], %s894
        %p896 = pneg %p487
        %p897 = pneg %p484
        %s898 = sand.u32 %s52, 1
        %s899 = scalar_lea.sflag [#allocation33], %s898
        %s900 = sand.u32 %s474, 1
        %s901 = smul.addr %s900, 8
        %s902 = scalar_lea.vmem [#allocation32], %s901
        %p903 = pneg %p513
        %p904 = pneg %p510
        %s905 = sand.u32 %s52, 1
        %s906 = scalar_lea.sflag [#allocation33], %s905
        %s907 = sand.u32 %s500, 1
        %s908 = smul.addr %s907, 8
        %s909 = scalar_lea.vmem [#allocation34], %s908
        %v911 = vld [vmem:[%s765] sm:$0x7]
        %v912 = vunpack.c.l.bf16 %v911
        %v913 = vld [vmem:[#allocation7] sm:$0x1]
        %v914 = vld [vmem:[#allocation8] sm:$0x1]
        %vm915 = vcmask 258048
        %v916 = vsel %vm915, %v912, 0.0
        %917 = vadd.xlane.f32.xlu0 %v916
        %v918 = vpop.xlane.xlu0 %917
        %v919 = vrcp.pop 32.0
        %v920 = vmul.f32 %v918, %v919
        %v921 = vsub.f32 %v912, %v920
        %v922 = vmul.f32 %v921, %v921
        %v923 = vsel %vm915, %v922, 0.0
        %924 = vadd.xlane.f32.xlu0 %v923
        %v925 = vpop.xlane.xlu0 %924
        %v926 = vmul.f32 %v925, %v919
        %v927 = vadd.f32 %v926, 1e-06
        %v928 = vrsqrt.pop %v927
        %v929 = vmul.f32 %v921, %v928
        %v931 = vlaneseq
        %v932 = vshrl.u32 %v931, 7
        %v933 = vsub.s32 0, %v932
        %v934 = vrot.slane %v913, %v933
        %v936 = vmul.f32 %v929, %v934
        %v938 = vlaneseq
        %v939 = vshrl.u32 %v938, 7
        %v940 = vsub.s32 0, %v939
        %v941 = vrot.slane %v914, %v940
        %v943 = vadd.f32 %v936, %v941
        %v944 = vpack.c.bf16 %v943, %v943
        %v945 = vld [vmem:[#allocation10] sm:$0xf]
        %v946 = vld [vmem:[#allocation10 + $0x4] sm:$0xf]
        %v947 = vld [vmem:[#allocation10 + $0x8] sm:$0xf]
        %v948 = vld [vmem:[#allocation10 + $0xc] sm:$0xf]
        %v949 = vld [vmem:[#allocation11] sm:$0x1]
        %v951 = vlaneseq
        %v952 = vshrl.u32 %v951, 7
        %v953 = vsub.s32 0, %v952
        %v954 = vrot.slane %v949, %v953
        %v960 = vunpack.c.l.b16 %v945
        %v961 = vunpack.c.l.b16 %v946
        %v962 = vunpack.c.l.b16 %v947
        %v963 = vunpack.c.l.b16 %v948
        %v964 = vpack.c.b16 %v961, %v960
        %v965 = vpack.c.b16 %v963, %v962
        %vm968 = vcmask 261120
        %v970 = vsel %vm968, %v944, 0
        %972 = vmatprep.subr.bf16.mxu0 0
        %973 = vmatpush1.bf16.msra.mxu0 %v964
        %974 = vmatprep.subr.bf16.mxu0 0
        %975 = vmatpush1.bf16.msra.mxu0 %v965
        %976 = vmatprep.subr.bf16.mxu0 0
        %977 = vmatpush1.bf16.msra.mxu0 0
        %978 = vmatprep.subr.bf16.mxu0 0
        %979 = vmatpush1.bf16.msra.mxu0 0
        %980 = vmatprep.subr.bf16.mxu0 0
        %981 = vmatpush1.bf16.msra.mxu0 0
        %982 = vmatprep.subr.bf16.mxu0 0
        %983 = vmatpush1.bf16.msra.mxu0 0
        %984 = vmatprep.subr.bf16.mxu0 0
        %985 = vmatpush1.bf16.msra.mxu0 0
        %986 = vmatprep.subr.bf16.mxu0 0
        %987 = vmatpush1.bf16.msra.mxu0 0
        %988 = vmatprep.subr.bf16.mxu0 0
        %989 = vmatpush1.bf16.msra.mxu0 0
        %990 = vmatprep.subr.bf16.mxu0 0
        %991 = vmatpush1.bf16.msra.mxu0 0
        %992 = vmatprep.subr.bf16.mxu0 0
        %993 = vmatpush1.bf16.msra.mxu0 0
        %994 = vmatprep.subr.bf16.mxu0 0
        %995 = vmatpush1.bf16.msra.mxu0 0
        %996 = vmatprep.subr.bf16.mxu0 0
        %997 = vmatpush1.bf16.msra.mxu0 0
        %998 = vmatprep.subr.bf16.mxu0 0
        %999 = vmatpush1.bf16.msra.mxu0 0
        %1000 = vmatprep.subr.bf16.mxu0 0
        %1001 = vmatpush1.bf16.msra.mxu0 0
        %1002 = vmatprep.subr.bf16.mxu0 0
        %1003 = vmatpush1.bf16.msra.mxu0 0
        %1004 = vmatprep.mubr.bf16.mxu0 0
        %1005 = vmatmul.mubr.bf16.gmra.mrb[0].mxu0 %v970
        %v1006 = vpop.f32.mrb[0].mxu0
        %v1007 = vadd.f32 %v954, %v1006
        %v1008 = vpop.f32.mrb[0].mxu0
        %v1009 = vpop.f32.mrb[0].mxu0
        %v1010 = vpop.f32.mrb[0].mxu0
        %1011 = vdwg.mxu0
        %v1012 = vmul.f32 %v1007, 0.25
        %v1013 = vpack.c.bf16 %v1012, %v1012
        %v1014 = vpack.c.bf16 %v1007, %v1007
        %1016 = vrot.lane.b32.xlu0 %v1014, 96
        %v1017 = vpop.permute.xlu0 %1016
        %vm1018 = vcmask 130048
        %v1020 = vsel %vm1018, %v1013, 0
        %v1023 = vsel %vm1018, %v1017, 0
        %1025 = vmatprep.subr.bf16.mxu0 0
        %1026 = vmatpush1.bf16.xpose.msra.mxu0 %v1023
        %1027 = vmatprep.subr.bf16.mxu0 0
        %1028 = vmatpush1.bf16.xpose.msra.mxu0 0
        %1029 = vmatprep.subr.bf16.mxu0 0
        %1030 = vmatpush1.bf16.xpose.msra.mxu0 0
        %1031 = vmatprep.subr.bf16.mxu0 0
        %1032 = vmatpush1.bf16.xpose.msra.mxu0 0
        %1033 = vmatprep.subr.bf16.mxu0 0
        %1034 = vmatpush1.bf16.xpose.msra.mxu0 0
        %1035 = vmatprep.subr.bf16.mxu0 0
        %1036 = vmatpush1.bf16.xpose.msra.mxu0 0
        %1037 = vmatprep.subr.bf16.mxu0 0
        %1038 = vmatpush1.bf16.xpose.msra.mxu0 0
        %1039 = vmatprep.subr.bf16.mxu0 0
        %1040 = vmatpush1.bf16.xpose.msra.mxu0 0
        %1041 = vmatprep.subr.bf16.mxu0 0
        %1042 = vmatpush1.bf16.xpose.msra.mxu0 0
        %1043 = vmatprep.subr.bf16.mxu0 0
        %1044 = vmatpush1.bf16.xpose.msra.mxu0 0
        %1045 = vmatprep.subr.bf16.mxu0 0
        %1046 = vmatpush1.bf16.xpose.msra.mxu0 0
        %1047 = vmatprep.subr.bf16.mxu0 0
        %1048 = vmatpush1.bf16.xpose.msra.mxu0 0
        %1049 = vmatprep.subr.bf16.mxu0 0
        %1050 = vmatpush1.bf16.xpose.msra.mxu0 0
        %1051 = vmatprep.subr.bf16.mxu0 0
        %1052 = vmatpush1.bf16.xpose.msra.mxu0 0
        %1053 = vmatprep.subr.bf16.mxu0 0
        %1054 = vmatpush1.bf16.xpose.msra.mxu0 0
        %1055 = vmatprep.subr.bf16.mxu0 0
        %1056 = vmatpush1.bf16.xpose.msra.mxu0 0
        %1057 = vmatprep.mubr.bf16.mxu0 0
        %1058 = vmatmul.mubr.bf16.gmra.mrb[0].mxu0 %v1020
        %v1059 = vpop.f32.mrb[0].mxu0
        %v1060 = vadd.f32 0.0, %v1059
        %v1061 = vpop.f32.mrb[0].mxu0
        %v1062 = vpop.f32.mrb[0].mxu0
        %v1063 = vpop.f32.mrb[0].mxu0
        %1064 = vdwg.mxu0
        %vm1065 = vcmask 36864
        %v1066 = vsel %vm1065, %v1060, -inf
        %1067 = vmax.xlane.f32.xlu0 %v1066
        %v1068 = vpop.xlane.xlu0 %1067
        %v1069 = vsub.f32 %v1060, %v1068
        %v1070 = vmul.f32 %v1069, 1.442695
        %v1071 = vpow.pop %v1070
        %v1072 = vsel %vm1065, %v1071, 0.0
        %1073 = vadd.xlane.f32.xlu0 %v1072
        %v1074 = vpop.xlane.xlu0 %1073
        %v1075 = vpack.c.bf16 %v1071, %v1071
        %1076 = vrot.lane.b32.xlu0 %v1014, 64
        %v1077 = vpop.permute.xlu0 %1076
        %vm1078 = vcmask 39936
        %v1080 = vsel %vm1078, %v1075, 0
        %vm1082 = vcmask 1041408
        %vm1083 = vcmask 1042432
        %v1084 = vsel %vm1082, 4294967295, 65535
        %v1085 = vsel %vm1083, %v1084, 0
        %v1087 = vand.u32 %v1077, %v1085
        %1089 = vmatprep.subr.bf16.mxu0 0
        %1090 = vmatpush1.bf16.msra.mxu0 %v1087
        %1091 = vmatprep.subr.bf16.mxu0 0
        %1092 = vmatpush1.bf16.msra.mxu0 0
        %1093 = vmatprep.subr.bf16.mxu0 0
        %1094 = vmatpush1.bf16.msra.mxu0 0
        %1095 = vmatprep.subr.bf16.mxu0 0
        %1096 = vmatpush1.bf16.msra.mxu0 0
        %1097 = vmatprep.subr.bf16.mxu0 0
        %1098 = vmatpush1.bf16.msra.mxu0 0
        %1099 = vmatprep.subr.bf16.mxu0 0
        %1100 = vmatpush1.bf16.msra.mxu0 0
        %1101 = vmatprep.subr.bf16.mxu0 0
        %1102 = vmatpush1.bf16.msra.mxu0 0
        %1103 = vmatprep.subr.bf16.mxu0 0
        %1104 = vmatpush1.bf16.msra.mxu0 0
        %1105 = vmatprep.subr.bf16.mxu0 0
        %1106 = vmatpush1.bf16.msra.mxu0 0
        %1107 = vmatprep.subr.bf16.mxu0 0
        %1108 = vmatpush1.bf16.msra.mxu0 0
        %1109 = vmatprep.subr.bf16.mxu0 0
        %1110 = vmatpush1.bf16.msra.mxu0 0
        %1111 = vmatprep.subr.bf16.mxu0 0
        %1112 = vmatpush1.bf16.msra.mxu0 0
        %1113 = vmatprep.subr.bf16.mxu0 0
        %1114 = vmatpush1.bf16.msra.mxu0 0
        %1115 = vmatprep.subr.bf16.mxu0 0
        %1116 = vmatpush1.bf16.msra.mxu0 0
        %1117 = vmatprep.subr.bf16.mxu0 0
        %1118 = vmatpush1.bf16.msra.mxu0 0
        %1119 = vmatprep.subr.bf16.mxu0 0
        %1120 = vmatpush1.bf16.msra.mxu0 0
        %1121 = vmatprep.mubr.bf16.mxu0 0
        %1122 = vmatmul.mubr.bf16.gmra.mrb[0].mxu0 %v1080
        %v1123 = vpop.f32.mrb[0].mxu0
        %v1124 = vadd.f32 0.0, %v1123
        %v1125 = vpop.f32.mrb[0].mxu0
        %v1126 = vpop.f32.mrb[0].mxu0
        %v1127 = vpop.f32.mrb[0].mxu0
        %1128 = vdwg.mxu0
        %v1129 = vrcp.pop %v1074
        %v1130 = vmul.f32 %v1124, %v1129
        %v1131 = vpack.c.bf16 %v1130, %v1130
        %1133 = vrot.lane.b32.xlu0 %v1013, 112
        %v1134 = vpop.permute.xlu0 %1133
        %1135 = vrot.lane.b32.xlu0 %v1014, 80
        %v1136 = vpop.permute.xlu0 %1135
        %v1138 = vsel %vm1018, %v1134, 0
        %v1141 = vsel %vm1018, %v1136, 0
        %1143 = vmatprep.subr.bf16.mxu0 0
        %1144 = vmatpush1.bf16.xpose.msra.mxu0 %v1141
        %1145 = vmatprep.subr.bf16.mxu0 0
        %1146 = vmatpush1.bf16.xpose.msra.mxu0 0
        %1147 = vmatprep.subr.bf16.mxu0 0
        %1148 = vmatpush1.bf16.xpose.msra.mxu0 0
        %1149 = vmatprep.subr.bf16.mxu0 0
        %1150 = vmatpush1.bf16.xpose.msra.mxu0 0
        %1151 = vmatprep.subr.bf16.mxu0 0
        %1152 = vmatpush1.bf16.xpose.msra.mxu0 0
        %1153 = vmatprep.subr.bf16.mxu0 0
        %1154 = vmatpush1.bf16.xpose.msra.mxu0 0
        %1155 = vmatprep.subr.bf16.mxu0 0
        %1156 = vmatpush1.bf16.xpose.msra.mxu0 0
        %1157 = vmatprep.subr.bf16.mxu0 0
        %1158 = vmatpush1.bf16.xpose.msra.mxu0 0
        %1159 = vmatprep.subr.bf16.mxu0 0
        %1160 = vmatpush1.bf16.xpose.msra.mxu0 0
        %1161 = vmatprep.subr.bf16.mxu0 0
        %1162 = vmatpush1.bf16.xpose.msra.mxu0 0
        %1163 = vmatprep.subr.bf16.mxu0 0
        %1164 = vmatpush1.bf16.xpose.msra.mxu0 0
        %1165 = vmatprep.subr.bf16.mxu0 0
        %1166 = vmatpush1.bf16.xpose.msra.mxu0 0
        %1167 = vmatprep.subr.bf16.mxu0 0
        %1168 = vmatpush1.bf16.xpose.msra.mxu0 0
        %1169 = vmatprep.subr.bf16.mxu0 0
        %1170 = vmatpush1.bf16.xpose.msra.mxu0 0
        %1171 = vmatprep.subr.bf16.mxu0 0
        %1172 = vmatpush1.bf16.xpose.msra.mxu0 0
        %1173 = vmatprep.subr.bf16.mxu0 0
        %1174 = vmatpush1.bf16.xpose.msra.mxu0 0
        %1175 = vmatprep.mubr.bf16.mxu0 0
        %1176 = vmatmul.mubr.bf16.gmra.mrb[0].mxu0 %v1138
        %v1177 = vpop.f32.mrb[0].mxu0
        %v1178 = vadd.f32 0.0, %v1177
        %v1179 = vpop.f32.mrb[0].mxu0
        %v1180 = vpop.f32.mrb[0].mxu0
        %v1181 = vpop.f32.mrb[0].mxu0
        %1182 = vdwg.mxu0
        %v1183 = vsel %vm1065, %v1178, -inf
        %1184 = vmax.xlane.f32.xlu0 %v1183
        %v1185 = vpop.xlane.xlu0 %1184
        %v1186 = vsub.f32 %v1178, %v1185
        %v1187 = vmul.f32 %v1186, 1.442695
        %v1188 = vpow.pop %v1187
        %v1189 = vsel %vm1065, %v1188, 0.0
        %1190 = vadd.xlane.f32.xlu0 %v1189
        %v1191 = vpop.xlane.xlu0 %1190
        %v1192 = vpack.c.bf16 %v1188, %v1188
        %1193 = vrot.lane.b32.xlu0 %v1014, 48
        %v1194 = vpop.permute.xlu0 %1193
        %v1196 = vsel %vm1078, %v1192, 0
        %v1199 = vand.u32 %v1194, %v1085
        %1201 = vmatprep.subr.bf16.mxu0 0
        %1202 = vmatpush1.bf16.msra.mxu0 %v1199
        %1203 = vmatprep.subr.bf16.mxu0 0
        %1204 = vmatpush1.bf16.msra.mxu0 0
        %1205 = vmatprep.subr.bf16.mxu0 0
        %1206 = vmatpush1.bf16.msra.mxu0 0
        %1207 = vmatprep.subr.bf16.mxu0 0
        %1208 = vmatpush1.bf16.msra.mxu0 0
        %1209 = vmatprep.subr.bf16.mxu0 0
        %1210 = vmatpush1.bf16.msra.mxu0 0
        %1211 = vmatprep.subr.bf16.mxu0 0
        %1212 = vmatpush1.bf16.msra.mxu0 0
        %1213 = vmatprep.subr.bf16.mxu0 0
        %1214 = vmatpush1.bf16.msra.mxu0 0
        %1215 = vmatprep.subr.bf16.mxu0 0
        %1216 = vmatpush1.bf16.msra.mxu0 0
        %1217 = vmatprep.subr.bf16.mxu0 0
        %1218 = vmatpush1.bf16.msra.mxu0 0
        %1219 = vmatprep.subr.bf16.mxu0 0
        %1220 = vmatpush1.bf16.msra.mxu0 0
        %1221 = vmatprep.subr.bf16.mxu0 0
        %1222 = vmatpush1.bf16.msra.mxu0 0
        %1223 = vmatprep.subr.bf16.mxu0 0
        %1224 = vmatpush1.bf16.msra.mxu0 0
        %1225 = vmatprep.subr.bf16.mxu0 0
        %1226 = vmatpush1.bf16.msra.mxu0 0
        %1227 = vmatprep.subr.bf16.mxu0 0
        %1228 = vmatpush1.bf16.msra.mxu0 0
        %1229 = vmatprep.subr.bf16.mxu0 0
        %1230 = vmatpush1.bf16.msra.mxu0 0
        %1231 = vmatprep.subr.bf16.mxu0 0
        %1232 = vmatpush1.bf16.msra.mxu0 0
        %1233 = vmatprep.mubr.bf16.mxu0 0
        %1234 = vmatmul.mubr.bf16.gmra.mrb[0].mxu0 %v1196
        %v1235 = vpop.f32.mrb[0].mxu0
        %v1236 = vadd.f32 0.0, %v1235
        %v1237 = vpop.f32.mrb[0].mxu0
        %v1238 = vpop.f32.mrb[0].mxu0
        %v1239 = vpop.f32.mrb[0].mxu0
        %1240 = vdwg.mxu0
        %v1241 = vrcp.pop %v1191
        %v1242 = vmul.f32 %v1236, %v1241
        %v1243 = vpack.c.bf16 %v1242, %v1242
        %1245 = vrot.lane.b32.xlu0 %v1243, 16
        %v1246 = vpop.permute.xlu0 %1245
        %v1249 = vsel %vm1018, %v1131, %v1246
        %v1250 = vld [vmem:[#allocation13] sm:$0xf]
        %v1251 = vld [vmem:[#allocation13 + $0x4] sm:$0xf]
        %v1252 = vld [vmem:[#allocation13 + $0x8] sm:$0xf]
        %v1253 = vld [vmem:[#allocation13 + $0xc] sm:$0xf]
        %v1254 = vld [vmem:[#allocation14] sm:$0x1]
        %v1256 = vlaneseq
        %v1257 = vshrl.u32 %v1256, 7
        %v1258 = vsub.s32 0, %v1257
        %v1259 = vrot.slane %v1254, %v1258
        %v1265 = vunpack.c.l.b16 %v1250
        %v1266 = vunpack.c.l.b16 %v1251
        %v1267 = vunpack.c.l.b16 %v1252
        %v1268 = vunpack.c.l.b16 %v1253
        %v1269 = vpack.c.b16 %v1266, %v1265
        %v1270 = vpack.c.b16 %v1268, %v1267
        %v1273 = vsel %vm968, %v1249, 0
        %1275 = vmatprep.subr.bf16.mxu0 0
        %1276 = vmatpush1.bf16.msra.mxu0 %v1269
        %1277 = vmatprep.subr.bf16.mxu0 0
        %1278 = vmatpush1.bf16.msra.mxu0 %v1270
        %1279 = vmatprep.subr.bf16.mxu0 0
        %1280 = vmatpush1.bf16.msra.mxu0 0
        %1281 = vmatprep.subr.bf16.mxu0 0
        %1282 = vmatpush1.bf16.msra.mxu0 0
        %1283 = vmatprep.subr.bf16.mxu0 0
        %1284 = vmatpush1.bf16.msra.mxu0 0
        %1285 = vmatprep.subr.bf16.mxu0 0
        %1286 = vmatpush1.bf16.msra.mxu0 0
        %1287 = vmatprep.subr.bf16.mxu0 0
        %1288 = vmatpush1.bf16.msra.mxu0 0
        %1289 = vmatprep.subr.bf16.mxu0 0
        %1290 = vmatpush1.bf16.msra.mxu0 0
        %1291 = vmatprep.subr.bf16.mxu0 0
        %1292 = vmatpush1.bf16.msra.mxu0 0
        %1293 = vmatprep.subr.bf16.mxu0 0
        %1294 = vmatpush1.bf16.msra.mxu0 0
        %1295 = vmatprep.subr.bf16.mxu0 0
        %1296 = vmatpush1.bf16.msra.mxu0 0
        %1297 = vmatprep.subr.bf16.mxu0 0
        %1298 = vmatpush1.bf16.msra.mxu0 0
        %1299 = vmatprep.subr.bf16.mxu0 0
        %1300 = vmatpush1.bf16.msra.mxu0 0
        %1301 = vmatprep.subr.bf16.mxu0 0
        %1302 = vmatpush1.bf16.msra.mxu0 0
        %1303 = vmatprep.subr.bf16.mxu0 0
        %1304 = vmatpush1.bf16.msra.mxu0 0
        %1305 = vmatprep.subr.bf16.mxu0 0
        %1306 = vmatpush1.bf16.msra.mxu0 0
        %1307 = vmatprep.mubr.bf16.mxu0 0
        %1308 = vmatmul.mubr.bf16.gmra.mrb[0].mxu0 %v1273
        %v1309 = vpop.f32.mrb[0].mxu0
        %v1310 = vadd.f32 %v1259, %v1309
        %v1311 = vpop.f32.mrb[0].mxu0
        %v1312 = vpop.f32.mrb[0].mxu0
        %v1313 = vpop.f32.mrb[0].mxu0
        %1314 = vdwg.mxu0
        %v1315 = vadd.f32 %v912, %v1310
        %v1316 = vld [vmem:[#allocation16] sm:$0x1]
        %v1317 = vld [vmem:[#allocation17] sm:$0x1]
        %v1318 = vsel %vm915, %v1315, 0.0
        %1319 = vadd.xlane.f32.xlu0 %v1318
        %v1320 = vpop.xlane.xlu0 %1319
        %v1321 = vmul.f32 %v1320, %v919
        %v1322 = vsub.f32 %v1315, %v1321
        %v1323 = vmul.f32 %v1322, %v1322
        %v1324 = vsel %vm915, %v1323, 0.0
        %1325 = vadd.xlane.f32.xlu0 %v1324
        %v1326 = vpop.xlane.xlu0 %1325
        %v1327 = vmul.f32 %v1326, %v919
        %v1328 = vadd.f32 %v1327, 1e-06
        %v1329 = vrsqrt.pop %v1328
        %v1330 = vmul.f32 %v1322, %v1329
        %v1332 = vlaneseq
        %v1333 = vshrl.u32 %v1332, 7
        %v1334 = vsub.s32 0, %v1333
        %v1335 = vrot.slane %v1316, %v1334
        %v1337 = vmul.f32 %v1330, %v1335
        %v1339 = vlaneseq
        %v1340 = vshrl.u32 %v1339, 7
        %v1341 = vsub.s32 0, %v1340
        %v1342 = vrot.slane %v1317, %v1341
        %v1344 = vadd.f32 %v1337, %v1342
        %v1345 = vpack.c.bf16 %v1344, %v1344
        %v1346 = vld [vmem:[#allocation19] sm:$0xf]
        %v1347 = vld [vmem:[#allocation19 + $0x4] sm:$0xf]
        %v1348 = vld [vmem:[#allocation19 + $0x8] sm:$0xf]
        %v1349 = vld [vmem:[#allocation19 + $0xc] sm:$0xf]
        %v1350 = vld [vmem:[#allocation20] sm:$0x1]
        %v1352 = vlaneseq
        %v1353 = vshrl.u32 %v1352, 7
        %v1354 = vsub.s32 0, %v1353
        %v1355 = vrot.slane %v1350, %v1354
        %v1361 = vunpack.c.l.b16 %v1346
        %v1362 = vunpack.c.l.b16 %v1347
        %v1363 = vunpack.c.l.b16 %v1348
        %v1364 = vunpack.c.l.b16 %v1349
        %v1365 = vpack.c.b16 %v1362, %v1361
        %v1366 = vpack.c.b16 %v1364, %v1363
        %v1370 = vsel %vm968, %v1345, 0
        %1372 = vmatprep.subr.bf16.mxu0 0
        %1373 = vmatpush1.bf16.msra.mxu0 %v1365
        %1374 = vmatprep.subr.bf16.mxu0 0
        %1375 = vmatpush1.bf16.msra.mxu0 %v1366
        %1376 = vmatprep.subr.bf16.mxu0 0
        %1377 = vmatpush1.bf16.msra.mxu0 0
        %1378 = vmatprep.subr.bf16.mxu0 0
        %1379 = vmatpush1.bf16.msra.mxu0 0
        %1380 = vmatprep.subr.bf16.mxu0 0
        %1381 = vmatpush1.bf16.msra.mxu0 0
        %1382 = vmatprep.subr.bf16.mxu0 0
        %1383 = vmatpush1.bf16.msra.mxu0 0
        %1384 = vmatprep.subr.bf16.mxu0 0
        %1385 = vmatpush1.bf16.msra.mxu0 0
        %1386 = vmatprep.subr.bf16.mxu0 0
        %1387 = vmatpush1.bf16.msra.mxu0 0
        %1388 = vmatprep.subr.bf16.mxu0 0
        %1389 = vmatpush1.bf16.msra.mxu0 0
        %1390 = vmatprep.subr.bf16.mxu0 0
        %1391 = vmatpush1.bf16.msra.mxu0 0
        %1392 = vmatprep.subr.bf16.mxu0 0
        %1393 = vmatpush1.bf16.msra.mxu0 0
        %1394 = vmatprep.subr.bf16.mxu0 0
        %1395 = vmatpush1.bf16.msra.mxu0 0
        %1396 = vmatprep.subr.bf16.mxu0 0
        %1397 = vmatpush1.bf16.msra.mxu0 0
        %1398 = vmatprep.subr.bf16.mxu0 0
        %1399 = vmatpush1.bf16.msra.mxu0 0
        %1400 = vmatprep.subr.bf16.mxu0 0
        %1401 = vmatpush1.bf16.msra.mxu0 0
        %1402 = vmatprep.subr.bf16.mxu0 0
        %1403 = vmatpush1.bf16.msra.mxu0 0
        %1404 = vmatprep.mubr.bf16.mxu0 0
        %1405 = vmatmul.mubr.bf16.gmra.mrb[0].mxu0 %v1370
        %v1406 = vpop.f32.mrb[0].mxu0
        %v1407 = vadd.f32 %v1355, %v1406
        %v1408 = vpop.f32.mrb[0].mxu0
        %v1409 = vpop.f32.mrb[0].mxu0
        %v1410 = vpop.f32.mrb[0].mxu0
        %1411 = vdwg.mxu0
        %v1412 = vmul.f32 %v1407, %v1407
        %v1413 = vmul.f32 %v1407, %v1412
        %v1414 = vmul.f32 %v1413, 0.044715
        %v1415 = vadd.f32 %v1407, %v1414
        %v1416 = vmul.f32 %v1415, 0.7978846
        %v1417 = vtanh.pop %v1416
        %v1418 = vadd.f32 %v1417, 1.0
        %v1419 = vmul.f32 %v1418, 0.5
        %v1420 = vmul.f32 %v1407, %v1419
        %v1421 = vpack.c.bf16 %v1420, %v1420
        %v1422 = vld [vmem:[#allocation22] sm:$0xf]
        %v1423 = vld [vmem:[#allocation22 + $0x4] sm:$0xf]
        %v1424 = vld [vmem:[#allocation22 + $0x8] sm:$0xf]
        %v1425 = vld [vmem:[#allocation22 + $0xc] sm:$0xf]
        %v1426 = vld [vmem:[#allocation22 + $0x10] sm:$0xf]
        %v1427 = vld [vmem:[#allocation22 + $0x14] sm:$0xf]
        %v1428 = vld [vmem:[#allocation22 + $0x18] sm:$0xf]
        %v1429 = vld [vmem:[#allocation22 + $0x1c] sm:$0xf]
        %v1430 = vld [vmem:[#allocation22 + $0x20] sm:$0xf]
        %v1431 = vld [vmem:[#allocation22 + $0x24] sm:$0xf]
        %v1432 = vld [vmem:[#allocation22 + $0x28] sm:$0xf]
        %v1433 = vld [vmem:[#allocation22 + $0x2c] sm:$0xf]
        %v1434 = vld [vmem:[#allocation22 + $0x30] sm:$0xf]
        %v1435 = vld [vmem:[#allocation22 + $0x34] sm:$0xf]
        %v1436 = vld [vmem:[#allocation22 + $0x38] sm:$0xf]
        %v1437 = vld [vmem:[#allocation22 + $0x3c] sm:$0xf]
        %v1438 = vld [vmem:[#allocation23] sm:$0x1]
        %v1440 = vlaneseq
        %v1441 = vshrl.u32 %v1440, 7
        %v1442 = vsub.s32 0, %v1441
        %v1443 = vrot.slane %v1438, %v1442
        %v1461 = vunpack.c.l.b16 %v1422
        %v1462 = vunpack.c.l.b16 %v1423
        %v1463 = vunpack.c.l.b16 %v1424
        %v1464 = vunpack.c.l.b16 %v1425
        %v1465 = vunpack.c.l.b16 %v1426
        %v1466 = vunpack.c.l.b16 %v1427
        %v1467 = vunpack.c.l.b16 %v1428
        %v1468 = vunpack.c.l.b16 %v1429
        %v1469 = vunpack.c.l.b16 %v1430
        %v1470 = vunpack.c.l.b16 %v1431
        %v1471 = vunpack.c.l.b16 %v1432
        %v1472 = vunpack.c.l.b16 %v1433
        %v1473 = vunpack.c.l.b16 %v1434
        %v1474 = vunpack.c.l.b16 %v1435
        %v1475 = vunpack.c.l.b16 %v1436
        %v1476 = vunpack.c.l.b16 %v1437
        %v1477 = vpack.c.b16 %v1462, %v1461
        %v1478 = vpack.c.b16 %v1464, %v1463
        %v1479 = vpack.c.b16 %v1466, %v1465
        %v1480 = vpack.c.b16 %v1468, %v1467
        %v1481 = vpack.c.b16 %v1470, %v1469
        %v1482 = vpack.c.b16 %v1472, %v1471
        %v1483 = vpack.c.b16 %v1474, %v1473
        %v1484 = vpack.c.b16 %v1476, %v1475
        %1493 = vmatprep.subr.bf16.mxu0 0
        %1494 = vmatpush1.bf16.msra.mxu0 %v1477
        %1495 = vmatprep.subr.bf16.mxu0 0
        %1496 = vmatpush1.bf16.msra.mxu0 %v1478
        %1497 = vmatprep.subr.bf16.mxu0 0
        %1498 = vmatpush1.bf16.msra.mxu0 %v1479
        %1499 = vmatprep.subr.bf16.mxu0 0
        %1500 = vmatpush1.bf16.msra.mxu0 %v1480
        %1501 = vmatprep.subr.bf16.mxu0 0
        %1502 = vmatpush1.bf16.msra.mxu0 %v1481
        %1503 = vmatprep.subr.bf16.mxu0 0
        %1504 = vmatpush1.bf16.msra.mxu0 %v1482
        %1505 = vmatprep.subr.bf16.mxu0 0
        %1506 = vmatpush1.bf16.msra.mxu0 %v1483
        %1507 = vmatprep.subr.bf16.mxu0 0
        %1508 = vmatpush1.bf16.msra.mxu0 %v1484
        %1509 = vmatprep.subr.bf16.mxu0 0
        %1510 = vmatpush1.bf16.msra.mxu0 0
        %1511 = vmatprep.subr.bf16.mxu0 0
        %1512 = vmatpush1.bf16.msra.mxu0 0
        %1513 = vmatprep.subr.bf16.mxu0 0
        %1514 = vmatpush1.bf16.msra.mxu0 0
        %1515 = vmatprep.subr.bf16.mxu0 0
        %1516 = vmatpush1.bf16.msra.mxu0 0
        %1517 = vmatprep.subr.bf16.mxu0 0
        %1518 = vmatpush1.bf16.msra.mxu0 0
        %1519 = vmatprep.subr.bf16.mxu0 0
        %1520 = vmatpush1.bf16.msra.mxu0 0
        %1521 = vmatprep.subr.bf16.mxu0 0
        %1522 = vmatpush1.bf16.msra.mxu0 0
        %1523 = vmatprep.subr.bf16.mxu0 0
        %1524 = vmatpush1.bf16.msra.mxu0 0
        %1525 = vmatprep.mubr.bf16.mxu0 0
        %1526 = vmatmul.mubr.bf16.gmra.mrb[0].mxu0 %v1421
        %v1527 = vpop.f32.mrb[0].mxu0
        %v1528 = vadd.f32 %v1443, %v1527
        %v1529 = vpop.f32.mrb[0].mxu0
        %v1530 = vpop.f32.mrb[0].mxu0
        %v1531 = vpop.f32.mrb[0].mxu0
        %1532 = vdwg.mxu0
        %v1533 = vadd.f32 %v1315, %v1528
        %v1534 = vld [vmem:[#allocation25] sm:$0x1]
        %v1535 = vld [vmem:[#allocation26] sm:$0x1]
        %v1536 = vsel %vm915, %v1533, 0.0
        %1537 = vadd.xlane.f32.xlu0 %v1536
        %v1538 = vpop.xlane.xlu0 %1537
        %v1539 = vmul.f32 %v1538, %v919
        %v1540 = vsub.f32 %v1533, %v1539
        %v1541 = vmul.f32 %v1540, %v1540
        %v1542 = vsel %vm915, %v1541, 0.0
        %1543 = vadd.xlane.f32.xlu0 %v1542
        %v1544 = vpop.xlane.xlu0 %1543
        %v1545 = vmul.f32 %v1544, %v919
        %v1546 = vadd.f32 %v1545, 1e-06
        %v1547 = vrsqrt.pop %v1546
        %v1548 = vmul.f32 %v1540, %v1547
        %v1550 = vlaneseq
        %v1551 = vshrl.u32 %v1550, 7
        %v1552 = vsub.s32 0, %v1551
        %v1553 = vrot.slane %v1534, %v1552
        %v1555 = vmul.f32 %v1548, %v1553
        %v1557 = vlaneseq
        %v1558 = vshrl.u32 %v1557, 7
        %v1559 = vsub.s32 0, %v1558
        %v1560 = vrot.slane %v1535, %v1559
        %v1562 = vadd.f32 %v1555, %v1560
        %v1563 = vld [vmem:[%s774] sm:$0x7]
        %v1564 = vunpack.c.l.bf16 %v1563
        %v1565 = vsel %vm915, %v1564, 0.0
        %1566 = vadd.xlane.f32.xlu0 %v1565
        %v1567 = vpop.xlane.xlu0 %1566
        %v1568 = vmul.f32 %v1567, %v919
        %v1569 = vsub.f32 %v1564, %v1568
        %v1570 = vmul.f32 %v1569, %v1569
        %v1571 = vsel %vm915, %v1570, 0.0
        %1572 = vadd.xlane.f32.xlu0 %v1571
        %v1573 = vpop.xlane.xlu0 %1572
        %v1574 = vmul.f32 %v1573, %v919
        %v1575 = vadd.f32 %v1574, 1e-06
        %v1576 = vrsqrt.pop %v1575
        %v1577 = vmul.f32 %v1569, %v1576
        %v1578 = vmul.f32 %v1577, %v1553
        %v1579 = vadd.f32 %v1578, %v1560
        %1580 = vst.msk [vmem:[%s902] sm:$0x1f] %vm915, %v1562
        %1581 = vst.msk [vmem:[%s895] sm:$0x1f] %vm915, %v1579
        %v1582 = vpack.c.bf16 %v1562, %v1562
        %v1583 = vld [vmem:[#allocation28] sm:$0xf]
        %v1584 = vld [vmem:[#allocation28 + $0x4] sm:$0xf]
        %v1585 = vld [vmem:[#allocation28 + $0x8] sm:$0xf]
        %v1586 = vld [vmem:[#allocation28 + $0xc] sm:$0xf]
        %v1587 = vld [vmem:[#allocation29] sm:$0x1]
        %v1589 = vlaneseq
        %v1590 = vshrl.u32 %v1589, 7
        %v1591 = vsub.s32 0, %v1590
        %v1592 = vrot.slane %v1587, %v1591
        %v1598 = vunpack.c.l.b16 %v1583
        %v1599 = vunpack.c.l.b16 %v1584
        %v1600 = vunpack.c.l.b16 %v1585
        %v1601 = vunpack.c.l.b16 %v1586
        %v1602 = vpack.c.b16 %v1599, %v1598
        %v1603 = vpack.c.b16 %v1601, %v1600
        %v1607 = vsel %vm968, %v1582, 0
        %1609 = vmatprep.subr.bf16.mxu0 0
        %1610 = vmatpush1.bf16.msra.mxu0 %v1602
        %1611 = vmatprep.subr.bf16.mxu0 0
        %1612 = vmatpush1.bf16.msra.mxu0 %v1603
        %1613 = vmatprep.subr.bf16.mxu0 0
        %1614 = vmatpush1.bf16.msra.mxu0 0
        %1615 = vmatprep.subr.bf16.mxu0 0
        %1616 = vmatpush1.bf16.msra.mxu0 0
        %1617 = vmatprep.subr.bf16.mxu0 0
        %1618 = vmatpush1.bf16.msra.mxu0 0
        %1619 = vmatprep.subr.bf16.mxu0 0
        %1620 = vmatpush1.bf16.msra.mxu0 0
        %1621 = vmatprep.subr.bf16.mxu0 0
        %1622 = vmatpush1.bf16.msra.mxu0 0
        %1623 = vmatprep.subr.bf16.mxu0 0
        %1624 = vmatpush1.bf16.msra.mxu0 0
        %1625 = vmatprep.subr.bf16.mxu0 0
        %1626 = vmatpush1.bf16.msra.mxu0 0
        %1627 = vmatprep.subr.bf16.mxu0 0
        %1628 = vmatpush1.bf16.msra.mxu0 0
        %1629 = vmatprep.subr.bf16.mxu0 0
        %1630 = vmatpush1.bf16.msra.mxu0 0
        %1631 = vmatprep.subr.bf16.mxu0 0
        %1632 = vmatpush1.bf16.msra.mxu0 0
        %1633 = vmatprep.subr.bf16.mxu0 0
        %1634 = vmatpush1.bf16.msra.mxu0 0
        %1635 = vmatprep.subr.bf16.mxu0 0
        %1636 = vmatpush1.bf16.msra.mxu0 0
        %1637 = vmatprep.subr.bf16.mxu0 0
        %1638 = vmatpush1.bf16.msra.mxu0 0
        %1639 = vmatprep.subr.bf16.mxu0 0
        %1640 = vmatpush1.bf16.msra.mxu0 0
        %1641 = vmatprep.mubr.bf16.mxu0 0
        %1642 = vmatmul.mubr.bf16.gmra.mrb[0].mxu0 %v1607
        %v1643 = vpop.f32.mrb[0].mxu0
        %v1644 = vadd.f32 %v1592, %v1643
        %v1645 = vpop.f32.mrb[0].mxu0
        %v1646 = vpop.f32.mrb[0].mxu0
        %v1647 = vpop.f32.mrb[0].mxu0
        %1648 = vdwg.mxu0
        %v1649 = vmul.f32 %v1644, %v1644
        %v1650 = vsel %vm915, %v1649, 0.0
        %1651 = vadd.xlane.f32.xlu0 %v1650
        %v1652 = vpop.xlane.xlu0 %1651
        %v1653 = vmax.f32 %v1652, 1e-24
        %v1654 = vrsqrt.pop %v1653
        %v1655 = vmul.f32 %v1644, %v1654
        %1656 = vst.msk [vmem:[%s909] sm:$0x1f] %vm915, %v1655
        %s1657 = sand.u32 %s448, 1
        %s1658 = scalar_lea.sflag [#allocation4], %s1657
        %s1659 = sand.u32 %s448, 1
        %s1660 = smul.addr %s1659, 8
        %s1661 = scalar_lea.vmem [#allocation31], %s1660
        %s1662 = sand.u32 %s52, 1
        %s1663 = scalar_lea.sflag [#allocation33], %s1662
        %s1664 = sand.u32 %s474, 1
        %s1665 = smul.addr %s1664, 8
        %s1666 = scalar_lea.vmem [#allocation32], %s1665
        %s1667 = sand.u32 %s52, 1
        %s1668 = scalar_lea.sflag [#allocation33], %s1667
        %s1669 = sand.u32 %s500, 1
        %s1670 = smul.addr %s1669, 8
        %s1671 = scalar_lea.vmem [#allocation34], %s1670
        // Predicated region
        $region165: #{dino_featurizer_forward.7} parent=91 // pred_check
          %p1672 = pneg %p458
        $region166: #{dino_featurizer_forward.7} parent=91 // pred_check_branch
          %1674 = sbr.rel (%p1672) target = $region168
        $region167: #{dino_featurizer_forward.7} parent=91 // pred_region
          %s1676 = ssub.s32 128, 128
          %1677 = vsyncadd %s1658, %s1676
          %s1678 = smul.addr %s52, 128
          %s1679 = scalar_lea.hbm %s18, %s1678
          %s1681 = sshll.u32 %s1661, 4
          %s1682 = int_to_ptr.vmem [resolvable:$true] %s1681
          %1684 = dma.vmem_to_hbm [thread:$0]  %s1682, 128, %s1679, %s1658
        $region168: #{dino_featurizer_forward.7} parent=91 // pred_fallthru
          _
        // Predicated region
        $region169: #{dino_featurizer_forward.7} parent=91 // pred_check
          %p1685 = pneg %p484
        $region170: #{dino_featurizer_forward.7} parent=91 // pred_check_branch
          %1687 = sbr.rel (%p1685) target = $region172
        $region171: #{dino_featurizer_forward.7} parent=91 // pred_region
          %s1689 = ssub.s32 128, 128
          %1690 = vsyncadd %s1663, %s1689
          %s1691 = smul.addr %s52, 128
          %s1692 = scalar_lea.hbm %s19, %s1691
          %s1694 = sshll.u32 %s1666, 4
          %s1695 = int_to_ptr.vmem [resolvable:$true] %s1694
          %1697 = dma.vmem_to_hbm [thread:$0]  %s1695, 128, %s1692, %s1663
        $region172: #{dino_featurizer_forward.7} parent=91 // pred_fallthru
          _
        // Predicated region
        $region173: #{dino_featurizer_forward.7} parent=91 // pred_check
          %p1698 = pneg %p510
        $region174: #{dino_featurizer_forward.7} parent=91 // pred_check_branch
          %1700 = sbr.rel (%p1698) target = $region176
        $region175: #{dino_featurizer_forward.7} parent=91 // pred_region
          %s1702 = ssub.s32 128, 128
          %1703 = vsyncadd %s1668, %s1702
          %s1704 = smul.addr %s52, 128
          %s1705 = scalar_lea.hbm %s20, %s1704
          %s1707 = sshll.u32 %s1671, 4
          %s1708 = int_to_ptr.vmem [resolvable:$true] %s1707
          %1710 = dma.vmem_to_hbm [thread:$0]  %s1708, 128, %s1705, %s1668
        $region176: #{dino_featurizer_forward.7} parent=91 // pred_fallthru
          _
      $region92: #{dino_featurizer_forward.7} parent=5 // pred_fallthru
        _
      %p1711 = scmp.le.s32.totalorder 2, %s47
      // Predicated region
      $region177: #{dino_featurizer_forward.7} parent=5 // pred_check
        %p1712 = pneg %p1711
      $region178: #{dino_featurizer_forward.7} parent=5 // pred_check_branch
        %1714 = sbr.rel (%p1712) target = $region180
      $region179: #{dino_featurizer_forward.7} parent=5 // pred_region
        %s1715 = ssub.s32 %s47, 2
        // Predicated region
        $region181: #{dino_featurizer_forward.7} parent=179 // pred_check
          %p1716 = pneg %p464
        $region182: #{dino_featurizer_forward.7} parent=179 // pred_check_branch
          %1718 = sbr.rel (%p1716) target = $region184
        $region183: #{dino_featurizer_forward.7} parent=179 // pred_region
          %s1719 = sand.u32 %s449, 1
          %s1720 = scalar_lea.sflag [#allocation4], %s1719
          %s1721 = sand.u32 %s449, 1
          %s1722 = smul.addr %s1721, 8
          %s1723 = scalar_lea.vmem [#allocation31], %s1722
          %1724 = dma.done %s1720, 128
        $region184: #{dino_featurizer_forward.7} parent=179 // pred_fallthru
          _
        // Predicated region
        $region185: #{dino_featurizer_forward.7} parent=179 // pred_check
          %p1725 = pneg %p490
        $region186: #{dino_featurizer_forward.7} parent=179 // pred_check_branch
          %1727 = sbr.rel (%p1725) target = $region188
        $region187: #{dino_featurizer_forward.7} parent=179 // pred_region
          %s1728 = sand.u32 %s53, 1
          %s1729 = scalar_lea.sflag [#allocation33], %s1728
          %s1730 = sand.u32 %s475, 1
          %s1731 = smul.addr %s1730, 8
          %s1732 = scalar_lea.vmem [#allocation32], %s1731
          %1733 = dma.done %s1729, 128
        $region188: #{dino_featurizer_forward.7} parent=179 // pred_fallthru
          _
        // Predicated region
        $region189: #{dino_featurizer_forward.7} parent=179 // pred_check
          %p1734 = pneg %p516
        $region190: #{dino_featurizer_forward.7} parent=179 // pred_check_branch
          %1736 = sbr.rel (%p1734) target = $region192
        $region191: #{dino_featurizer_forward.7} parent=179 // pred_region
          %s1737 = sand.u32 %s53, 1
          %s1738 = scalar_lea.sflag [#allocation33], %s1737
          %s1739 = sand.u32 %s501, 1
          %s1740 = smul.addr %s1739, 8
          %s1741 = scalar_lea.vmem [#allocation34], %s1740
          %1742 = dma.done %s1738, 128
        $region192: #{dino_featurizer_forward.7} parent=179 // pred_fallthru
          _
      $region180: #{dino_featurizer_forward.7} parent=5 // pred_fallthru
        _
    $region6: #{dino_featurizer_forward.7} parent=1 // loop_footer
      %s51 = sadd.s32 1, %s47
    $region7: #{dino_featurizer_forward.7} parent=1 // loop_footer_branch
      %46 = sbr.rel target = $region3
    $region8: #{dino_featurizer_forward.7} parent=1 // loop_exit
      _
    %1743 = vsyncpa [#allocation3], 1
    %s1744 = scalar_lea.sflag [#allocation3], 1
    %1745 = vsyncpa %s1744, 1
    %1746 = vsyncpa [#allocation6], 1
    %s1747 = scalar_lea.sflag [#allocation6], 1
    %1748 = vsyncpa %s1747, 1
    %1749 = vsyncpa [#allocation9], 1
    %1750 = vsyncpa [#allocation12], 1
    %1751 = vsyncpa [#allocation15], 1
    %1752 = vsyncpa [#allocation18], 1
    %1753 = vsyncpa [#allocation21], 1
    %1754 = vsyncpa [#allocation24], 1
    %1755 = vsyncpa [#allocation27], 1
    %1756 = vsyncpa [#allocation30], 1
    %1757 = vsyncpa [#allocation4], 1
    %s1758 = scalar_lea.sflag [#allocation4], 1
    %1759 = vsyncpa %s1758, 1
    %1760 = vsyncpa [#allocation33], 1
    %s1761 = scalar_lea.sflag [#allocation33], 1
    %1762 = vsyncpa %s1761, 1

</llo_original>
